<compile_context>
chip_gen: v5e
topology: v5e:2x2
jax: 0.10.0
libtpu: 0.0.40
codegen_flags: <defaults>
</compile_context>

<pallas_src>
import functools
import math

import jax
import jax.numpy as jnp
from jax.experimental import pallas as pl
from jax.experimental.pallas import tpu as pltpu

NEG_INF = -1e30  # large-negative instead of -inf keeps softmax NaN-free

# Set to jnp.bfloat16 on v6e/v7x: prepare_params() then stores the matmul
# weights as bf16 in HBM (halves DMA bytes + VMEM residency, unlocks bf16 MXU
# peak); accumulation, softmax and LayerNorm stay f32. Kept f32 here so the
# small demo matches the f32 reference numerics.
MXU_DTYPE = jnp.float32

_PARALLEL = pltpu.CompilerParams(dimension_semantics=("parallel",))


# ----------------------------------------------------------------------------
# small helpers: row tiling with padding
# ----------------------------------------------------------------------------
def _round_up(x, m):
    return ((x + m - 1) // m) * m


def _row_block(M):
    """Row tile: 128 for big M; otherwise split so the grid has >=2 steps
    (keeps the second v7x TensorCore busy even for small row counts)."""
    if M >= 256:
        return 128
    return max(8, _round_up(-(-M // 2), 8))


def _pad_rows(x, Mp):
    M = x.shape[0]
    if Mp == M:
        return x
    return jnp.pad(x, ((0, Mp - M), (0, 0)))


def _layernorm(y, g, b, eps=1e-5):
    """LayerNorm over last dim (biased variance, PyTorch eps). y is f32."""
    mu = jnp.mean(y, axis=-1, keepdims=True)
    yc = y - mu
    var = jnp.mean(yc * yc, axis=-1, keepdims=True)
    return yc * jax.lax.rsqrt(var + eps) * g + b


# ----------------------------------------------------------------------------
# Tiled linear (used for the final vocab projection)
# ----------------------------------------------------------------------------
def _linear_kernel(x_ref, w_ref, b_ref, o_ref, acc_ref):
    k = pl.program_id(2)

    @pl.when(k == 0)
    def _():
        acc_ref[...] = jnp.zeros_like(acc_ref)

    acc_ref[...] += jnp.dot(
        x_ref[...].astype(w_ref.dtype),
        w_ref[...],
        preferred_element_type=jnp.float32,
    )

    @pl.when(k == pl.num_programs(2) - 1)
    def _():
        o_ref[...] = (acc_ref[...] + b_ref[...]).astype(o_ref.dtype)


def linear(x, w, b, *, bn_max=512, bk_max=512):
    """x: (M, K) @ w: (K, N) + b: (N,) with M/N/K tiling and an f32 VMEM
    accumulator (reduction axis last, 'arbitrary'). Weight tiles stream
    through VMEM instead of keeping the full (K, N) matrix resident."""
    M, K = x.shape
    N = w.shape[1]
    bm = _row_block(M)
    bn = N if N <= bn_max else bn_max
    bk = K if K <= bk_max else bk_max
    Mp, Np, Kp = _round_up(M, bm), _round_up(N, bn), _round_up(K, bk)

    xp, wp, bp = x, w, b
    if Mp != M or Kp != K:
        xp = jnp.pad(x, ((0, Mp - M), (0, Kp - K)))
    if Kp != K or Np != N:
        wp = jnp.pad(w, ((0, Kp - K), (0, Np - N)))
    if Np != N:
        bp = jnp.pad(b, (0, Np - N))

    # TODO(synk): mark the weight/bias blocks pipeline_mode=pl.Buffered(1)
    # (single-buffered) once verified on the target jax build; tiling already
    # bounds per-step VMEM residency.
    out = pl.pallas_call(
        _linear_kernel,
        out_shape=jax.ShapeDtypeStruct((Mp, Np), x.dtype),
        grid=(Mp // bm, Np // bn, Kp // bk),
        in_specs=[
            pl.BlockSpec((bm, bk), lambda i, j, k: (i, k)),
            pl.BlockSpec((bk, bn), lambda i, j, k: (k, j)),
            pl.BlockSpec((1, bn), lambda i, j, k: (0, j)),
        ],
        out_specs=pl.BlockSpec((bm, bn), lambda i, j, k: (i, j)),
        scratch_shapes=[pltpu.VMEM((bm, bn), jnp.float32)],
        compiler_params=pltpu.CompilerParams(
            dimension_semantics=("parallel", "parallel", "arbitrary")),
    )(xp, wp, bp.reshape(1, Np).astype(jnp.float32))
    if Mp != M or Np != N:
        out = out[:M, :N]
    return out


# ----------------------------------------------------------------------------
# Fused self-attention block: QKV proj + attention + out proj + residual + LN
# ----------------------------------------------------------------------------
def _self_attn_block_kernel(x_ref, kp_ref, wqkv_ref, bqkv_ref, wo_ref, bo_ref,
                            g_ref, beta_ref, o_ref, attn_ref, *, num_heads, scale):
    S = x_ref.shape[1]
    D = x_ref.shape[2]
    hd = D // num_heads
    x = x_ref[0]                                                     # (S, D)

    # fused QKV projection (f32 accumulation)
    qkv = jnp.dot(x.astype(wqkv_ref.dtype), wqkv_ref[...],
                  preferred_element_type=jnp.float32) + bqkv_ref[...]  # (S, 3D)

    # additive mask rebuilt in-kernel (causal + key padding) — no (B,S,S) DMA
    rows = jax.lax.broadcasted_iota(jnp.int32, (S, S), 0)
    cols = jax.lax.broadcasted_iota(jnp.int32, (S, S), 1)
    mask = jnp.where(cols > rows, NEG_INF, 0.0) + kp_ref[0]            # (S, S)

    # TODO(synk): for production head dims (hd >= 64) restructure to a
    # head-major (H, S, hd) layout + one batched dot_general so the MXU
    # contraction is >=128, and add flash-style Sk tiling for long sequences.
    for h in range(num_heads):  # static unroll; lane-dense stores, no concat
        qh = qkv[:, h * hd:(h + 1) * hd] * scale
        kh = qkv[:, D + h * hd:D + (h + 1) * hd]
        vh = qkv[:, 2 * D + h * hd:2 * D + (h + 1) * hd]
        s = jax.lax.dot_general(qh, kh, (((1,), (1,)), ((), ())),
                                preferred_element_type=jnp.float32)    # (S, S)
        s = s + mask
        mx = jnp.max(s, axis=-1, keepdims=True)
        p = jnp.exp(s - mx)
        l = jnp.sum(p, axis=-1, keepdims=True)
        p = p * pl.reciprocal(l, approx=True)
        attn_ref[:, h * hd:(h + 1) * hd] = jnp.dot(
            p, vh, preferred_element_type=jnp.float32)

    proj = jnp.dot(attn_ref[...].astype(wo_ref.dtype), wo_ref[...],
                   preferred_element_type=jnp.float32) + bo_ref[...]
    y = x.astype(jnp.float32) + proj                                   # residual
    o_ref[0] = _layernorm(y, g_ref[...], beta_ref[...]).astype(o_ref.dtype)


def self_attn_block(x, keypad_bias, sa_p, ln_g, ln_b, num_heads, scale):
    """x: (B, S, D), keypad_bias: (B, S) additive key bias -> (B, S, D)."""
    B, S, D = x.shape
    kp = keypad_bias.reshape(B, 1, S)
    kernel = functools.partial(_self_attn_block_kernel,
                               num_heads=num_heads, scale=scale)
    return pl.pallas_call(
        kernel,
        out_shape=jax.ShapeDtypeStruct((B, S, D), x.dtype),
        grid=(B,),
        in_specs=[
            pl.BlockSpec((1, S, D), lambda b: (b, 0, 0)),
            pl.BlockSpec((1, 1, S), lambda b: (b, 0, 0)),
            pl.BlockSpec((D, 3 * D), lambda b: (0, 0)),
            pl.BlockSpec((1, 3 * D), lambda b: (0, 0)),
            pl.BlockSpec((D, D), lambda b: (0, 0)),
            pl.BlockSpec((1, D), lambda b: (0, 0)),
            pl.BlockSpec((1, D), lambda b: (0, 0)),
            pl.BlockSpec((1, D), lambda b: (0, 0)),
        ],
        out_specs=pl.BlockSpec((1, S, D), lambda b: (b, 0, 0)),
        scratch_shapes=[pltpu.VMEM((S, D), jnp.float32)],
        compiler_params=_PARALLEL,
    )(x, kp, sa_p["w_qkv"], sa_p["b_qkv"].reshape(1, -1),
      sa_p["wo"], sa_p["bo"].reshape(1, -1),
      ln_g.reshape(1, -1), ln_b.reshape(1, -1))


# ----------------------------------------------------------------------------
# Fused cross-attention block: Q proj + KV proj + attention + out proj + LN
# ----------------------------------------------------------------------------
def _cross_attn_block_kernel(x_ref, mem_ref, wq_ref, bq_ref, wkv_ref, bkv_ref,
                             wo_ref, bo_ref, g_ref, beta_ref, o_ref, attn_ref,
                             *, num_heads, scale):
    D = x_ref.shape[2]
    hd = D // num_heads
    x = x_ref[0]                                                      # (S, D)
    mem = mem_ref[0]                                                  # (Lm, D)

    q = jnp.dot(x.astype(wq_ref.dtype), wq_ref[...],
                preferred_element_type=jnp.float32) + bq_ref[...]     # (S, D)
    kv = jnp.dot(mem.astype(wkv_ref.dtype), wkv_ref[...],
                 preferred_element_type=jnp.float32) + bkv_ref[...]   # (Lm, 2D)

    for h in range(num_heads):  # static unroll; no concat, no explicit .T
        qh = q[:, h * hd:(h + 1) * hd] * scale
        kh = kv[:, h * hd:(h + 1) * hd]
        vh = kv[:, D + h * hd:D + (h + 1) * hd]
        s = jax.lax.dot_general(qh, kh, (((1,), (1,)), ((), ())),
                                preferred_element_type=jnp.float32)   # (S, Lm)
        mx = jnp.max(s, axis=-1, keepdims=True)
        p = jnp.exp(s - mx)
        l = jnp.sum(p, axis=-1, keepdims=True)
        p = p * pl.reciprocal(l, approx=True)
        attn_ref[:, h * hd:(h + 1) * hd] = jnp.dot(
            p, vh, preferred_element_type=jnp.float32)

    proj = jnp.dot(attn_ref[...].astype(wo_ref.dtype), wo_ref[...],
                   preferred_element_type=jnp.float32) + bo_ref[...]
    y = x.astype(jnp.float32) + proj
    o_ref[0] = _layernorm(y, g_ref[...], beta_ref[...]).astype(o_ref.dtype)


def cross_attn_block(x, memory, ca_p, ln_g, ln_b, num_heads, scale):
    """x: (B, S, D), memory: (B, Lm, D) -> (B, S, D). No memory mask."""
    B, S, D = x.shape
    Lm = memory.shape[1]
    kernel = functools.partial(_cross_attn_block_kernel,
                               num_heads=num_heads, scale=scale)
    return pl.pallas_call(
        kernel,
        out_shape=jax.ShapeDtypeStruct((B, S, D), x.dtype),
        grid=(B,),
        in_specs=[
            pl.BlockSpec((1, S, D), lambda b: (b, 0, 0)),
            pl.BlockSpec((1, Lm, D), lambda b: (b, 0, 0)),
            pl.BlockSpec((D, D), lambda b: (0, 0)),
            pl.BlockSpec((1, D), lambda b: (0, 0)),
            pl.BlockSpec((D, 2 * D), lambda b: (0, 0)),
            pl.BlockSpec((1, 2 * D), lambda b: (0, 0)),
            pl.BlockSpec((D, D), lambda b: (0, 0)),
            pl.BlockSpec((1, D), lambda b: (0, 0)),
            pl.BlockSpec((1, D), lambda b: (0, 0)),
            pl.BlockSpec((1, D), lambda b: (0, 0)),
        ],
        out_specs=pl.BlockSpec((1, S, D), lambda b: (b, 0, 0)),
        scratch_shapes=[pltpu.VMEM((S, D), jnp.float32)],
        compiler_params=_PARALLEL,
    )(x, memory, ca_p["w_q"], ca_p["b_q"].reshape(1, -1),
      ca_p["w_kv"], ca_p["b_kv"].reshape(1, -1),
      ca_p["wo"], ca_p["bo"].reshape(1, -1),
      ln_g.reshape(1, -1), ln_b.reshape(1, -1))


# ----------------------------------------------------------------------------
# Fused feed-forward block: linear1 -> ReLU -> linear2 -> residual -> LN
# ----------------------------------------------------------------------------
def _ffn_block_kernel(x_ref, w1_ref, b1_ref, w2_ref, b2_ref, g_ref, beta_ref,
                      o_ref):
    x = x_ref[...]
    h = jnp.dot(x.astype(w1_ref.dtype), w1_ref[...],
                preferred_element_type=jnp.float32) + b1_ref[...]
    h = jnp.maximum(h, 0.0)  # ReLU (TransformerDecoderLayer default)
    y = jnp.dot(h.astype(w2_ref.dtype), w2_ref[...],
                preferred_element_type=jnp.float32) + b2_ref[...]
    z = x.astype(jnp.float32) + y
    o_ref[...] = _layernorm(z, g_ref[...], beta_ref[...]).astype(o_ref.dtype)


def ffn_block(x, w1, b1, w2, b2, ln_g, ln_b):
    """LayerNorm(x + linear2(relu(linear1(x)))); x: (M, D)."""
    M, D = x.shape
    F = w1.shape[1]
    bm = _row_block(M)
    Mp = _round_up(M, bm)
    xp = _pad_rows(x, Mp)
    # TODO(synk): for very large dim_feedforward on v5e (16 MiB scoped VMEM),
    # tile F with a staged hidden scratch (or raise vmem_limit_bytes).
    out = pl.pallas_call(
        _ffn_block_kernel,
        out_shape=jax.ShapeDtypeStruct((Mp, D), x.dtype),
        grid=(Mp // bm,),
        in_specs=[
            pl.BlockSpec((bm, D), lambda i: (i, 0)),
            pl.BlockSpec((D, F), lambda i: (0, 0)),
            pl.BlockSpec((1, F), lambda i: (0, 0)),
            pl.BlockSpec((F, D), lambda i: (0, 0)),
            pl.BlockSpec((1, D), lambda i: (0, 0)),
            pl.BlockSpec((1, D), lambda i: (0, 0)),
            pl.BlockSpec((1, D), lambda i: (0, 0)),
        ],
        out_specs=pl.BlockSpec((bm, D), lambda i: (i, 0)),
        compiler_params=_PARALLEL,
    )(xp, w1, b1.reshape(1, F), w2, b2.reshape(1, D),
      ln_g.reshape(1, D), ln_b.reshape(1, D))
    return out if Mp == M else out[:M]


# ----------------------------------------------------------------------------
# Module-level composition (plain-JAX glue around the fused kernels)
# ----------------------------------------------------------------------------
def decoder_layer(x, memory, lp, keypad_bias, num_heads):
    """nn.TransformerDecoderLayer (post-norm, ReLU, eval mode): 3 pallas_calls."""
    B, S, D = x.shape
    hd = D // num_heads
    scale = 1.0 / math.sqrt(hd)

    x = self_attn_block(x, keypad_bias, lp["self_attn"],
                        lp["ln1_g"], lp["ln1_b"], num_heads, scale)
    x = cross_attn_block(x, memory, lp["cross_attn"],
                         lp["ln2_g"], lp["ln2_b"], num_heads, scale)
    x = ffn_block(x.reshape(B * S, D), lp["w1"], lp["b1"], lp["w2"], lp["b2"],
                  lp["ln3_g"], lp["ln3_b"]).reshape(B, S, D)
    return x


def key_padding_bias(tgt, pad_idx):
    """Additive (B, S) key bias: NEG_INF at padding keys, 0 elsewhere.
    The causal part is rebuilt inside the attention kernel from iota."""
    return jnp.where(tgt == pad_idx, NEG_INF, 0.0).astype(jnp.float32)


def prepare_params(params, mxu_dtype=MXU_DTYPE):
    """Cast matmul weights ONCE in HBM to the MXU dtype (bf16 on v6e/v7x);
    biases, LayerNorm params and the embedding stay f32 (f32 accumulation)."""
    if mxu_dtype == jnp.float32:
        return params
    p = dict(params)
    p["w_out"] = params["w_out"].astype(mxu_dtype)
    layers = []
    for lp in params["layers"]:
        lp = dict(lp)
        sa = dict(lp["self_attn"])
        ca = dict(lp["cross_attn"])
        sa["w_qkv"] = sa["w_qkv"].astype(mxu_dtype)
        sa["wo"] = sa["wo"].astype(mxu_dtype)
        ca["w_q"] = ca["w_q"].astype(mxu_dtype)
        ca["w_kv"] = ca["w_kv"].astype(mxu_dtype)
        ca["wo"] = ca["wo"].astype(mxu_dtype)
        lp["self_attn"], lp["cross_attn"] = sa, ca
        lp["w1"] = lp["w1"].astype(mxu_dtype)
        lp["w2"] = lp["w2"].astype(mxu_dtype)
        layers.append(lp)
    p["layers"] = layers
    return p


def decoder_forward(params, encoder_out, tgt, *, num_heads, pad_idx):
    """
    encoder_out: (N, L_enc, D) float32
    tgt:         (N, L_tgt)    int32      (L_tgt == max_len - 1)
    returns logits (N, L_tgt, vocab_size). All dropouts are identity (eval).
    """
    B, S = tgt.shape
    D = params["embedding"].shape[1]

    kp_bias = key_padding_bias(tgt, pad_idx)                   # (B, S)

    tgt_emb = jnp.take(params["embedding"], tgt, axis=0)       # gather (glue)
    tgt_emb = tgt_emb + params["decoder_pos_embed"]            # (1, S, D) bcast
    mem = encoder_out + params["encoder_pos_embed"]            # (1, L, D) bcast

    x = tgt_emb
    for lp in params["layers"]:
        x = decoder_layer(x, mem, lp, kp_bias, num_heads)

    logits = linear(x.reshape(B * S, D), params["w_out"], params["b_out"])
    return logits.reshape(B, S, -1)


# ----------------------------------------------------------------------------
# Deterministic parameter construction (synthetic, no checkpoints)
# ----------------------------------------------------------------------------
def init_params(key, vocab_size, encoder_length, dim, num_layers,
                dim_feedforward, max_len):
    keys = iter(jax.random.split(key, 4 + 8 * num_layers))

    def nrm(shape, std=0.02):
        return jax.random.normal(next(keys), shape, jnp.float32) * std

    layers = []
    for _ in range(num_layers):
        layers.append({
            "self_attn": {
                "w_qkv": nrm((dim, 3 * dim)),
                "b_qkv": jnp.zeros((3 * dim,), jnp.float32),
                "wo": nrm((dim, dim)), "bo": jnp.zeros((dim,), jnp.float32),
            },
            "cross_attn": {
                "w_q": nrm((dim, dim)), "b_q": jnp.zeros((dim,), jnp.float32),
                "w_kv": nrm((dim, 2 * dim)),
                "b_kv": jnp.zeros((2 * dim,), jnp.float32),
                "wo": nrm((dim, dim)), "bo": jnp.zeros((dim,), jnp.float32),
            },
            "w1": nrm((dim, dim_feedforward)),
            "b1": jnp.zeros((dim_feedforward,), jnp.float32),
            "w2": nrm((dim_feedforward, dim)),
            "b2": jnp.zeros((dim,), jnp.float32),
            "ln1_g": jnp.ones((dim,), jnp.float32), "ln1_b": jnp.zeros((dim,), jnp.float32),
            "ln2_g": jnp.ones((dim,), jnp.float32), "ln2_b": jnp.zeros((dim,), jnp.float32),
            "ln3_g": jnp.ones((dim,), jnp.float32), "ln3_b": jnp.zeros((dim,), jnp.float32),
        })

    return {
        "embedding": nrm((vocab_size, dim)),
        "decoder_pos_embed": nrm((1, max_len - 1, dim)),
        "encoder_pos_embed": nrm((1, encoder_length, dim)),
        "w_out": nrm((dim, vocab_size)),
        "b_out": jnp.zeros((vocab_size,), jnp.float32),
        "layers": layers,
    }


# ----------------------------------------------------------------------------
if __name__ == "__main__":
    # small shapes consistent with the module's forward()
    vocab_size = 64
    encoder_length = 8
    dim = 32
    num_heads = 4
    num_layers = 2
    dim_feedforward = 64
    max_len = 9            # -> tgt length = max_len - 1 = 8
    pad_idx = 0
    B = 2
    S = max_len - 1

    key = jax.random.PRNGKey(0)
    k_par, k_enc, k_tgt = jax.random.split(key, 3)

    params = init_params(k_par, vocab_size, encoder_length, dim,
                         num_layers, dim_feedforward, max_len)
    params = prepare_params(params, MXU_DTYPE)   # one-time HBM weight cast

    encoder_out = jax.random.normal(k_enc, (B, encoder_length, dim), jnp.float32)
    tgt = jax.random.randint(k_tgt, (B, S), 1, vocab_size, jnp.int32)
    # trailing padding tokens in batch 1 to exercise the key-padding mask
    tgt = tgt.at[1, -2:].set(pad_idx)

    fwd = jax.jit(functools.partial(decoder_forward, num_heads=num_heads,
                                    pad_idx=pad_idx))
    logits = fwd(params, encoder_out, tgt)
    jax.block_until_ready(logits)

    assert logits.shape == (B, S, vocab_size)
    assert bool(jnp.all(jnp.isfinite(logits)))
    print("KERNEL_OK")
</pallas_src>

<mosaic_0001>
module attributes {stable_mosaic.version = 11 : i64} {
  func.func @_cross_attn_block_kernel(%arg0: i32, %arg1: memref<1x8x32xf32, #tpu.memory_space<vmem>>, %arg2: memref<1x8x32xf32, #tpu.memory_space<vmem>>, %arg3: memref<32x32xf32, #tpu.memory_space<vmem>>, %arg4: memref<1x32xf32, #tpu.memory_space<vmem>>, %arg5: memref<32x64xf32, #tpu.memory_space<vmem>>, %arg6: memref<1x64xf32, #tpu.memory_space<vmem>>, %arg7: memref<32x32xf32, #tpu.memory_space<vmem>>, %arg8: memref<1x32xf32, #tpu.memory_space<vmem>>, %arg9: memref<1x32xf32, #tpu.memory_space<vmem>>, %arg10: memref<1x32xf32, #tpu.memory_space<vmem>>, %arg11: memref<1x8x32xf32, #tpu.memory_space<vmem>>, %arg12: memref<8x32xf32, #tpu.memory_space<vmem>>) attributes {dimension_semantics = [#tpu.dimension_semantics<parallel>], iteration_bounds = array<i64: 2>, scalar_prefetch = 0 : i64, scratch_operands = 1 : i64, tpu.core_type = #tpu.core_type<tc>, window_params = [{transform_indices = @transform_0, window_bounds = array<i64: 1, 8, 32>}, {transform_indices = @transform_1, window_bounds = array<i64: 1, 8, 32>}, {pipeline_mode = #tpu.pipeline_mode<synchronous>, transform_indices = @transform_2, window_bounds = array<i64: 32, 32>}, {pipeline_mode = #tpu.pipeline_mode<synchronous>, transform_indices = @transform_3, window_bounds = array<i64: 1, 32>}, {pipeline_mode = #tpu.pipeline_mode<synchronous>, transform_indices = @transform_4, window_bounds = array<i64: 32, 64>}, {pipeline_mode = #tpu.pipeline_mode<synchronous>, transform_indices = @transform_5, window_bounds = array<i64: 1, 64>}, {pipeline_mode = #tpu.pipeline_mode<synchronous>, transform_indices = @transform_6, window_bounds = array<i64: 32, 32>}, {pipeline_mode = #tpu.pipeline_mode<synchronous>, transform_indices = @transform_7, window_bounds = array<i64: 1, 32>}, {pipeline_mode = #tpu.pipeline_mode<synchronous>, transform_indices = @transform_8, window_bounds = array<i64: 1, 32>}, {pipeline_mode = #tpu.pipeline_mode<synchronous>, transform_indices = @transform_9, window_bounds = array<i64: 1, 32>}, {transform_indices = @transform_10, window_bounds = array<i64: 1, 8, 32>}]} {
    %c0 = arith.constant 0 : index
    %c0_0 = arith.constant 0 : index
    %c0_1 = arith.constant 0 : index
    %0 = vector.load %arg1[%c0, %c0_0, %c0_1] : memref<1x8x32xf32, #tpu.memory_space<vmem>>, vector<1x8x32xf32>
    %1 = vector.shape_cast %0 : vector<1x8x32xf32> to vector<8x32xf32>
    %c0_2 = arith.constant 0 : index
    %c0_3 = arith.constant 0 : index
    %c0_4 = arith.constant 0 : index
    %2 = vector.load %arg2[%c0_2, %c0_3, %c0_4] : memref<1x8x32xf32, #tpu.memory_space<vmem>>, vector<1x8x32xf32>
    %3 = vector.shape_cast %2 : vector<1x8x32xf32> to vector<8x32xf32>
    %c0_5 = arith.constant 0 : index
    %c0_6 = arith.constant 0 : index
    %4 = vector.load %arg3[%c0_5, %c0_6] : memref<32x32xf32, #tpu.memory_space<vmem>>, vector<32x32xf32>
    %cst = arith.constant dense<0.000000e+00> : vector<8x32xf32>
    %5 = tpu.matmul %1, %4, %cst {dimension_numbers = #tpu.dot_dimension_numbers<[1], [0], [0], [1], [0, 0, 1, 1], [], []>} : vector<8x32xf32>, vector<32x32xf32>, vector<8x32xf32> -> vector<8x32xf32>
    %c0_7 = arith.constant 0 : index
    %c0_8 = arith.constant 0 : index
    %6 = vector.load %arg4[%c0_7, %c0_8] : memref<1x32xf32, #tpu.memory_space<vmem>>, vector<1x32xf32>
    %7 = vector.broadcast %6 : vector<1x32xf32> to vector<8x32xf32>
    %8 = arith.addf %5, %7 : vector<8x32xf32>
    %c0_9 = arith.constant 0 : index
    %c0_10 = arith.constant 0 : index
    %9 = vector.load %arg5[%c0_9, %c0_10] : memref<32x64xf32, #tpu.memory_space<vmem>>, vector<32x64xf32>
    %cst_11 = arith.constant dense<0.000000e+00> : vector<8x64xf32>
    %10 = tpu.matmul %3, %9, %cst_11 {dimension_numbers = #tpu.dot_dimension_numbers<[1], [0], [0], [1], [0, 0, 1, 1], [], []>} : vector<8x32xf32>, vector<32x64xf32>, vector<8x64xf32> -> vector<8x64xf32>
    %c0_12 = arith.constant 0 : index
    %c0_13 = arith.constant 0 : index
    %11 = vector.load %arg6[%c0_12, %c0_13] : memref<1x64xf32, #tpu.memory_space<vmem>>, vector<1x64xf32>
    %12 = vector.broadcast %11 : vector<1x64xf32> to vector<8x64xf32>
    %13 = arith.addf %10, %12 : vector<8x64xf32>
    %14 = vector.extract_strided_slice %8 {offsets = [0, 0], sizes = [8, 8], strides = [1, 1]} : vector<8x32xf32> to vector<8x8xf32>
    %cst_14 = arith.constant 0.353553385 : f32
    %15 = vector.broadcast %cst_14 : f32 to vector<8x8xf32>
    %16 = arith.mulf %14, %15 : vector<8x8xf32>
    %17 = vector.extract_strided_slice %13 {offsets = [0, 0], sizes = [8, 8], strides = [1, 1]} : vector<8x64xf32> to vector<8x8xf32>
    %18 = vector.extract_strided_slice %13 {offsets = [0, 32], sizes = [8, 8], strides = [1, 1]} : vector<8x64xf32> to vector<8x8xf32>
    %cst_15 = arith.constant dense<0.000000e+00> : vector<8x8xf32>
    %19 = tpu.matmul %16, %17, %cst_15 {dimension_numbers = #tpu.dot_dimension_numbers<[1], [1], [0], [0], [0, 0, 1, 0], [], []>} : vector<8x8xf32>, vector<8x8xf32>, vector<8x8xf32> -> vector<8x8xf32>
    %cst_16 = arith.constant dense<0xFF800000> : vector<8xf32>
    %20 = vector.multi_reduction <maximumf>, %19, %cst_16 [1] : vector<8x8xf32> to vector<8xf32>
    %21 = vector.shape_cast %20 : vector<8xf32> to vector<8x1xf32>
    %22 = vector.broadcast %21 : vector<8x1xf32> to vector<8x8xf32>
    %23 = arith.subf %19, %22 : vector<8x8xf32>
    %24 = math.exp %23 : vector<8x8xf32>
    %cst_17 = arith.constant dense<0.000000e+00> : vector<8xf32>
    %25 = vector.multi_reduction <add>, %24, %cst_17 [1] : vector<8x8xf32> to vector<8xf32>
    %26 = vector.shape_cast %25 : vector<8xf32> to vector<8x1xf32>
    %27 = tpu.reciprocal %26 {approx = true} : vector<8x1xf32> -> vector<8x1xf32>
    %28 = vector.broadcast %27 : vector<8x1xf32> to vector<8x8xf32>
    %29 = arith.mulf %24, %28 : vector<8x8xf32>
    %cst_18 = arith.constant dense<0.000000e+00> : vector<8x8xf32>
    %30 = tpu.matmul %29, %18, %cst_18 {dimension_numbers = #tpu.dot_dimension_numbers<[1], [0], [0], [1], [0, 0, 1, 1], [], []>} : vector<8x8xf32>, vector<8x8xf32>, vector<8x8xf32> -> vector<8x8xf32>
    %c0_19 = arith.constant 0 : index
    %c0_20 = arith.constant 0 : index
    %31 = vector.load %arg12[%c0_19, %c0_20] : memref<8x32xf32, #tpu.memory_space<vmem>>, vector<8x8xf32>
    tpu.vector_store %arg12[%c0_19, %c0_20], %30 {strides = array<i32>} : memref<8x32xf32, #tpu.memory_space<vmem>>, vector<8x8xf32>,
    %32 = vector.extract_strided_slice %8 {offsets = [0, 8], sizes = [8, 8], strides = [1, 1]} : vector<8x32xf32> to vector<8x8xf32>
    %cst_21 = arith.constant 0.353553385 : f32
    %33 = vector.broadcast %cst_21 : f32 to vector<8x8xf32>
    %34 = arith.mulf %32, %33 : vector<8x8xf32>
    %35 = vector.extract_strided_slice %13 {offsets = [0, 8], sizes = [8, 8], strides = [1, 1]} : vector<8x64xf32> to vector<8x8xf32>
    %36 = vector.extract_strided_slice %13 {offsets = [0, 40], sizes = [8, 8], strides = [1, 1]} : vector<8x64xf32> to vector<8x8xf32>
    %cst_22 = arith.constant dense<0.000000e+00> : vector<8x8xf32>
    %37 = tpu.matmul %34, %35, %cst_22 {dimension_numbers = #tpu.dot_dimension_numbers<[1], [1], [0], [0], [0, 0, 1, 0], [], []>} : vector<8x8xf32>, vector<8x8xf32>, vector<8x8xf32> -> vector<8x8xf32>
    %cst_23 = arith.constant dense<0xFF800000> : vector<8xf32>
    %38 = vector.multi_reduction <maximumf>, %37, %cst_23 [1] : vector<8x8xf32> to vector<8xf32>
    %39 = vector.shape_cast %38 : vector<8xf32> to vector<8x1xf32>
    %40 = vector.broadcast %39 : vector<8x1xf32> to vector<8x8xf32>
    %41 = arith.subf %37, %40 : vector<8x8xf32>
    %42 = math.exp %41 : vector<8x8xf32>
    %cst_24 = arith.constant dense<0.000000e+00> : vector<8xf32>
    %43 = vector.multi_reduction <add>, %42, %cst_24 [1] : vector<8x8xf32> to vector<8xf32>
    %44 = vector.shape_cast %43 : vector<8xf32> to vector<8x1xf32>
    %45 = tpu.reciprocal %44 {approx = true} : vector<8x1xf32> -> vector<8x1xf32>
    %46 = vector.broadcast %45 : vector<8x1xf32> to vector<8x8xf32>
    %47 = arith.mulf %42, %46 : vector<8x8xf32>
    %cst_25 = arith.constant dense<0.000000e+00> : vector<8x8xf32>
    %48 = tpu.matmul %47, %36, %cst_25 {dimension_numbers = #tpu.dot_dimension_numbers<[1], [0], [0], [1], [0, 0, 1, 1], [], []>} : vector<8x8xf32>, vector<8x8xf32>, vector<8x8xf32> -> vector<8x8xf32>
    %c0_26 = arith.constant 0 : index
    %c8 = arith.constant 8 : index
    %49 = vector.load %arg12[%c0_26, %c8] : memref<8x32xf32, #tpu.memory_space<vmem>>, vector<8x8xf32>
    tpu.vector_store %arg12[%c0_26, %c8], %48 {strides = array<i32>} : memref<8x32xf32, #tpu.memory_space<vmem>>, vector<8x8xf32>,
    %50 = vector.extract_strided_slice %8 {offsets = [0, 16], sizes = [8, 8], strides = [1, 1]} : vector<8x32xf32> to vector<8x8xf32>
    %cst_27 = arith.constant 0.353553385 : f32
    %51 = vector.broadcast %cst_27 : f32 to vector<8x8xf32>
    %52 = arith.mulf %50, %51 : vector<8x8xf32>
    %53 = vector.extract_strided_slice %13 {offsets = [0, 16], sizes = [8, 8], strides = [1, 1]} : vector<8x64xf32> to vector<8x8xf32>
    %54 = vector.extract_strided_slice %13 {offsets = [0, 48], sizes = [8, 8], strides = [1, 1]} : vector<8x64xf32> to vector<8x8xf32>
    %cst_28 = arith.constant dense<0.000000e+00> : vector<8x8xf32>
    %55 = tpu.matmul %52, %53, %cst_28 {dimension_numbers = #tpu.dot_dimension_numbers<[1], [1], [0], [0], [0, 0, 1, 0], [], []>} : vector<8x8xf32>, vector<8x8xf32>, vector<8x8xf32> -> vector<8x8xf32>
    %cst_29 = arith.constant dense<0xFF800000> : vector<8xf32>
    %56 = vector.multi_reduction <maximumf>, %55, %cst_29 [1] : vector<8x8xf32> to vector<8xf32>
    %57 = vector.shape_cast %56 : vector<8xf32> to vector<8x1xf32>
    %58 = vector.broadcast %57 : vector<8x1xf32> to vector<8x8xf32>
    %59 = arith.subf %55, %58 : vector<8x8xf32>
    %60 = math.exp %59 : vector<8x8xf32>
    %cst_30 = arith.constant dense<0.000000e+00> : vector<8xf32>
    %61 = vector.multi_reduction <add>, %60, %cst_30 [1] : vector<8x8xf32> to vector<8xf32>
    %62 = vector.shape_cast %61 : vector<8xf32> to vector<8x1xf32>
    %63 = tpu.reciprocal %62 {approx = true} : vector<8x1xf32> -> vector<8x1xf32>
    %64 = vector.broadcast %63 : vector<8x1xf32> to vector<8x8xf32>
    %65 = arith.mulf %60, %64 : vector<8x8xf32>
    %cst_31 = arith.constant dense<0.000000e+00> : vector<8x8xf32>
    %66 = tpu.matmul %65, %54, %cst_31 {dimension_numbers = #tpu.dot_dimension_numbers<[1], [0], [0], [1], [0, 0, 1, 1], [], []>} : vector<8x8xf32>, vector<8x8xf32>, vector<8x8xf32> -> vector<8x8xf32>
    %c0_32 = arith.constant 0 : index
    %c16 = arith.constant 16 : index
    %67 = vector.load %arg12[%c0_32, %c16] : memref<8x32xf32, #tpu.memory_space<vmem>>, vector<8x8xf32>
    tpu.vector_store %arg12[%c0_32, %c16], %66 {strides = array<i32>} : memref<8x32xf32, #tpu.memory_space<vmem>>, vector<8x8xf32>,
    %68 = vector.extract_strided_slice %8 {offsets = [0, 24], sizes = [8, 8], strides = [1, 1]} : vector<8x32xf32> to vector<8x8xf32>
    %cst_33 = arith.constant 0.353553385 : f32
    %69 = vector.broadcast %cst_33 : f32 to vector<8x8xf32>
    %70 = arith.mulf %68, %69 : vector<8x8xf32>
    %71 = vector.extract_strided_slice %13 {offsets = [0, 24], sizes = [8, 8], strides = [1, 1]} : vector<8x64xf32> to vector<8x8xf32>
    %72 = vector.extract_strided_slice %13 {offsets = [0, 56], sizes = [8, 8], strides = [1, 1]} : vector<8x64xf32> to vector<8x8xf32>
    %cst_34 = arith.constant dense<0.000000e+00> : vector<8x8xf32>
    %73 = tpu.matmul %70, %71, %cst_34 {dimension_numbers = #tpu.dot_dimension_numbers<[1], [1], [0], [0], [0, 0, 1, 0], [], []>} : vector<8x8xf32>, vector<8x8xf32>, vector<8x8xf32> -> vector<8x8xf32>
    %cst_35 = arith.constant dense<0xFF800000> : vector<8xf32>
    %74 = vector.multi_reduction <maximumf>, %73, %cst_35 [1] : vector<8x8xf32> to vector<8xf32>
    %75 = vector.shape_cast %74 : vector<8xf32> to vector<8x1xf32>
    %76 = vector.broadcast %75 : vector<8x1xf32> to vector<8x8xf32>
    %77 = arith.subf %73, %76 : vector<8x8xf32>
    %78 = math.exp %77 : vector<8x8xf32>
    %cst_36 = arith.constant dense<0.000000e+00> : vector<8xf32>
    %79 = vector.multi_reduction <add>, %78, %cst_36 [1] : vector<8x8xf32> to vector<8xf32>
    %80 = vector.shape_cast %79 : vector<8xf32> to vector<8x1xf32>
    %81 = tpu.reciprocal %80 {approx = true} : vector<8x1xf32> -> vector<8x1xf32>
    %82 = vector.broadcast %81 : vector<8x1xf32> to vector<8x8xf32>
    %83 = arith.mulf %78, %82 : vector<8x8xf32>
    %cst_37 = arith.constant dense<0.000000e+00> : vector<8x8xf32>
    %84 = tpu.matmul %83, %72, %cst_37 {dimension_numbers = #tpu.dot_dimension_numbers<[1], [0], [0], [1], [0, 0, 1, 1], [], []>} : vector<8x8xf32>, vector<8x8xf32>, vector<8x8xf32> -> vector<8x8xf32>
    %c0_38 = arith.constant 0 : index
    %c24 = arith.constant 24 : index
    %85 = vector.load %arg12[%c0_38, %c24] : memref<8x32xf32, #tpu.memory_space<vmem>>, vector<8x8xf32>
    tpu.vector_store %arg12[%c0_38, %c24], %84 {strides = array<i32>} : memref<8x32xf32, #tpu.memory_space<vmem>>, vector<8x8xf32>,
    %c0_39 = arith.constant 0 : index
    %c0_40 = arith.constant 0 : index
    %86 = vector.load %arg12[%c0_39, %c0_40] : memref<8x32xf32, #tpu.memory_space<vmem>>, vector<8x32xf32>
    %c0_41 = arith.constant 0 : index
    %c0_42 = arith.constant 0 : index
    %87 = vector.load %arg7[%c0_41, %c0_42] : memref<32x32xf32, #tpu.memory_space<vmem>>, vector<32x32xf32>
    %cst_43 = arith.constant dense<0.000000e+00> : vector<8x32xf32>
    %88 = tpu.matmul %86, %87, %cst_43 {dimension_numbers = #tpu.dot_dimension_numbers<[1], [0], [0], [1], [0, 0, 1, 1], [], []>} : vector<8x32xf32>, vector<32x32xf32>, vector<8x32xf32> -> vector<8x32xf32>
    %c0_44 = arith.constant 0 : index
    %c0_45 = arith.constant 0 : index
    %89 = vector.load %arg8[%c0_44, %c0_45] : memref<1x32xf32, #tpu.memory_space<vmem>>, vector<1x32xf32>
    %90 = vector.broadcast %89 : vector<1x32xf32> to vector<8x32xf32>
    %91 = arith.addf %88, %90 : vector<8x32xf32>
    %92 = arith.addf %1, %91 : vector<8x32xf32>
    %c0_46 = arith.constant 0 : index
    %c0_47 = arith.constant 0 : index
    %93 = vector.load %arg9[%c0_46, %c0_47] : memref<1x32xf32, #tpu.memory_space<vmem>>, vector<1x32xf32>
    %c0_48 = arith.constant 0 : index
    %c0_49 = arith.constant 0 : index
    %94 = vector.load %arg10[%c0_48, %c0_49] : memref<1x32xf32, #tpu.memory_space<vmem>>, vector<1x32xf32>
    %cst_50 = arith.constant dense<0.000000e+00> : vector<8xf32>
    %95 = vector.multi_reduction <add>, %92, %cst_50 [1] : vector<8x32xf32> to vector<8xf32>
    %96 = vector.shape_cast %95 : vector<8xf32> to vector<8x1xf32>
    %cst_51 = arith.constant 3.200000e+01 : f32
    %97 = vector.broadcast %cst_51 : f32 to vector<8x1xf32>
    %98 = arith.divf %96, %97 : vector<8x1xf32>
    %99 = vector.broadcast %98 : vector<8x1xf32> to vector<8x32xf32>
    %100 = arith.subf %92, %99 : vector<8x32xf32>
    %101 = arith.mulf %100, %100 : vector<8x32xf32>
    %cst_52 = arith.constant dense<0.000000e+00> : vector<8xf32>
    %102 = vector.multi_reduction <add>, %101, %cst_52 [1] : vector<8x32xf32> to vector<8xf32>
    %103 = vector.shape_cast %102 : vector<8xf32> to vector<8x1xf32>
    %cst_53 = arith.constant 3.200000e+01 : f32
    %104 = vector.broadcast %cst_53 : f32 to vector<8x1xf32>
    %105 = arith.divf %103, %104 : vector<8x1xf32>
    %cst_54 = arith.constant 9.99999974E-6 : f32
    %106 = vector.broadcast %cst_54 : f32 to vector<8x1xf32>
    %107 = arith.addf %105, %106 : vector<8x1xf32>
    %108 = math.rsqrt %107 : vector<8x1xf32>
    %109 = vector.broadcast %108 : vector<8x1xf32> to vector<8x32xf32>
    %110 = arith.mulf %100, %109 : vector<8x32xf32>
    %111 = vector.broadcast %93 : vector<1x32xf32> to vector<8x32xf32>
    %112 = arith.mulf %110, %111 : vector<8x32xf32>
    %113 = vector.broadcast %94 : vector<1x32xf32> to vector<8x32xf32>
    %114 = arith.addf %112, %113 : vector<8x32xf32>
    %c0_55 = arith.constant 0 : index
    %c0_56 = arith.constant 0 : index
    %c0_57 = arith.constant 0 : index
    %115 = vector.load %arg11[%c0_55, %c0_56, %c0_57] : memref<1x8x32xf32, #tpu.memory_space<vmem>>, vector<1x8x32xf32>
    %116 = vector.shape_cast %115 : vector<1x8x32xf32> to vector<8x32xf32>
    %117 = vector.shape_cast %114 : vector<8x32xf32> to vector<1x8x32xf32>
    tpu.vector_store %arg11[%c0_55, %c0_56, %c0_57], %117 {strides = array<i32>} : memref<1x8x32xf32, #tpu.memory_space<vmem>>, vector<1x8x32xf32>,
    return
  }
  func.func @transform_0(%arg0: i32) -> (i32, i32, i32) {
    %c0_i32 = arith.constant 0 : i32
    %c0_i32_0 = arith.constant 0 : i32
    %c0_i32_1 = arith.constant 0 : i32
    return %arg0, %c0_i32, %c0_i32_0 : i32, i32, i32
  }
  func.func @transform_1(%arg0: i32) -> (i32, i32, i32) {
    %c0_i32 = arith.constant 0 : i32
    %c0_i32_0 = arith.constant 0 : i32
    %c0_i32_1 = arith.constant 0 : i32
    return %arg0, %c0_i32, %c0_i32_0 : i32, i32, i32
  }
  func.func @transform_2(%arg0: i32) -> (i32, i32) {
    %c0_i32 = arith.constant 0 : i32
    %c0_i32_0 = arith.constant 0 : i32
    %c0_i32_1 = arith.constant 0 : i32
    return %c0_i32, %c0_i32_0 : i32, i32
  }
  func.func @transform_3(%arg0: i32) -> (i32, i32) {
    %c0_i32 = arith.constant 0 : i32
    %c0_i32_0 = arith.constant 0 : i32
    %c0_i32_1 = arith.constant 0 : i32
    return %c0_i32, %c0_i32_0 : i32, i32
  }
  func.func @transform_4(%arg0: i32) -> (i32, i32) {
    %c0_i32 = arith.constant 0 : i32
    %c0_i32_0 = arith.constant 0 : i32
    %c0_i32_1 = arith.constant 0 : i32
    return %c0_i32, %c0_i32_0 : i32, i32
  }
  func.func @transform_5(%arg0: i32) -> (i32, i32) {
    %c0_i32 = arith.constant 0 : i32
    %c0_i32_0 = arith.constant 0 : i32
    %c0_i32_1 = arith.constant 0 : i32
    return %c0_i32, %c0_i32_0 : i32, i32
  }
  func.func @transform_6(%arg0: i32) -> (i32, i32) {
    %c0_i32 = arith.constant 0 : i32
    %c0_i32_0 = arith.constant 0 : i32
    %c0_i32_1 = arith.constant 0 : i32
    return %c0_i32, %c0_i32_0 : i32, i32
  }
  func.func @transform_7(%arg0: i32) -> (i32, i32) {
    %c0_i32 = arith.constant 0 : i32
    %c0_i32_0 = arith.constant 0 : i32
    %c0_i32_1 = arith.constant 0 : i32
    return %c0_i32, %c0_i32_0 : i32, i32
  }
  func.func @transform_8(%arg0: i32) -> (i32, i32) {
    %c0_i32 = arith.constant 0 : i32
    %c0_i32_0 = arith.constant 0 : i32
    %c0_i32_1 = arith.constant 0 : i32
    return %c0_i32, %c0_i32_0 : i32, i32
  }
  func.func @transform_9(%arg0: i32) -> (i32, i32) {
    %c0_i32 = arith.constant 0 : i32
    %c0_i32_0 = arith.constant 0 : i32
    %c0_i32_1 = arith.constant 0 : i32
    return %c0_i32, %c0_i32_0 : i32, i32
  }
  func.func @transform_10(%arg0: i32) -> (i32, i32, i32) {
    %c0_i32 = arith.constant 0 : i32
    %c0_i32_0 = arith.constant 0 : i32
    %c0_i32_1 = arith.constant 0 : i32
    return %arg0, %c0_i32, %c0_i32_0 : i32, i32, i32
  }
}

module attributes {stable_mosaic.version = 11 : i64} {
  func.func @_ffn_block_kernel(%arg0: i32, %arg1: memref<8x32xf32, #tpu.memory_space<vmem>>, %arg2: memref<32x64xf32, #tpu.memory_space<vmem>>, %arg3: memref<1x64xf32, #tpu.memory_space<vmem>>, %arg4: memref<64x32xf32, #tpu.memory_space<vmem>>, %arg5: memref<1x32xf32, #tpu.memory_space<vmem>>, %arg6: memref<1x32xf32, #tpu.memory_space<vmem>>, %arg7: memref<1x32xf32, #tpu.memory_space<vmem>>, %arg8: memref<8x32xf32, #tpu.memory_space<vmem>>) attributes {dimension_semantics = [#tpu.dimension_semantics<parallel>], iteration_bounds = array<i64: 2>, scalar_prefetch = 0 : i64, scratch_operands = 0 : i64, tpu.core_type = #tpu.core_type<tc>, window_params = [{transform_indices = @transform_0, window_bounds = array<i64: 8, 32>}, {pipeline_mode = #tpu.pipeline_mode<synchronous>, transform_indices = @transform_1, window_bounds = array<i64: 32, 64>}, {pipeline_mode = #tpu.pipeline_mode<synchronous>, transform_indices = @transform_2, window_bounds = array<i64: 1, 64>}, {pipeline_mode = #tpu.pipeline_mode<synchronous>, transform_indices = @transform_3, window_bounds = array<i64: 64, 32>}, {pipeline_mode = #tpu.pipeline_mode<synchronous>, transform_indices = @transform_4, window_bounds = array<i64: 1, 32>}, {pipeline_mode = #tpu.pipeline_mode<synchronous>, transform_indices = @transform_5, window_bounds = array<i64: 1, 32>}, {pipeline_mode = #tpu.pipeline_mode<synchronous>, transform_indices = @transform_6, window_bounds = array<i64: 1, 32>}, {transform_indices = @transform_7, window_bounds = array<i64: 8, 32>}]} {
    %c0 = arith.constant 0 : index
    %c0_0 = arith.constant 0 : index
    %0 = vector.load %arg1[%c0, %c0_0] : memref<8x32xf32, #tpu.memory_space<vmem>>, vector<8x32xf32>
    %c0_1 = arith.constant 0 : index
    %c0_2 = arith.constant 0 : index
    %1 = vector.load %arg2[%c0_1, %c0_2] : memref<32x64xf32, #tpu.memory_space<vmem>>, vector<32x64xf32>
    %cst = arith.constant dense<0.000000e+00> : vector<8x64xf32>
    %2 = tpu.matmul %0, %1, %cst {dimension_numbers = #tpu.dot_dimension_numbers<[1], [0], [0], [1], [0, 0, 1, 1], [], []>} : vector<8x32xf32>, vector<32x64xf32>, vector<8x64xf32> -> vector<8x64xf32>
    %c0_3 = arith.constant 0 : index
    %c0_4 = arith.constant 0 : index
    %3 = vector.load %arg3[%c0_3, %c0_4] : memref<1x64xf32, #tpu.memory_space<vmem>>, vector<1x64xf32>
    %4 = vector.broadcast %3 : vector<1x64xf32> to vector<8x64xf32>
    %5 = arith.addf %2, %4 : vector<8x64xf32>
    %cst_5 = arith.constant 0.000000e+00 : f32
    %6 = vector.broadcast %cst_5 : f32 to vector<8x64xf32>
    %7 = arith.maximumf %5, %6 : vector<8x64xf32>
    %c0_6 = arith.constant 0 : index
    %c0_7 = arith.constant 0 : index
    %8 = vector.load %arg4[%c0_6, %c0_7] : memref<64x32xf32, #tpu.memory_space<vmem>>, vector<64x32xf32>
    %cst_8 = arith.constant dense<0.000000e+00> : vector<8x32xf32>
    %9 = tpu.matmul %7, %8, %cst_8 {dimension_numbers = #tpu.dot_dimension_numbers<[1], [0], [0], [1], [0, 0, 1, 1], [], []>} : vector<8x64xf32>, vector<64x32xf32>, vector<8x32xf32> -> vector<8x32xf32>
    %c0_9 = arith.constant 0 : index
    %c0_10 = arith.constant 0 : index
    %10 = vector.load %arg5[%c0_9, %c0_10] : memref<1x32xf32, #tpu.memory_space<vmem>>, vector<1x32xf32>
    %11 = vector.broadcast %10 : vector<1x32xf32> to vector<8x32xf32>
    %12 = arith.addf %9, %11 : vector<8x32xf32>
    %13 = arith.addf %0, %12 : vector<8x32xf32>
    %c0_11 = arith.constant 0 : index
    %c0_12 = arith.constant 0 : index
    %14 = vector.load %arg6[%c0_11, %c0_12] : memref<1x32xf32, #tpu.memory_space<vmem>>, vector<1x32xf32>
    %c0_13 = arith.constant 0 : index
    %c0_14 = arith.constant 0 : index
    %15 = vector.load %arg7[%c0_13, %c0_14] : memref<1x32xf32, #tpu.memory_space<vmem>>, vector<1x32xf32>
    %cst_15 = arith.constant dense<0.000000e+00> : vector<8xf32>
    %16 = vector.multi_reduction <add>, %13, %cst_15 [1] : vector<8x32xf32> to vector<8xf32>
    %17 = vector.shape_cast %16 : vector<8xf32> to vector<8x1xf32>
    %cst_16 = arith.constant 3.200000e+01 : f32
    %18 = vector.broadcast %cst_16 : f32 to vector<8x1xf32>
    %19 = arith.divf %17, %18 : vector<8x1xf32>
    %20 = vector.broadcast %19 : vector<8x1xf32> to vector<8x32xf32>
    %21 = arith.subf %13, %20 : vector<8x32xf32>
    %22 = arith.mulf %21, %21 : vector<8x32xf32>
    %cst_17 = arith.constant dense<0.000000e+00> : vector<8xf32>
    %23 = vector.multi_reduction <add>, %22, %cst_17 [1] : vector<8x32xf32> to vector<8xf32>
    %24 = vector.shape_cast %23 : vector<8xf32> to vector<8x1xf32>
    %cst_18 = arith.constant 3.200000e+01 : f32
    %25 = vector.broadcast %cst_18 : f32 to vector<8x1xf32>
    %26 = arith.divf %24, %25 : vector<8x1xf32>
    %cst_19 = arith.constant 9.99999974E-6 : f32
    %27 = vector.broadcast %cst_19 : f32 to vector<8x1xf32>
    %28 = arith.addf %26, %27 : vector<8x1xf32>
    %29 = math.rsqrt %28 : vector<8x1xf32>
    %30 = vector.broadcast %29 : vector<8x1xf32> to vector<8x32xf32>
    %31 = arith.mulf %21, %30 : vector<8x32xf32>
    %32 = vector.broadcast %14 : vector<1x32xf32> to vector<8x32xf32>
    %33 = arith.mulf %31, %32 : vector<8x32xf32>
    %34 = vector.broadcast %15 : vector<1x32xf32> to vector<8x32xf32>
    %35 = arith.addf %33, %34 : vector<8x32xf32>
    %c0_20 = arith.constant 0 : index
    %c0_21 = arith.constant 0 : index
    %36 = vector.load %arg8[%c0_20, %c0_21] : memref<8x32xf32, #tpu.memory_space<vmem>>, vector<8x32xf32>
    tpu.vector_store %arg8[%c0_20, %c0_21], %35 {strides = array<i32>} : memref<8x32xf32, #tpu.memory_space<vmem>>, vector<8x32xf32>,
    return
  }
  func.func @transform_0(%arg0: i32) -> (i32, i32) {
    %c0_i32 = arith.constant 0 : i32
    %c0_i32_0 = arith.constant 0 : i32
    return %arg0, %c0_i32 : i32, i32
  }
  func.func @transform_1(%arg0: i32) -> (i32, i32) {
    %c0_i32 = arith.constant 0 : i32
    %c0_i32_0 = arith.constant 0 : i32
    %c0_i32_1 = arith.constant 0 : i32
    return %c0_i32, %c0_i32_0 : i32, i32
  }
  func.func @transform_2(%arg0: i32) -> (i32, i32) {
    %c0_i32 = arith.constant 0 : i32
    %c0_i32_0 = arith.constant 0 : i32
    %c0_i32_1 = arith.constant 0 : i32
    return %c0_i32, %c0_i32_0 : i32, i32
  }
  func.func @transform_3(%arg0: i32) -> (i32, i32) {
    %c0_i32 = arith.constant 0 : i32
    %c0_i32_0 = arith.constant 0 : i32
    %c0_i32_1 = arith.constant 0 : i32
    return %c0_i32, %c0_i32_0 : i32, i32
  }
  func.func @transform_4(%arg0: i32) -> (i32, i32) {
    %c0_i32 = arith.constant 0 : i32
    %c0_i32_0 = arith.constant 0 : i32
    %c0_i32_1 = arith.constant 0 : i32
    return %c0_i32, %c0_i32_0 : i32, i32
  }
  func.func @transform_5(%arg0: i32) -> (i32, i32) {
    %c0_i32 = arith.constant 0 : i32
    %c0_i32_0 = arith.constant 0 : i32
    %c0_i32_1 = arith.constant 0 : i32
    return %c0_i32, %c0_i32_0 : i32, i32
  }
  func.func @transform_6(%arg0: i32) -> (i32, i32) {
    %c0_i32 = arith.constant 0 : i32
    %c0_i32_0 = arith.constant 0 : i32
    %c0_i32_1 = arith.constant 0 : i32
    return %c0_i32, %c0_i32_0 : i32, i32
  }
  func.func @transform_7(%arg0: i32) -> (i32, i32) {
    %c0_i32 = arith.constant 0 : i32
    %c0_i32_0 = arith.constant 0 : i32
    return %arg0, %c0_i32 : i32, i32
  }
}

module attributes {stable_mosaic.version = 11 : i64} {
  func.func @_self_attn_block_kernel(%arg0: i32, %arg1: memref<1x8x32xf32, #tpu.memory_space<vmem>>, %arg2: memref<1x1x8xf32, #tpu.memory_space<vmem>>, %arg3: memref<32x96xf32, #tpu.memory_space<vmem>>, %arg4: memref<1x96xf32, #tpu.memory_space<vmem>>, %arg5: memref<32x32xf32, #tpu.memory_space<vmem>>, %arg6: memref<1x32xf32, #tpu.memory_space<vmem>>, %arg7: memref<1x32xf32, #tpu.memory_space<vmem>>, %arg8: memref<1x32xf32, #tpu.memory_space<vmem>>, %arg9: memref<1x8x32xf32, #tpu.memory_space<vmem>>, %arg10: memref<8x32xf32, #tpu.memory_space<vmem>>) attributes {dimension_semantics = [#tpu.dimension_semantics<parallel>], iteration_bounds = array<i64: 2>, scalar_prefetch = 0 : i64, scratch_operands = 1 : i64, tpu.core_type = #tpu.core_type<tc>, window_params = [{transform_indices = @transform_0, window_bounds = array<i64: 1, 8, 32>}, {transform_indices = @transform_1, window_bounds = array<i64: 1, 1, 8>}, {pipeline_mode = #tpu.pipeline_mode<synchronous>, transform_indices = @transform_2, window_bounds = array<i64: 32, 96>}, {pipeline_mode = #tpu.pipeline_mode<synchronous>, transform_indices = @transform_3, window_bounds = array<i64: 1, 96>}, {pipeline_mode = #tpu.pipeline_mode<synchronous>, transform_indices = @transform_4, window_bounds = array<i64: 32, 32>}, {pipeline_mode = #tpu.pipeline_mode<synchronous>, transform_indices = @transform_5, window_bounds = array<i64: 1, 32>}, {pipeline_mode = #tpu.pipeline_mode<synchronous>, transform_indices = @transform_6, window_bounds = array<i64: 1, 32>}, {pipeline_mode = #tpu.pipeline_mode<synchronous>, transform_indices = @transform_7, window_bounds = array<i64: 1, 32>}, {transform_indices = @transform_8, window_bounds = array<i64: 1, 8, 32>}]} {
    %c0 = arith.constant 0 : index
    %c0_0 = arith.constant 0 : index
    %c0_1 = arith.constant 0 : index
    %0 = vector.load %arg1[%c0, %c0_0, %c0_1] : memref<1x8x32xf32, #tpu.memory_space<vmem>>, vector<1x8x32xf32>
    %1 = vector.shape_cast %0 : vector<1x8x32xf32> to vector<8x32xf32>
    %c0_2 = arith.constant 0 : index
    %c0_3 = arith.constant 0 : index
    %2 = vector.load %arg3[%c0_2, %c0_3] : memref<32x96xf32, #tpu.memory_space<vmem>>, vector<32x96xf32>
    %cst = arith.constant dense<0.000000e+00> : vector<8x96xf32>
    %3 = tpu.matmul %1, %2, %cst {dimension_numbers = #tpu.dot_dimension_numbers<[1], [0], [0], [1], [0, 0, 1, 1], [], []>} : vector<8x32xf32>, vector<32x96xf32>, vector<8x96xf32> -> vector<8x96xf32>
    %c0_4 = arith.constant 0 : index
    %c0_5 = arith.constant 0 : index
    %4 = vector.load %arg4[%c0_4, %c0_5] : memref<1x96xf32, #tpu.memory_space<vmem>>, vector<1x96xf32>
    %5 = vector.broadcast %4 : vector<1x96xf32> to vector<8x96xf32>
    %6 = arith.addf %3, %5 : vector<8x96xf32>
    %7 = tpu.iota {dimensions = array<i32: 0>} : vector<8x8xi32>
    %8 = tpu.iota {dimensions = array<i32: 1>} : vector<8x8xi32>
    %9 = arith.cmpi sgt, %8, %7 : vector<8x8xi32>
    %cst_6 = arith.constant -1.000000e+30 : f32
    %cst_7 = arith.constant 0.000000e+00 : f32
    %10 = vector.broadcast %cst_6 : f32 to vector<8x8xf32>
    %11 = vector.broadcast %cst_7 : f32 to vector<8x8xf32>
    %12 = arith.select %9, %10, %11 : vector<8x8xi1>, vector<8x8xf32>
    %c0_8 = arith.constant 0 : index
    %c0_9 = arith.constant 0 : index
    %c0_10 = arith.constant 0 : index
    %13 = vector.load %arg2[%c0_8, %c0_9, %c0_10] : memref<1x1x8xf32, #tpu.memory_space<vmem>>, vector<1x1x8xf32>
    %14 = vector.shape_cast %13 : vector<1x1x8xf32> to vector<1x8xf32>
    %15 = vector.broadcast %14 : vector<1x8xf32> to vector<8x8xf32>
    %16 = arith.addf %12, %15 : vector<8x8xf32>
    %17 = vector.extract_strided_slice %6 {offsets = [0, 0], sizes = [8, 8], strides = [1, 1]} : vector<8x96xf32> to vector<8x8xf32>
    %cst_11 = arith.constant 0.353553385 : f32
    %18 = vector.broadcast %cst_11 : f32 to vector<8x8xf32>
    %19 = arith.mulf %17, %18 : vector<8x8xf32>
    %20 = vector.extract_strided_slice %6 {offsets = [0, 32], sizes = [8, 8], strides = [1, 1]} : vector<8x96xf32> to vector<8x8xf32>
    %21 = vector.extract_strided_slice %6 {offsets = [0, 64], sizes = [8, 8], strides = [1, 1]} : vector<8x96xf32> to vector<8x8xf32>
    %cst_12 = arith.constant dense<0.000000e+00> : vector<8x8xf32>
    %22 = tpu.matmul %19, %20, %cst_12 {dimension_numbers = #tpu.dot_dimension_numbers<[1], [1], [0], [0], [0, 0, 1, 0], [], []>} : vector<8x8xf32>, vector<8x8xf32>, vector<8x8xf32> -> vector<8x8xf32>
    %23 = arith.addf %22, %16 : vector<8x8xf32>
    %cst_13 = arith.constant dense<0xFF800000> : vector<8xf32>
    %24 = vector.multi_reduction <maximumf>, %23, %cst_13 [1] : vector<8x8xf32> to vector<8xf32>
    %25 = vector.shape_cast %24 : vector<8xf32> to vector<8x1xf32>
    %26 = vector.broadcast %25 : vector<8x1xf32> to vector<8x8xf32>
    %27 = arith.subf %23, %26 : vector<8x8xf32>
    %28 = math.exp %27 : vector<8x8xf32>
    %cst_14 = arith.constant dense<0.000000e+00> : vector<8xf32>
    %29 = vector.multi_reduction <add>, %28, %cst_14 [1] : vector<8x8xf32> to vector<8xf32>
    %30 = vector.shape_cast %29 : vector<8xf32> to vector<8x1xf32>
    %31 = tpu.reciprocal %30 {approx = true} : vector<8x1xf32> -> vector<8x1xf32>
    %32 = vector.broadcast %31 : vector<8x1xf32> to vector<8x8xf32>
    %33 = arith.mulf %28, %32 : vector<8x8xf32>
    %cst_15 = arith.constant dense<0.000000e+00> : vector<8x8xf32>
    %34 = tpu.matmul %33, %21, %cst_15 {dimension_numbers = #tpu.dot_dimension_numbers<[1], [0], [0], [1], [0, 0, 1, 1], [], []>} : vector<8x8xf32>, vector<8x8xf32>, vector<8x8xf32> -> vector<8x8xf32>
    %c0_16 = arith.constant 0 : index
    %c0_17 = arith.constant 0 : index
    %35 = vector.load %arg10[%c0_16, %c0_17] : memref<8x32xf32, #tpu.memory_space<vmem>>, vector<8x8xf32>
    tpu.vector_store %arg10[%c0_16, %c0_17], %34 {strides = array<i32>} : memref<8x32xf32, #tpu.memory_space<vmem>>, vector<8x8xf32>,
    %36 = vector.extract_strided_slice %6 {offsets = [0, 8], sizes = [8, 8], strides = [1, 1]} : vector<8x96xf32> to vector<8x8xf32>
    %cst_18 = arith.constant 0.353553385 : f32
    %37 = vector.broadcast %cst_18 : f32 to vector<8x8xf32>
    %38 = arith.mulf %36, %37 : vector<8x8xf32>
    %39 = vector.extract_strided_slice %6 {offsets = [0, 40], sizes = [8, 8], strides = [1, 1]} : vector<8x96xf32> to vector<8x8xf32>
    %40 = vector.extract_strided_slice %6 {offsets = [0, 72], sizes = [8, 8], strides = [1, 1]} : vector<8x96xf32> to vector<8x8xf32>
    %cst_19 = arith.constant dense<0.000000e+00> : vector<8x8xf32>
    %41 = tpu.matmul %38, %39, %cst_19 {dimension_numbers = #tpu.dot_dimension_numbers<[1], [1], [0], [0], [0, 0, 1, 0], [], []>} : vector<8x8xf32>, vector<8x8xf32>, vector<8x8xf32> -> vector<8x8xf32>
    %42 = arith.addf %41, %16 : vector<8x8xf32>
    %cst_20 = arith.constant dense<0xFF800000> : vector<8xf32>
    %43 = vector.multi_reduction <maximumf>, %42, %cst_20 [1] : vector<8x8xf32> to vector<8xf32>
    %44 = vector.shape_cast %43 : vector<8xf32> to vector<8x1xf32>
    %45 = vector.broadcast %44 : vector<8x1xf32> to vector<8x8xf32>
    %46 = arith.subf %42, %45 : vector<8x8xf32>
    %47 = math.exp %46 : vector<8x8xf32>
    %cst_21 = arith.constant dense<0.000000e+00> : vector<8xf32>
    %48 = vector.multi_reduction <add>, %47, %cst_21 [1] : vector<8x8xf32> to vector<8xf32>
    %49 = vector.shape_cast %48 : vector<8xf32> to vector<8x1xf32>
    %50 = tpu.reciprocal %49 {approx = true} : vector<8x1xf32> -> vector<8x1xf32>
    %51 = vector.broadcast %50 : vector<8x1xf32> to vector<8x8xf32>
    %52 = arith.mulf %47, %51 : vector<8x8xf32>
    %cst_22 = arith.constant dense<0.000000e+00> : vector<8x8xf32>
    %53 = tpu.matmul %52, %40, %cst_22 {dimension_numbers = #tpu.dot_dimension_numbers<[1], [0], [0], [1], [0, 0, 1, 1], [], []>} : vector<8x8xf32>, vector<8x8xf32>, vector<8x8xf32> -> vector<8x8xf32>
    %c0_23 = arith.constant 0 : index
    %c8 = arith.constant 8 : index
    %54 = vector.load %arg10[%c0_23, %c8] : memref<8x32xf32, #tpu.memory_space<vmem>>, vector<8x8xf32>
    tpu.vector_store %arg10[%c0_23, %c8], %53 {strides = array<i32>} : memref<8x32xf32, #tpu.memory_space<vmem>>, vector<8x8xf32>,
    %55 = vector.extract_strided_slice %6 {offsets = [0, 16], sizes = [8, 8], strides = [1, 1]} : vector<8x96xf32> to vector<8x8xf32>
    %cst_24 = arith.constant 0.353553385 : f32
    %56 = vector.broadcast %cst_24 : f32 to vector<8x8xf32>
    %57 = arith.mulf %55, %56 : vector<8x8xf32>
    %58 = vector.extract_strided_slice %6 {offsets = [0, 48], sizes = [8, 8], strides = [1, 1]} : vector<8x96xf32> to vector<8x8xf32>
    %59 = vector.extract_strided_slice %6 {offsets = [0, 80], sizes = [8, 8], strides = [1, 1]} : vector<8x96xf32> to vector<8x8xf32>
    %cst_25 = arith.constant dense<0.000000e+00> : vector<8x8xf32>
    %60 = tpu.matmul %57, %58, %cst_25 {dimension_numbers = #tpu.dot_dimension_numbers<[1], [1], [0], [0], [0, 0, 1, 0], [], []>} : vector<8x8xf32>, vector<8x8xf32>, vector<8x8xf32> -> vector<8x8xf32>
    %61 = arith.addf %60, %16 : vector<8x8xf32>
    %cst_26 = arith.constant dense<0xFF800000> : vector<8xf32>
    %62 = vector.multi_reduction <maximumf>, %61, %cst_26 [1] : vector<8x8xf32> to vector<8xf32>
    %63 = vector.shape_cast %62 : vector<8xf32> to vector<8x1xf32>
    %64 = vector.broadcast %63 : vector<8x1xf32> to vector<8x8xf32>
    %65 = arith.subf %61, %64 : vector<8x8xf32>
    %66 = math.exp %65 : vector<8x8xf32>
    %cst_27 = arith.constant dense<0.000000e+00> : vector<8xf32>
    %67 = vector.multi_reduction <add>, %66, %cst_27 [1] : vector<8x8xf32> to vector<8xf32>
    %68 = vector.shape_cast %67 : vector<8xf32> to vector<8x1xf32>
    %69 = tpu.reciprocal %68 {approx = true} : vector<8x1xf32> -> vector<8x1xf32>
    %70 = vector.broadcast %69 : vector<8x1xf32> to vector<8x8xf32>
    %71 = arith.mulf %66, %70 : vector<8x8xf32>
    %cst_28 = arith.constant dense<0.000000e+00> : vector<8x8xf32>
    %72 = tpu.matmul %71, %59, %cst_28 {dimension_numbers = #tpu.dot_dimension_numbers<[1], [0], [0], [1], [0, 0, 1, 1], [], []>} : vector<8x8xf32>, vector<8x8xf32>, vector<8x8xf32> -> vector<8x8xf32>
    %c0_29 = arith.constant 0 : index
    %c16 = arith.constant 16 : index
    %73 = vector.load %arg10[%c0_29, %c16] : memref<8x32xf32, #tpu.memory_space<vmem>>, vector<8x8xf32>
    tpu.vector_store %arg10[%c0_29, %c16], %72 {strides = array<i32>} : memref<8x32xf32, #tpu.memory_space<vmem>>, vector<8x8xf32>,
    %74 = vector.extract_strided_slice %6 {offsets = [0, 24], sizes = [8, 8], strides = [1, 1]} : vector<8x96xf32> to vector<8x8xf32>
    %cst_30 = arith.constant 0.353553385 : f32
    %75 = vector.broadcast %cst_30 : f32 to vector<8x8xf32>
    %76 = arith.mulf %74, %75 : vector<8x8xf32>
    %77 = vector.extract_strided_slice %6 {offsets = [0, 56], sizes = [8, 8], strides = [1, 1]} : vector<8x96xf32> to vector<8x8xf32>
    %78 = vector.extract_strided_slice %6 {offsets = [0, 88], sizes = [8, 8], strides = [1, 1]} : vector<8x96xf32> to vector<8x8xf32>
    %cst_31 = arith.constant dense<0.000000e+00> : vector<8x8xf32>
    %79 = tpu.matmul %76, %77, %cst_31 {dimension_numbers = #tpu.dot_dimension_numbers<[1], [1], [0], [0], [0, 0, 1, 0], [], []>} : vector<8x8xf32>, vector<8x8xf32>, vector<8x8xf32> -> vector<8x8xf32>
    %80 = arith.addf %79, %16 : vector<8x8xf32>
    %cst_32 = arith.constant dense<0xFF800000> : vector<8xf32>
    %81 = vector.multi_reduction <maximumf>, %80, %cst_32 [1] : vector<8x8xf32> to vector<8xf32>
    %82 = vector.shape_cast %81 : vector<8xf32> to vector<8x1xf32>
    %83 = vector.broadcast %82 : vector<8x1xf32> to vector<8x8xf32>
    %84 = arith.subf %80, %83 : vector<8x8xf32>
    %85 = math.exp %84 : vector<8x8xf32>
    %cst_33 = arith.constant dense<0.000000e+00> : vector<8xf32>
    %86 = vector.multi_reduction <add>, %85, %cst_33 [1] : vector<8x8xf32> to vector<8xf32>
    %87 = vector.shape_cast %86 : vector<8xf32> to vector<8x1xf32>
    %88 = tpu.reciprocal %87 {approx = true} : vector<8x1xf32> -> vector<8x1xf32>
    %89 = vector.broadcast %88 : vector<8x1xf32> to vector<8x8xf32>
    %90 = arith.mulf %85, %89 : vector<8x8xf32>
    %cst_34 = arith.constant dense<0.000000e+00> : vector<8x8xf32>
    %91 = tpu.matmul %90, %78, %cst_34 {dimension_numbers = #tpu.dot_dimension_numbers<[1], [0], [0], [1], [0, 0, 1, 1], [], []>} : vector<8x8xf32>, vector<8x8xf32>, vector<8x8xf32> -> vector<8x8xf32>
    %c0_35 = arith.constant 0 : index
    %c24 = arith.constant 24 : index
    %92 = vector.load %arg10[%c0_35, %c24] : memref<8x32xf32, #tpu.memory_space<vmem>>, vector<8x8xf32>
    tpu.vector_store %arg10[%c0_35, %c24], %91 {strides = array<i32>} : memref<8x32xf32, #tpu.memory_space<vmem>>, vector<8x8xf32>,
    %c0_36 = arith.constant 0 : index
    %c0_37 = arith.constant 0 : index
    %93 = vector.load %arg10[%c0_36, %c0_37] : memref<8x32xf32, #tpu.memory_space<vmem>>, vector<8x32xf32>
    %c0_38 = arith.constant 0 : index
    %c0_39 = arith.constant 0 : index
    %94 = vector.load %arg5[%c0_38, %c0_39] : memref<32x32xf32, #tpu.memory_space<vmem>>, vector<32x32xf32>
    %cst_40 = arith.constant dense<0.000000e+00> : vector<8x32xf32>
    %95 = tpu.matmul %93, %94, %cst_40 {dimension_numbers = #tpu.dot_dimension_numbers<[1], [0], [0], [1], [0, 0, 1, 1], [], []>} : vector<8x32xf32>, vector<32x32xf32>, vector<8x32xf32> -> vector<8x32xf32>
    %c0_41 = arith.constant 0 : index
    %c0_42 = arith.constant 0 : index
    %96 = vector.load %arg6[%c0_41, %c0_42] : memref<1x32xf32, #tpu.memory_space<vmem>>, vector<1x32xf32>
    %97 = vector.broadcast %96 : vector<1x32xf32> to vector<8x32xf32>
    %98 = arith.addf %95, %97 : vector<8x32xf32>
    %99 = arith.addf %1, %98 : vector<8x32xf32>
    %c0_43 = arith.constant 0 : index
    %c0_44 = arith.constant 0 : index
    %100 = vector.load %arg7[%c0_43, %c0_44] : memref<1x32xf32, #tpu.memory_space<vmem>>, vector<1x32xf32>
    %c0_45 = arith.constant 0 : index
    %c0_46 = arith.constant 0 : index
    %101 = vector.load %arg8[%c0_45, %c0_46] : memref<1x32xf32, #tpu.memory_space<vmem>>, vector<1x32xf32>
    %cst_47 = arith.constant dense<0.000000e+00> : vector<8xf32>
    %102 = vector.multi_reduction <add>, %99, %cst_47 [1] : vector<8x32xf32> to vector<8xf32>
    %103 = vector.shape_cast %102 : vector<8xf32> to vector<8x1xf32>
    %cst_48 = arith.constant 3.200000e+01 : f32
    %104 = vector.broadcast %cst_48 : f32 to vector<8x1xf32>
    %105 = arith.divf %103, %104 : vector<8x1xf32>
    %106 = vector.broadcast %105 : vector<8x1xf32> to vector<8x32xf32>
    %107 = arith.subf %99, %106 : vector<8x32xf32>
    %108 = arith.mulf %107, %107 : vector<8x32xf32>
    %cst_49 = arith.constant dense<0.000000e+00> : vector<8xf32>
    %109 = vector.multi_reduction <add>, %108, %cst_49 [1] : vector<8x32xf32> to vector<8xf32>
    %110 = vector.shape_cast %109 : vector<8xf32> to vector<8x1xf32>
    %cst_50 = arith.constant 3.200000e+01 : f32
    %111 = vector.broadcast %cst_50 : f32 to vector<8x1xf32>
    %112 = arith.divf %110, %111 : vector<8x1xf32>
    %cst_51 = arith.constant 9.99999974E-6 : f32
    %113 = vector.broadcast %cst_51 : f32 to vector<8x1xf32>
    %114 = arith.addf %112, %113 : vector<8x1xf32>
    %115 = math.rsqrt %114 : vector<8x1xf32>
    %116 = vector.broadcast %115 : vector<8x1xf32> to vector<8x32xf32>
    %117 = arith.mulf %107, %116 : vector<8x32xf32>
    %118 = vector.broadcast %100 : vector<1x32xf32> to vector<8x32xf32>
    %119 = arith.mulf %117, %118 : vector<8x32xf32>
    %120 = vector.broadcast %101 : vector<1x32xf32> to vector<8x32xf32>
    %121 = arith.addf %119, %120 : vector<8x32xf32>
    %c0_52 = arith.constant 0 : index
    %c0_53 = arith.constant 0 : index
    %c0_54 = arith.constant 0 : index
    %122 = vector.load %arg9[%c0_52, %c0_53, %c0_54] : memref<1x8x32xf32, #tpu.memory_space<vmem>>, vector<1x8x32xf32>
    %123 = vector.shape_cast %122 : vector<1x8x32xf32> to vector<8x32xf32>
    %124 = vector.shape_cast %121 : vector<8x32xf32> to vector<1x8x32xf32>
    tpu.vector_store %arg9[%c0_52, %c0_53, %c0_54], %124 {strides = array<i32>} : memref<1x8x32xf32, #tpu.memory_space<vmem>>, vector<1x8x32xf32>,
    return
  }
  func.func @transform_0(%arg0: i32) -> (i32, i32, i32) {
    %c0_i32 = arith.constant 0 : i32
    %c0_i32_0 = arith.constant 0 : i32
    %c0_i32_1 = arith.constant 0 : i32
    return %arg0, %c0_i32, %c0_i32_0 : i32, i32, i32
  }
  func.func @transform_1(%arg0: i32) -> (i32, i32, i32) {
    %c0_i32 = arith.constant 0 : i32
    %c0_i32_0 = arith.constant 0 : i32
    %c0_i32_1 = arith.constant 0 : i32
    return %arg0, %c0_i32, %c0_i32_0 : i32, i32, i32
  }
  func.func @transform_2(%arg0: i32) -> (i32, i32) {
    %c0_i32 = arith.constant 0 : i32
    %c0_i32_0 = arith.constant 0 : i32
    %c0_i32_1 = arith.constant 0 : i32
    return %c0_i32, %c0_i32_0 : i32, i32
  }
  func.func @transform_3(%arg0: i32) -> (i32, i32) {
    %c0_i32 = arith.constant 0 : i32
    %c0_i32_0 = arith.constant 0 : i32
    %c0_i32_1 = arith.constant 0 : i32
    return %c0_i32, %c0_i32_0 : i32, i32
  }
  func.func @transform_4(%arg0: i32) -> (i32, i32) {
    %c0_i32 = arith.constant 0 : i32
    %c0_i32_0 = arith.constant 0 : i32
    %c0_i32_1 = arith.constant 0 : i32
    return %c0_i32, %c0_i32_0 : i32, i32
  }
  func.func @transform_5(%arg0: i32) -> (i32, i32) {
    %c0_i32 = arith.constant 0 : i32
    %c0_i32_0 = arith.constant 0 : i32
    %c0_i32_1 = arith.constant 0 : i32
    return %c0_i32, %c0_i32_0 : i32, i32
  }
  func.func @transform_6(%arg0: i32) -> (i32, i32) {
    %c0_i32 = arith.constant 0 : i32
    %c0_i32_0 = arith.constant 0 : i32
    %c0_i32_1 = arith.constant 0 : i32
    return %c0_i32, %c0_i32_0 : i32, i32
  }
  func.func @transform_7(%arg0: i32) -> (i32, i32) {
    %c0_i32 = arith.constant 0 : i32
    %c0_i32_0 = arith.constant 0 : i32
    %c0_i32_1 = arith.constant 0 : i32
    return %c0_i32, %c0_i32_0 : i32, i32
  }
  func.func @transform_8(%arg0: i32) -> (i32, i32, i32) {
    %c0_i32 = arith.constant 0 : i32
    %c0_i32_0 = arith.constant 0 : i32
    %c0_i32_1 = arith.constant 0 : i32
    return %arg0, %c0_i32, %c0_i32_0 : i32, i32, i32
  }
}

module attributes {stable_mosaic.version = 11 : i64} {
  func.func @_cross_attn_block_kernel(%arg0: i32, %arg1: memref<1x8x32xf32, #tpu.memory_space<vmem>>, %arg2: memref<1x8x32xf32, #tpu.memory_space<vmem>>, %arg3: memref<32x32xf32, #tpu.memory_space<vmem>>, %arg4: memref<1x32xf32, #tpu.memory_space<vmem>>, %arg5: memref<32x64xf32, #tpu.memory_space<vmem>>, %arg6: memref<1x64xf32, #tpu.memory_space<vmem>>, %arg7: memref<32x32xf32, #tpu.memory_space<vmem>>, %arg8: memref<1x32xf32, #tpu.memory_space<vmem>>, %arg9: memref<1x32xf32, #tpu.memory_space<vmem>>, %arg10: memref<1x32xf32, #tpu.memory_space<vmem>>, %arg11: memref<1x8x32xf32, #tpu.memory_space<vmem>>, %arg12: memref<8x32xf32, #tpu.memory_space<vmem>>) attributes {dimension_semantics = [#tpu.dimension_semantics<parallel>], iteration_bounds = array<i64: 2>, scalar_prefetch = 0 : i64, scratch_operands = 1 : i64, tpu.core_type = #tpu.core_type<tc>, window_params = [{transform_indices = @transform_0, window_bounds = array<i64: 1, 8, 32>}, {transform_indices = @transform_1, window_bounds = array<i64: 1, 8, 32>}, {pipeline_mode = #tpu.pipeline_mode<synchronous>, transform_indices = @transform_2, window_bounds = array<i64: 32, 32>}, {pipeline_mode = #tpu.pipeline_mode<synchronous>, transform_indices = @transform_3, window_bounds = array<i64: 1, 32>}, {pipeline_mode = #tpu.pipeline_mode<synchronous>, transform_indices = @transform_4, window_bounds = array<i64: 32, 64>}, {pipeline_mode = #tpu.pipeline_mode<synchronous>, transform_indices = @transform_5, window_bounds = array<i64: 1, 64>}, {pipeline_mode = #tpu.pipeline_mode<synchronous>, transform_indices = @transform_6, window_bounds = array<i64: 32, 32>}, {pipeline_mode = #tpu.pipeline_mode<synchronous>, transform_indices = @transform_7, window_bounds = array<i64: 1, 32>}, {pipeline_mode = #tpu.pipeline_mode<synchronous>, transform_indices = @transform_8, window_bounds = array<i64: 1, 32>}, {pipeline_mode = #tpu.pipeline_mode<synchronous>, transform_indices = @transform_9, window_bounds = array<i64: 1, 32>}, {transform_indices = @transform_10, window_bounds = array<i64: 1, 8, 32>}]} {
    %c0 = arith.constant 0 : index
    %c0_0 = arith.constant 0 : index
    %c0_1 = arith.constant 0 : index
    %0 = vector.load %arg1[%c0, %c0_0, %c0_1] : memref<1x8x32xf32, #tpu.memory_space<vmem>>, vector<1x8x32xf32>
    %1 = vector.shape_cast %0 : vector<1x8x32xf32> to vector<8x32xf32>
    %c0_2 = arith.constant 0 : index
    %c0_3 = arith.constant 0 : index
    %c0_4 = arith.constant 0 : index
    %2 = vector.load %arg2[%c0_2, %c0_3, %c0_4] : memref<1x8x32xf32, #tpu.memory_space<vmem>>, vector<1x8x32xf32>
    %3 = vector.shape_cast %2 : vector<1x8x32xf32> to vector<8x32xf32>
    %c0_5 = arith.constant 0 : index
    %c0_6 = arith.constant 0 : index
    %4 = vector.load %arg3[%c0_5, %c0_6] : memref<32x32xf32, #tpu.memory_space<vmem>>, vector<32x32xf32>
    %cst = arith.constant dense<0.000000e+00> : vector<8x32xf32>
    %5 = tpu.matmul %1, %4, %cst {dimension_numbers = #tpu.dot_dimension_numbers<[1], [0], [0], [1], [0, 0, 1, 1], [], []>} : vector<8x32xf32>, vector<32x32xf32>, vector<8x32xf32> -> vector<8x32xf32>
    %c0_7 = arith.constant 0 : index
    %c0_8 = arith.constant 0 : index
    %6 = vector.load %arg4[%c0_7, %c0_8] : memref<1x32xf32, #tpu.memory_space<vmem>>, vector<1x32xf32>
    %7 = vector.broadcast %6 : vector<1x32xf32> to vector<8x32xf32>
    %8 = arith.addf %5, %7 : vector<8x32xf32>
    %c0_9 = arith.constant 0 : index
    %c0_10 = arith.constant 0 : index
    %9 = vector.load %arg5[%c0_9, %c0_10] : memref<32x64xf32, #tpu.memory_space<vmem>>, vector<32x64xf32>
    %cst_11 = arith.constant dense<0.000000e+00> : vector<8x64xf32>
    %10 = tpu.matmul %3, %9, %cst_11 {dimension_numbers = #tpu.dot_dimension_numbers<[1], [0], [0], [1], [0, 0, 1, 1], [], []>} : vector<8x32xf32>, vector<32x64xf32>, vector<8x64xf32> -> vector<8x64xf32>
    %c0_12 = arith.constant 0 : index
    %c0_13 = arith.constant 0 : index
    %11 = vector.load %arg6[%c0_12, %c0_13] : memref<1x64xf32, #tpu.memory_space<vmem>>, vector<1x64xf32>
    %12 = vector.broadcast %11 : vector<1x64xf32> to vector<8x64xf32>
    %13 = arith.addf %10, %12 : vector<8x64xf32>
    %14 = vector.extract_strided_slice %8 {offsets = [0, 0], sizes = [8, 8], strides = [1, 1]} : vector<8x32xf32> to vector<8x8xf32>
    %cst_14 = arith.constant 0.353553385 : f32
    %15 = vector.broadcast %cst_14 : f32 to vector<8x8xf32>
    %16 = arith.mulf %14, %15 : vector<8x8xf32>
    %17 = vector.extract_strided_slice %13 {offsets = [0, 0], sizes = [8, 8], strides = [1, 1]} : vector<8x64xf32> to vector<8x8xf32>
    %18 = vector.extract_strided_slice %13 {offsets = [0, 32], sizes = [8, 8], strides = [1, 1]} : vector<8x64xf32> to vector<8x8xf32>
    %cst_15 = arith.constant dense<0.000000e+00> : vector<8x8xf32>
    %19 = tpu.matmul %16, %17, %cst_15 {dimension_numbers = #tpu.dot_dimension_numbers<[1], [1], [0], [0], [0, 0, 1, 0], [], []>} : vector<8x8xf32>, vector<8x8xf32>, vector<8x8xf32> -> vector<8x8xf32>
    %cst_16 = arith.constant dense<0xFF800000> : vector<8xf32>
    %20 = vector.multi_reduction <maximumf>, %19, %cst_16 [1] : vector<8x8xf32> to vector<8xf32>
    %21 = vector.shape_cast %20 : vector<8xf32> to vector<8x1xf32>
    %22 = vector.broadcast %21 : vector<8x1xf32> to vector<8x8xf32>
    %23 = arith.subf %19, %22 : vector<8x8xf32>
    %24 = math.exp %23 : vector<8x8xf32>
    %cst_17 = arith.constant dense<0.000000e+00> : vector<8xf32>
    %25 = vector.multi_reduction <add>, %24, %cst_17 [1] : vector<8x8xf32> to vector<8xf32>
    %26 = vector.shape_cast %25 : vector<8xf32> to vector<8x1xf32>
    %27 = tpu.reciprocal %26 {approx = true} : vector<8x1xf32> -> vector<8x1xf32>
    %28 = vector.broadcast %27 : vector<8x1xf32> to vector<8x8xf32>
    %29 = arith.mulf %24, %28 : vector<8x8xf32>
    %cst_18 = arith.constant dense<0.000000e+00> : vector<8x8xf32>
    %30 = tpu.matmul %29, %18, %cst_18 {dimension_numbers = #tpu.dot_dimension_numbers<[1], [0], [0], [1], [0, 0, 1, 1], [], []>} : vector<8x8xf32>, vector<8x8xf32>, vector<8x8xf32> -> vector<8x8xf32>
    %c0_19 = arith.constant 0 : index
    %c0_20 = arith.constant 0 : index
    %31 = vector.load %arg12[%c0_19, %c0_20] : memref<8x32xf32, #tpu.memory_space<vmem>>, vector<8x8xf32>
    tpu.vector_store %arg12[%c0_19, %c0_20], %30 {strides = array<i32>} : memref<8x32xf32, #tpu.memory_space<vmem>>, vector<8x8xf32>,
    %32 = vector.extract_strided_slice %8 {offsets = [0, 8], sizes = [8, 8], strides = [1, 1]} : vector<8x32xf32> to vector<8x8xf32>
    %cst_21 = arith.constant 0.353553385 : f32
    %33 = vector.broadcast %cst_21 : f32 to vector<8x8xf32>
    %34 = arith.mulf %32, %33 : vector<8x8xf32>
    %35 = vector.extract_strided_slice %13 {offsets = [0, 8], sizes = [8, 8], strides = [1, 1]} : vector<8x64xf32> to vector<8x8xf32>
    %36 = vector.extract_strided_slice %13 {offsets = [0, 40], sizes = [8, 8], strides = [1, 1]} : vector<8x64xf32> to vector<8x8xf32>
    %cst_22 = arith.constant dense<0.000000e+00> : vector<8x8xf32>
    %37 = tpu.matmul %34, %35, %cst_22 {dimension_numbers = #tpu.dot_dimension_numbers<[1], [1], [0], [0], [0, 0, 1, 0], [], []>} : vector<8x8xf32>, vector<8x8xf32>, vector<8x8xf32> -> vector<8x8xf32>
    %cst_23 = arith.constant dense<0xFF800000> : vector<8xf32>
    %38 = vector.multi_reduction <maximumf>, %37, %cst_23 [1] : vector<8x8xf32> to vector<8xf32>
    %39 = vector.shape_cast %38 : vector<8xf32> to vector<8x1xf32>
    %40 = vector.broadcast %39 : vector<8x1xf32> to vector<8x8xf32>
    %41 = arith.subf %37, %40 : vector<8x8xf32>
    %42 = math.exp %41 : vector<8x8xf32>
    %cst_24 = arith.constant dense<0.000000e+00> : vector<8xf32>
    %43 = vector.multi_reduction <add>, %42, %cst_24 [1] : vector<8x8xf32> to vector<8xf32>
    %44 = vector.shape_cast %43 : vector<8xf32> to vector<8x1xf32>
    %45 = tpu.reciprocal %44 {approx = true} : vector<8x1xf32> -> vector<8x1xf32>
    %46 = vector.broadcast %45 : vector<8x1xf32> to vector<8x8xf32>
    %47 = arith.mulf %42, %46 : vector<8x8xf32>
    %cst_25 = arith.constant dense<0.000000e+00> : vector<8x8xf32>
    %48 = tpu.matmul %47, %36, %cst_25 {dimension_numbers = #tpu.dot_dimension_numbers<[1], [0], [0], [1], [0, 0, 1, 1], [], []>} : vector<8x8xf32>, vector<8x8xf32>, vector<8x8xf32> -> vector<8x8xf32>
    %c0_26 = arith.constant 0 : index
    %c8 = arith.constant 8 : index
    %49 = vector.load %arg12[%c0_26, %c8] : memref<8x32xf32, #tpu.memory_space<vmem>>, vector<8x8xf32>
    tpu.vector_store %arg12[%c0_26, %c8], %48 {strides = array<i32>} : memref<8x32xf32, #tpu.memory_space<vmem>>, vector<8x8xf32>,
    %50 = vector.extract_strided_slice %8 {offsets = [0, 16], sizes = [8, 8], strides = [1, 1]} : vector<8x32xf32> to vector<8x8xf32>
    %cst_27 = arith.constant 0.353553385 : f32
    %51 = vector.broadcast %cst_27 : f32 to vector<8x8xf32>
    %52 = arith.mulf %50, %51 : vector<8x8xf32>
    %53 = vector.extract_strided_slice %13 {offsets = [0, 16], sizes = [8, 8], strides = [1, 1]} : vector<8x64xf32> to vector<8x8xf32>
    %54 = vector.extract_strided_slice %13 {offsets = [0, 48], sizes = [8, 8], strides = [1, 1]} : vector<8x64xf32> to vector<8x8xf32>
    %cst_28 = arith.constant dense<0.000000e+00> : vector<8x8xf32>
    %55 = tpu.matmul %52, %53, %cst_28 {dimension_numbers = #tpu.dot_dimension_numbers<[1], [1], [0], [0], [0, 0, 1, 0], [], []>} : vector<8x8xf32>, vector<8x8xf32>, vector<8x8xf32> -> vector<8x8xf32>
    %cst_29 = arith.constant dense<0xFF800000> : vector<8xf32>
    %56 = vector.multi_reduction <maximumf>, %55, %cst_29 [1] : vector<8x8xf32> to vector<8xf32>
    %57 = vector.shape_cast %56 : vector<8xf32> to vector<8x1xf32>
    %58 = vector.broadcast %57 : vector<8x1xf32> to vector<8x8xf32>
    %59 = arith.subf %55, %58 : vector<8x8xf32>
    %60 = math.exp %59 : vector<8x8xf32>
    %cst_30 = arith.constant dense<0.000000e+00> : vector<8xf32>
    %61 = vector.multi_reduction <add>, %60, %cst_30 [1] : vector<8x8xf32> to vector<8xf32>
    %62 = vector.shape_cast %61 : vector<8xf32> to vector<8x1xf32>
    %63 = tpu.reciprocal %62 {approx = true} : vector<8x1xf32> -> vector<8x1xf32>
    %64 = vector.broadcast %63 : vector<8x1xf32> to vector<8x8xf32>
    %65 = arith.mulf %60, %64 : vector<8x8xf32>
    %cst_31 = arith.constant dense<0.000000e+00> : vector<8x8xf32>
    %66 = tpu.matmul %65, %54, %cst_31 {dimension_numbers = #tpu.dot_dimension_numbers<[1], [0], [0], [1], [0, 0, 1, 1], [], []>} : vector<8x8xf32>, vector<8x8xf32>, vector<8x8xf32> -> vector<8x8xf32>
    %c0_32 = arith.constant 0 : index
    %c16 = arith.constant 16 : index
    %67 = vector.load %arg12[%c0_32, %c16] : memref<8x32xf32, #tpu.memory_space<vmem>>, vector<8x8xf32>
    tpu.vector_store %arg12[%c0_32, %c16], %66 {strides = array<i32>} : memref<8x32xf32, #tpu.memory_space<vmem>>, vector<8x8xf32>,
    %68 = vector.extract_strided_slice %8 {offsets = [0, 24], sizes = [8, 8], strides = [1, 1]} : vector<8x32xf32> to vector<8x8xf32>
    %cst_33 = arith.constant 0.353553385 : f32
    %69 = vector.broadcast %cst_33 : f32 to vector<8x8xf32>
    %70 = arith.mulf %68, %69 : vector<8x8xf32>
    %71 = vector.extract_strided_slice %13 {offsets = [0, 24], sizes = [8, 8], strides = [1, 1]} : vector<8x64xf32> to vector<8x8xf32>
    %72 = vector.extract_strided_slice %13 {offsets = [0, 56], sizes = [8, 8], strides = [1, 1]} : vector<8x64xf32> to vector<8x8xf32>
    %cst_34 = arith.constant dense<0.000000e+00> : vector<8x8xf32>
    %73 = tpu.matmul %70, %71, %cst_34 {dimension_numbers = #tpu.dot_dimension_numbers<[1], [1], [0], [0], [0, 0, 1, 0], [], []>} : vector<8x8xf32>, vector<8x8xf32>, vector<8x8xf32> -> vector<8x8xf32>
    %cst_35 = arith.constant dense<0xFF800000> : vector<8xf32>
    %74 = vector.multi_reduction <maximumf>, %73, %cst_35 [1] : vector<8x8xf32> to vector<8xf32>
    %75 = vector.shape_cast %74 : vector<8xf32> to vector<8x1xf32>
    %76 = vector.broadcast %75 : vector<8x1xf32> to vector<8x8xf32>
    %77 = arith.subf %73, %76 : vector<8x8xf32>
    %78 = math.exp %77 : vector<8x8xf32>
    %cst_36 = arith.constant dense<0.000000e+00> : vector<8xf32>
    %79 = vector.multi_reduction <add>, %78, %cst_36 [1] : vector<8x8xf32> to vector<8xf32>
    %80 = vector.shape_cast %79 : vector<8xf32> to vector<8x1xf32>
    %81 = tpu.reciprocal %80 {approx = true} : vector<8x1xf32> -> vector<8x1xf32>
    %82 = vector.broadcast %81 : vector<8x1xf32> to vector<8x8xf32>
    %83 = arith.mulf %78, %82 : vector<8x8xf32>
    %cst_37 = arith.constant dense<0.000000e+00> : vector<8x8xf32>
    %84 = tpu.matmul %83, %72, %cst_37 {dimension_numbers = #tpu.dot_dimension_numbers<[1], [0], [0], [1], [0, 0, 1, 1], [], []>} : vector<8x8xf32>, vector<8x8xf32>, vector<8x8xf32> -> vector<8x8xf32>
    %c0_38 = arith.constant 0 : index
    %c24 = arith.constant 24 : index
    %85 = vector.load %arg12[%c0_38, %c24] : memref<8x32xf32, #tpu.memory_space<vmem>>, vector<8x8xf32>
    tpu.vector_store %arg12[%c0_38, %c24], %84 {strides = array<i32>} : memref<8x32xf32, #tpu.memory_space<vmem>>, vector<8x8xf32>,
    %c0_39 = arith.constant 0 : index
    %c0_40 = arith.constant 0 : index
    %86 = vector.load %arg12[%c0_39, %c0_40] : memref<8x32xf32, #tpu.memory_space<vmem>>, vector<8x32xf32>
    %c0_41 = arith.constant 0 : index
    %c0_42 = arith.constant 0 : index
    %87 = vector.load %arg7[%c0_41, %c0_42] : memref<32x32xf32, #tpu.memory_space<vmem>>, vector<32x32xf32>
    %cst_43 = arith.constant dense<0.000000e+00> : vector<8x32xf32>
    %88 = tpu.matmul %86, %87, %cst_43 {dimension_numbers = #tpu.dot_dimension_numbers<[1], [0], [0], [1], [0, 0, 1, 1], [], []>} : vector<8x32xf32>, vector<32x32xf32>, vector<8x32xf32> -> vector<8x32xf32>
    %c0_44 = arith.constant 0 : index
    %c0_45 = arith.constant 0 : index
    %89 = vector.load %arg8[%c0_44, %c0_45] : memref<1x32xf32, #tpu.memory_space<vmem>>, vector<1x32xf32>
    %90 = vector.broadcast %89 : vector<1x32xf32> to vector<8x32xf32>
    %91 = arith.addf %88, %90 : vector<8x32xf32>
    %92 = arith.addf %1, %91 : vector<8x32xf32>
    %c0_46 = arith.constant 0 : index
    %c0_47 = arith.constant 0 : index
    %93 = vector.load %arg9[%c0_46, %c0_47] : memref<1x32xf32, #tpu.memory_space<vmem>>, vector<1x32xf32>
    %c0_48 = arith.constant 0 : index
    %c0_49 = arith.constant 0 : index
    %94 = vector.load %arg10[%c0_48, %c0_49] : memref<1x32xf32, #tpu.memory_space<vmem>>, vector<1x32xf32>
    %cst_50 = arith.constant dense<0.000000e+00> : vector<8xf32>
    %95 = vector.multi_reduction <add>, %92, %cst_50 [1] : vector<8x32xf32> to vector<8xf32>
    %96 = vector.shape_cast %95 : vector<8xf32> to vector<8x1xf32>
    %cst_51 = arith.constant 3.200000e+01 : f32
    %97 = vector.broadcast %cst_51 : f32 to vector<8x1xf32>
    %98 = arith.divf %96, %97 : vector<8x1xf32>
    %99 = vector.broadcast %98 : vector<8x1xf32> to vector<8x32xf32>
    %100 = arith.subf %92, %99 : vector<8x32xf32>
    %101 = arith.mulf %100, %100 : vector<8x32xf32>
    %cst_52 = arith.constant dense<0.000000e+00> : vector<8xf32>
    %102 = vector.multi_reduction <add>, %101, %cst_52 [1] : vector<8x32xf32> to vector<8xf32>
    %103 = vector.shape_cast %102 : vector<8xf32> to vector<8x1xf32>
    %cst_53 = arith.constant 3.200000e+01 : f32
    %104 = vector.broadcast %cst_53 : f32 to vector<8x1xf32>
    %105 = arith.divf %103, %104 : vector<8x1xf32>
    %cst_54 = arith.constant 9.99999974E-6 : f32
    %106 = vector.broadcast %cst_54 : f32 to vector<8x1xf32>
    %107 = arith.addf %105, %106 : vector<8x1xf32>
    %108 = math.rsqrt %107 : vector<8x1xf32>
    %109 = vector.broadcast %108 : vector<8x1xf32> to vector<8x32xf32>
    %110 = arith.mulf %100, %109 : vector<8x32xf32>
    %111 = vector.broadcast %93 : vector<1x32xf32> to vector<8x32xf32>
    %112 = arith.mulf %110, %111 : vector<8x32xf32>
    %113 = vector.broadcast %94 : vector<1x32xf32> to vector<8x32xf32>
    %114 = arith.addf %112, %113 : vector<8x32xf32>
    %c0_55 = arith.constant 0 : index
    %c0_56 = arith.constant 0 : index
    %c0_57 = arith.constant 0 : index
    %115 = vector.load %arg11[%c0_55, %c0_56, %c0_57] : memref<1x8x32xf32, #tpu.memory_space<vmem>>, vector<1x8x32xf32>
    %116 = vector.shape_cast %115 : vector<1x8x32xf32> to vector<8x32xf32>
    %117 = vector.shape_cast %114 : vector<8x32xf32> to vector<1x8x32xf32>
    tpu.vector_store %arg11[%c0_55, %c0_56, %c0_57], %117 {strides = array<i32>} : memref<1x8x32xf32, #tpu.memory_space<vmem>>, vector<1x8x32xf32>,
    return
  }
  func.func @transform_0(%arg0: i32) -> (i32, i32, i32) {
    %c0_i32 = arith.constant 0 : i32
    %c0_i32_0 = arith.constant 0 : i32
    %c0_i32_1 = arith.constant 0 : i32
    return %arg0, %c0_i32, %c0_i32_0 : i32, i32, i32
  }
  func.func @transform_1(%arg0: i32) -> (i32, i32, i32) {
    %c0_i32 = arith.constant 0 : i32
    %c0_i32_0 = arith.constant 0 : i32
    %c0_i32_1 = arith.constant 0 : i32
    return %arg0, %c0_i32, %c0_i32_0 : i32, i32, i32
  }
  func.func @transform_2(%arg0: i32) -> (i32, i32) {
    %c0_i32 = arith.constant 0 : i32
    %c0_i32_0 = arith.constant 0 : i32
    %c0_i32_1 = arith.constant 0 : i32
    return %c0_i32, %c0_i32_0 : i32, i32
  }
  func.func @transform_3(%arg0: i32) -> (i32, i32) {
    %c0_i32 = arith.constant 0 : i32
    %c0_i32_0 = arith.constant 0 : i32
    %c0_i32_1 = arith.constant 0 : i32
    return %c0_i32, %c0_i32_0 : i32, i32
  }
  func.func @transform_4(%arg0: i32) -> (i32, i32) {
    %c0_i32 = arith.constant 0 : i32
    %c0_i32_0 = arith.constant 0 : i32
    %c0_i32_1 = arith.constant 0 : i32
    return %c0_i32, %c0_i32_0 : i32, i32
  }
  func.func @transform_5(%arg0: i32) -> (i32, i32) {
    %c0_i32 = arith.constant 0 : i32
    %c0_i32_0 = arith.constant 0 : i32
    %c0_i32_1 = arith.constant 0 : i32
    return %c0_i32, %c0_i32_0 : i32, i32
  }
  func.func @transform_6(%arg0: i32) -> (i32, i32) {
    %c0_i32 = arith.constant 0 : i32
    %c0_i32_0 = arith.constant 0 : i32
    %c0_i32_1 = arith.constant 0 : i32
    return %c0_i32, %c0_i32_0 : i32, i32
  }
  func.func @transform_7(%arg0: i32) -> (i32, i32) {
    %c0_i32 = arith.constant 0 : i32
    %c0_i32_0 = arith.constant 0 : i32
    %c0_i32_1 = arith.constant 0 : i32
    return %c0_i32, %c0_i32_0 : i32, i32
  }
  func.func @transform_8(%arg0: i32) -> (i32, i32) {
    %c0_i32 = arith.constant 0 : i32
    %c0_i32_0 = arith.constant 0 : i32
    %c0_i32_1 = arith.constant 0 : i32
    return %c0_i32, %c0_i32_0 : i32, i32
  }
  func.func @transform_9(%arg0: i32) -> (i32, i32) {
    %c0_i32 = arith.constant 0 : i32
    %c0_i32_0 = arith.constant 0 : i32
    %c0_i32_1 = arith.constant 0 : i32
    return %c0_i32, %c0_i32_0 : i32, i32
  }
  func.func @transform_10(%arg0: i32) -> (i32, i32, i32) {
    %c0_i32 = arith.constant 0 : i32
    %c0_i32_0 = arith.constant 0 : i32
    %c0_i32_1 = arith.constant 0 : i32
    return %arg0, %c0_i32, %c0_i32_0 : i32, i32, i32
  }
}

module attributes {stable_mosaic.version = 11 : i64} {
  func.func @_linear_kernel(%arg0: i32, %arg1: i32, %arg2: i32, %arg3: memref<8x32xf32, #tpu.memory_space<vmem>>, %arg4: memref<32x64xf32, #tpu.memory_space<vmem>>, %arg5: memref<1x64xf32, #tpu.memory_space<vmem>>, %arg6: memref<8x64xf32, #tpu.memory_space<vmem>>, %arg7: memref<8x64xf32, #tpu.memory_space<vmem>>) attributes {dimension_semantics = [#tpu.dimension_semantics<parallel>, #tpu.dimension_semantics<parallel>, #tpu.dimension_semantics<arbitrary>], iteration_bounds = array<i64: 2, 1, 1>, scalar_prefetch = 0 : i64, scratch_operands = 1 : i64, tpu.core_type = #tpu.core_type<tc>, window_params = [{transform_indices = @transform_0, window_bounds = array<i64: 8, 32>}, {transform_indices = @transform_1, window_bounds = array<i64: 32, 64>}, {transform_indices = @transform_2, window_bounds = array<i64: 1, 64>}, {transform_indices = @transform_3, window_bounds = array<i64: 8, 64>}]} {
    %c0_i32 = arith.constant 0 : i32
    %0 = arith.cmpi eq, %arg2, %c0_i32 : i32
    %1 = arith.extui %0 : i1 to i32
    %c0_i32_0 = arith.constant 0 : i32
    %2 = arith.cmpi ne, %1, %c0_i32_0 : i32
    scf.if %2 {
      %cst_10 = arith.constant 0.000000e+00 : f32
      %12 = vector.broadcast %cst_10 : f32 to vector<8x64xf32>
      %c0_11 = arith.constant 0 : index
      %c0_12 = arith.constant 0 : index
      %13 = vector.load %arg7[%c0_11, %c0_12] : memref<8x64xf32, #tpu.memory_space<vmem>>, vector<8x64xf32>
      tpu.vector_store %arg7[%c0_11, %c0_12], %12 {strides = array<i32>} : memref<8x64xf32, #tpu.memory_space<vmem>>, vector<8x64xf32>,
    } else {
    }
    %c0 = arith.constant 0 : index
    %c0_1 = arith.constant 0 : index
    %3 = vector.load %arg7[%c0, %c0_1] : memref<8x64xf32, #tpu.memory_space<vmem>>, vector<8x64xf32>
    %c0_2 = arith.constant 0 : index
    %c0_3 = arith.constant 0 : index
    %4 = vector.load %arg3[%c0_2, %c0_3] : memref<8x32xf32, #tpu.memory_space<vmem>>, vector<8x32xf32>
    %c0_4 = arith.constant 0 : index
    %c0_5 = arith.constant 0 : index
    %5 = vector.load %arg4[%c0_4, %c0_5] : memref<32x64xf32, #tpu.memory_space<vmem>>, vector<32x64xf32>
    %cst = arith.constant dense<0.000000e+00> : vector<8x64xf32>
    %6 = tpu.matmul %4, %5, %cst {dimension_numbers = #tpu.dot_dimension_numbers<[1], [0], [0], [1], [0, 0, 1, 1], [], []>} : vector<8x32xf32>, vector<32x64xf32>, vector<8x64xf32> -> vector<8x64xf32>
    %7 = arith.addf %3, %6 : vector<8x64xf32>
    %c0_6 = arith.constant 0 : index
    %c0_7 = arith.constant 0 : index
    %8 = vector.load %arg7[%c0_6, %c0_7] : memref<8x64xf32, #tpu.memory_space<vmem>>, vector<8x64xf32>
    tpu.vector_store %arg7[%c0_6, %c0_7], %7 {strides = array<i32>} : memref<8x64xf32, #tpu.memory_space<vmem>>, vector<8x64xf32>,
    %c0_i32_8 = arith.constant 0 : i32
    %9 = arith.cmpi eq, %arg2, %c0_i32_8 : i32
    %10 = arith.extui %9 : i1 to i32
    %c0_i32_9 = arith.constant 0 : i32
    %11 = arith.cmpi ne, %10, %c0_i32_9 : i32
    scf.if %11 {
      %c0_10 = arith.constant 0 : index
      %c0_11 = arith.constant 0 : index
      %12 = vector.load %arg7[%c0_10, %c0_11] : memref<8x64xf32, #tpu.memory_space<vmem>>, vector<8x64xf32>
      %c0_12 = arith.constant 0 : index
      %c0_13 = arith.constant 0 : index
      %13 = vector.load %arg5[%c0_12, %c0_13] : memref<1x64xf32, #tpu.memory_space<vmem>>, vector<1x64xf32>
      %14 = vector.broadcast %13 : vector<1x64xf32> to vector<8x64xf32>
      %15 = arith.addf %12, %14 : vector<8x64xf32>
      %c0_14 = arith.constant 0 : index
      %c0_15 = arith.constant 0 : index
      %16 = vector.load %arg6[%c0_14, %c0_15] : memref<8x64xf32, #tpu.memory_space<vmem>>, vector<8x64xf32>
      tpu.vector_store %arg6[%c0_14, %c0_15], %15 {strides = array<i32>} : memref<8x64xf32, #tpu.memory_space<vmem>>, vector<8x64xf32>,
    } else {
    }
    return
  }
  func.func @transform_0(%arg0: i32, %arg1: i32, %arg2: i32) -> (i32, i32) {
    %c0_i32 = arith.constant 0 : i32
    return %arg0, %arg2 : i32, i32
  }
  func.func @transform_1(%arg0: i32, %arg1: i32, %arg2: i32) -> (i32, i32) {
    %c0_i32 = arith.constant 0 : i32
    return %arg2, %arg1 : i32, i32
  }
  func.func @transform_2(%arg0: i32, %arg1: i32, %arg2: i32) -> (i32, i32) {
    %c0_i32 = arith.constant 0 : i32
    %c0_i32_0 = arith.constant 0 : i32
    return %c0_i32, %arg1 : i32, i32
  }
  func.func @transform_3(%arg0: i32, %arg1: i32, %arg2: i32) -> (i32, i32) {
    %c0_i32 = arith.constant 0 : i32
    return %arg0, %arg1 : i32, i32
  }
}

</mosaic_0001>

<llo_original>
// kernel: decoder_forward.9
$region0: #{decoder_forward.9}
  #allocation0 [shape = 'u32[]', space=smem, size = 0x4, offset = 0x4, fixed_abs, tag = 'smem constant byte address 0x4 - core index']
  #allocation1 [shape = 'u32[72,128]{1,0:T(1,128)}', space=vmem, size = 0x9000, scoped, tag = 'internal scratch']
  %s0 = inlined_call_operand.vmem [shape: f32[16,32], index: 0, kind: input, shape index: {}]
  %s1 = inlined_call_operand.vmem [shape: f32[32,64], index: 1, kind: input, shape index: {}]
  %s2 = inlined_call_operand.vmem [shape: f32[1,64], index: 2, kind: input, shape index: {}]
  %s3 = inlined_call_operand.vmem [shape: f32[64,32], index: 3, kind: input, shape index: {}]
  %s4 = inlined_call_operand.vmem [shape: f32[1,32], index: 4, kind: input, shape index: {}]
  %s5 = inlined_call_operand.vmem [shape: f32[1,32], index: 5, kind: input, shape index: {}]
  %s6 = inlined_call_operand.vmem [shape: f32[1,32], index: 6, kind: input, shape index: {}]
  %s7 = inlined_call_operand.vmem [shape: f32[16,32], index: 7, kind: output, shape index: {}]
  %s8 = sld [smem:[#allocation0]]
  $region61: #{decoder_forward.9} parent=0
    _
  %s10 = ssub.s32 1, %s8
  %s11 = scalar_select 0, %s10, %s8
  loop: start=0, step=1, limit=4
  $region2: #{decoder_forward.9} parent=0 // loop_pre_header
    _
  $region3: #{decoder_forward.9} parent=0 // loop_header
    %s13 = sphi 0, %s17
    %p14 = scmp.ge.s32.totalorder %s13, 4
    %s23 = sphi 0, %s25
    %s26 = sphi 0, %s23
    %s27 = sphi 0, %s26
    %s43 = sphi 0, %s27
    %s47 = sphi 0, %s47
    %s49 = sphi 0, %s47
    %s50 = sphi 0, %s49
    %s64 = sphi 0, %s50
    %s68 = sphi 0, %s68
    %s70 = sphi 0, %s68
    %s71 = sphi 0, %s70
    %s85 = sphi 0, %s71
    %s89 = sphi 0, %s89
    %s91 = sphi 0, %s89
    %s92 = sphi 0, %s91
    %s106 = sphi 0, %s92
    %s110 = sphi 0, %s110
    %s112 = sphi 0, %s110
    %s113 = sphi 0, %s112
    %s127 = sphi 0, %s113
    %s131 = sphi 0, %s131
    %s133 = sphi 0, %s131
    %s134 = sphi 0, %s133
    %s148 = sphi 0, %s134
    %s152 = sphi 0, %s152
    %s154 = sphi 0, %s152
    %s155 = sphi 0, %s154
    %s169 = sphi 0, %s155
    %s175 = sphi 0, %s177
    %s178 = sphi 0, %s175
    %s179 = sphi 0, %s178
    %s195 = sphi 0, %s179
  $region4: #{decoder_forward.9} parent=0 // loop_header_branch
    %16 = sbr.rel (%p14) target = $region8
  $region5: #{decoder_forward.9} parent=0 // loop_body
    %s18 = ssub.s32 %s13, 1
    %s19 = ssub.s32 %s13, 2
    %s20 = sadd.s32 %s13, 1
    %s21 = ssub.s32 %s13, %s20
    %p22 = scmp.eq.s32.totalorder %s21, 0
    %s24 = sadd.s32 %s23, 1
    %s25 = scalar_select %p22, %s23, %s24
    %p28 = pneg %p22
    %p29 = scmp.eq.s32.totalorder %s13, 1
    %p30 = por %p28, %p29
    %p31 = scmp.ne.s32.totalorder %s23, %s26
    %p32 = scmp.eq.s32.totalorder %s13, 0
    %p33 = por %p31, %p32
    %p34 = scmp.ne.s32.totalorder %s23, %s26
    %p35 = scmp.eq.s32.totalorder %s18, 1
    %p36 = por %p34, %p35
    %p37 = scmp.ne.s32.totalorder %s26, %s27
    %p38 = scmp.eq.s32.totalorder %s18, 0
    %p39 = por %p37, %p38
    %p40 = scmp.ne.s32.totalorder %s26, %s27
    %p41 = scmp.eq.s32.totalorder %s19, 1
    %p42 = por %p40, %p41
    %p44 = scmp.ne.s32.totalorder %s27, %s43
    %p45 = scmp.eq.s32.totalorder %s19, 0
    %p46 = por %p44, %p45
    %s48 = sadd.s32 %s47, 1
    %p51 = scmp.eq.s32.totalorder %s13, 1
    %p52 = scmp.ne.s32.totalorder %s47, %s49
    %p53 = scmp.eq.s32.totalorder %s13, 0
    %p54 = por %p52, %p53
    %p55 = scmp.ne.s32.totalorder %s47, %s49
    %p56 = scmp.eq.s32.totalorder %s18, 1
    %p57 = por %p55, %p56
    %p58 = scmp.ne.s32.totalorder %s49, %s50
    %p59 = scmp.eq.s32.totalorder %s18, 0
    %p60 = por %p58, %p59
    %p61 = scmp.ne.s32.totalorder %s49, %s50
    %p62 = scmp.eq.s32.totalorder %s19, 1
    %p63 = por %p61, %p62
    %p65 = scmp.ne.s32.totalorder %s50, %s64
    %p66 = scmp.eq.s32.totalorder %s19, 0
    %p67 = por %p65, %p66
    %s69 = sadd.s32 %s68, 1
    %p72 = scmp.eq.s32.totalorder %s13, 1
    %p73 = scmp.ne.s32.totalorder %s68, %s70
    %p74 = scmp.eq.s32.totalorder %s13, 0
    %p75 = por %p73, %p74
    %p76 = scmp.ne.s32.totalorder %s68, %s70
    %p77 = scmp.eq.s32.totalorder %s18, 1
    %p78 = por %p76, %p77
    %p79 = scmp.ne.s32.totalorder %s70, %s71
    %p80 = scmp.eq.s32.totalorder %s18, 0
    %p81 = por %p79, %p80
    %p82 = scmp.ne.s32.totalorder %s70, %s71
    %p83 = scmp.eq.s32.totalorder %s19, 1
    %p84 = por %p82, %p83
    %p86 = scmp.ne.s32.totalorder %s71, %s85
    %p87 = scmp.eq.s32.totalorder %s19, 0
    %p88 = por %p86, %p87
    %s90 = sadd.s32 %s89, 1
    %p93 = scmp.eq.s32.totalorder %s13, 1
    %p94 = scmp.ne.s32.totalorder %s89, %s91
    %p95 = scmp.eq.s32.totalorder %s13, 0
    %p96 = por %p94, %p95
    %p97 = scmp.ne.s32.totalorder %s89, %s91
    %p98 = scmp.eq.s32.totalorder %s18, 1
    %p99 = por %p97, %p98
    %p100 = scmp.ne.s32.totalorder %s91, %s92
    %p101 = scmp.eq.s32.totalorder %s18, 0
    %p102 = por %p100, %p101
    %p103 = scmp.ne.s32.totalorder %s91, %s92
    %p104 = scmp.eq.s32.totalorder %s19, 1
    %p105 = por %p103, %p104
    %p107 = scmp.ne.s32.totalorder %s92, %s106
    %p108 = scmp.eq.s32.totalorder %s19, 0
    %p109 = por %p107, %p108
    %s111 = sadd.s32 %s110, 1
    %p114 = scmp.eq.s32.totalorder %s13, 1
    %p115 = scmp.ne.s32.totalorder %s110, %s112
    %p116 = scmp.eq.s32.totalorder %s13, 0
    %p117 = por %p115, %p116
    %p118 = scmp.ne.s32.totalorder %s110, %s112
    %p119 = scmp.eq.s32.totalorder %s18, 1
    %p120 = por %p118, %p119
    %p121 = scmp.ne.s32.totalorder %s112, %s113
    %p122 = scmp.eq.s32.totalorder %s18, 0
    %p123 = por %p121, %p122
    %p124 = scmp.ne.s32.totalorder %s112, %s113
    %p125 = scmp.eq.s32.totalorder %s19, 1
    %p126 = por %p124, %p125
    %p128 = scmp.ne.s32.totalorder %s113, %s127
    %p129 = scmp.eq.s32.totalorder %s19, 0
    %p130 = por %p128, %p129
    %s132 = sadd.s32 %s131, 1
    %p135 = scmp.eq.s32.totalorder %s13, 1
    %p136 = scmp.ne.s32.totalorder %s131, %s133
    %p137 = scmp.eq.s32.totalorder %s13, 0
    %p138 = por %p136, %p137
    %p139 = scmp.ne.s32.totalorder %s131, %s133
    %p140 = scmp.eq.s32.totalorder %s18, 1
    %p141 = por %p139, %p140
    %p142 = scmp.ne.s32.totalorder %s133, %s134
    %p143 = scmp.eq.s32.totalorder %s18, 0
    %p144 = por %p142, %p143
    %p145 = scmp.ne.s32.totalorder %s133, %s134
    %p146 = scmp.eq.s32.totalorder %s19, 1
    %p147 = por %p145, %p146
    %p149 = scmp.ne.s32.totalorder %s134, %s148
    %p150 = scmp.eq.s32.totalorder %s19, 0
    %p151 = por %p149, %p150
    %s153 = sadd.s32 %s152, 1
    %p156 = scmp.eq.s32.totalorder %s13, 1
    %p157 = scmp.ne.s32.totalorder %s152, %s154
    %p158 = scmp.eq.s32.totalorder %s13, 0
    %p159 = por %p157, %p158
    %p160 = scmp.ne.s32.totalorder %s152, %s154
    %p161 = scmp.eq.s32.totalorder %s18, 1
    %p162 = por %p160, %p161
    %p163 = scmp.ne.s32.totalorder %s154, %s155
    %p164 = scmp.eq.s32.totalorder %s18, 0
    %p165 = por %p163, %p164
    %p166 = scmp.ne.s32.totalorder %s154, %s155
    %p167 = scmp.eq.s32.totalorder %s19, 1
    %p168 = por %p166, %p167
    %p170 = scmp.ne.s32.totalorder %s155, %s169
    %p171 = scmp.eq.s32.totalorder %s19, 0
    %p172 = por %p170, %p171
    %s173 = ssub.s32 %s13, %s20
    %p174 = scmp.eq.s32.totalorder %s173, 0
    %s176 = sadd.s32 %s175, 1
    %s177 = scalar_select %p174, %s175, %s176
    %p180 = pneg %p174
    %p181 = scmp.eq.s32.totalorder %s13, 1
    %p182 = por %p180, %p181
    %p183 = scmp.ne.s32.totalorder %s175, %s178
    %p184 = scmp.eq.s32.totalorder %s13, 0
    %p185 = por %p183, %p184
    %p186 = scmp.ne.s32.totalorder %s175, %s178
    %p187 = scmp.eq.s32.totalorder %s18, 1
    %p188 = por %p186, %p187
    %p189 = scmp.ne.s32.totalorder %s178, %s179
    %p190 = scmp.eq.s32.totalorder %s18, 0
    %p191 = por %p189, %p190
    %p192 = scmp.ne.s32.totalorder %s178, %s179
    %p193 = scmp.eq.s32.totalorder %s19, 1
    %p194 = por %p192, %p193
    %p196 = scmp.ne.s32.totalorder %s179, %s195
    %p197 = scmp.eq.s32.totalorder %s19, 0
    %p198 = por %p196, %p197
    %p199 = scmp.le.s32.totalorder 1, %s13
    %p200 = scmp.lt.s32.totalorder %s13, 3
    %p201 = pnand %p199, %p200
    %p202 = pneg %p201
    // Predicated region
    $region9: #{decoder_forward.9} parent=5 // pred_check
      _
    $region10: #{decoder_forward.9} parent=5 // pred_check_branch
      %204 = sbr.rel (%p201) target = $region12
    $region11: #{decoder_forward.9} parent=5 // pred_region
      %s205 = ssub.s32 %s13, 1
      // Predicated region
      $region13: #{decoder_forward.9} parent=11 // pred_check
        %p206 = pneg %p60
      $region14: #{decoder_forward.9} parent=11 // pred_check_branch
        %208 = sbr.rel (%p206) target = $region16
      $region15: #{decoder_forward.9} parent=11 // pred_region
        _
      $region16: #{decoder_forward.9} parent=11 // pred_fallthru
        _
      // Predicated region
      $region17: #{decoder_forward.9} parent=11 // pred_check
        %p209 = pneg %p81
      $region18: #{decoder_forward.9} parent=11 // pred_check_branch
        %211 = sbr.rel (%p209) target = $region20
      $region19: #{decoder_forward.9} parent=11 // pred_region
        _
      $region20: #{decoder_forward.9} parent=11 // pred_fallthru
        _
      // Predicated region
      $region21: #{decoder_forward.9} parent=11 // pred_check
        %p212 = pneg %p102
      $region22: #{decoder_forward.9} parent=11 // pred_check_branch
        %214 = sbr.rel (%p212) target = $region24
      $region23: #{decoder_forward.9} parent=11 // pred_region
        _
      $region24: #{decoder_forward.9} parent=11 // pred_fallthru
        _
      // Predicated region
      $region25: #{decoder_forward.9} parent=11 // pred_check
        %p215 = pneg %p123
      $region26: #{decoder_forward.9} parent=11 // pred_check_branch
        %217 = sbr.rel (%p215) target = $region28
      $region27: #{decoder_forward.9} parent=11 // pred_region
        _
      $region28: #{decoder_forward.9} parent=11 // pred_fallthru
        _
      // Predicated region
      $region29: #{decoder_forward.9} parent=11 // pred_check
        %p218 = pneg %p144
      $region30: #{decoder_forward.9} parent=11 // pred_check_branch
        %220 = sbr.rel (%p218) target = $region32
      $region31: #{decoder_forward.9} parent=11 // pred_region
        _
      $region32: #{decoder_forward.9} parent=11 // pred_fallthru
        _
      // Predicated region
      $region33: #{decoder_forward.9} parent=11 // pred_check
        %p221 = pneg %p165
      $region34: #{decoder_forward.9} parent=11 // pred_check_branch
        %223 = sbr.rel (%p221) target = $region36
      $region35: #{decoder_forward.9} parent=11 // pred_region
        _
      $region36: #{decoder_forward.9} parent=11 // pred_fallthru
        _
    $region12: #{decoder_forward.9} parent=5 // pred_fallthru
      _
    %p224 = scmp.lt.s32.totalorder %s13, 2
    // Predicated region
    $region37: #{decoder_forward.9} parent=5 // pred_check
      %p225 = pneg %p224
    $region38: #{decoder_forward.9} parent=5 // pred_check_branch
      %227 = sbr.rel (%p225) target = $region40
    $region39: #{decoder_forward.9} parent=5 // pred_region
      // Predicated region
      $region41: #{decoder_forward.9} parent=39 // pred_check
        %p228 = pneg %p33
      $region42: #{decoder_forward.9} parent=39 // pred_check_branch
        %230 = sbr.rel (%p228) target = $region44
      $region43: #{decoder_forward.9} parent=39 // pred_region
        %p231 = scmp.lt.s32.totalorder %s13, 1
        %s232 = scalar_select %p231, %s13, 1
        %s233 = smul.addr %s232, 8
        %s234 = scalar_lea.vmem %s0, %s233
      $region44: #{decoder_forward.9} parent=39 // pred_fallthru
        _
    $region40: #{decoder_forward.9} parent=5 // pred_fallthru
      _
    %p235 = scmp.le.s32.totalorder 1, %s13
    %p236 = scmp.lt.s32.totalorder %s13, 3
    %p237 = pnand %p235, %p236
    %p238 = pneg %p237
    // Predicated region
    $region45: #{decoder_forward.9} parent=5 // pred_check
      _
    $region46: #{decoder_forward.9} parent=5 // pred_check_branch
      %240 = sbr.rel (%p237) target = $region48
    $region47: #{decoder_forward.9} parent=5 // pred_region
      %s241 = ssub.s32 %s13, 1
      %p242 = scmp.lt.s32.totalorder %s18, 1
      %s243 = scalar_select %p242, %s18, 1
      %s244 = smul.addr %s243, 8
      %s245 = scalar_lea.vmem %s0, %s244
      %p246 = pneg %p39
      %p247 = pneg %p36
      %p248 = pneg %p60
      %p249 = pneg %p57
      %p250 = pneg %p81
      %p251 = pneg %p78
      %p252 = pneg %p102
      %p253 = pneg %p99
      %p254 = pneg %p123
      %p255 = pneg %p120
      %p256 = pneg %p144
      %p257 = pneg %p141
      %p258 = pneg %p165
      %p259 = pneg %p162
      %p260 = pneg %p191
      %p261 = pneg %p188
      %p262 = scmp.lt.s32.totalorder %s18, 1
      %s263 = scalar_select %p262, %s18, 1
      %s264 = smul.addr %s263, 8
      %s265 = scalar_lea.vmem %s7, %s264
      %p266 = scmp.lt.s32.totalorder %s18, 1
      %s267 = scalar_select %p266, %s18, 1
      %s268 = smul.addr %s267, 8
      %s269 = scalar_lea.vmem %s0, %s268
      %p270 = scmp.lt.s32.totalorder %s18, 1
      %s271 = scalar_select %p270, %s18, 1
      %s272 = smul.addr %s271, 8
      %s273 = scalar_lea.vmem %s7, %s272
      %v274 = vld [vmem:[%s269] sm:$0xff]
      %v275 = vld [vmem:[%s1] sm:$0xff]
      %v276 = vld [vmem:[%s1 + $0x8] sm:$0xff]
      %v277 = vld [vmem:[%s1 + $0x10] sm:$0xff]
      %v278 = vld [vmem:[%s1 + $0x18] sm:$0xff]
      %v279 = vld [vmem:[%s2] sm:$0x1]
      %v281 = vperm.slane %v279, 0
      %vm283 = vcmask 261120
      %v285 = vsel %vm283, %v274, 0
      %287 = vmatpush.msra.mxu0 0.0
      %288 = vmatpush.msra.mxu0 0.0
      %289 = vmatpush.msra.mxu0 0.0
      %290 = vmatpush.msra.mxu0 0.0
      %291 = vmatpush.msra.mxu0 0.0
      %292 = vmatpush.msra.mxu0 0.0
      %293 = vmatpush.msra.mxu0 0.0
      %294 = vmatpush.msra.mxu0 0.0
      %295 = vmatpush.msra.mxu0 0.0
      %296 = vmatpush.msra.mxu0 0.0
      %297 = vmatpush.msra.mxu0 0.0
      %298 = vmatpush.msra.mxu0 0.0
      %299 = vmatpush.msra.mxu0 %v278
      %300 = vmatpush.msra.mxu0 %v277
      %301 = vmatpush.msra.mxu0 %v276
      %302 = vmatpush.msra.mxu0 %v275
      %303 = vmatmul.f32.gmra.mxu0 %v285
      %v304 = vpop.f32.mrf.mxu0
      %v305 = vadd.f32 %v281, %v304
      %306 = vdwg.mxu0
      %v307 = vmax.f32 %v305, 0.0
      %v308 = vld [vmem:[%s3] sm:$0xff]
      %v309 = vld [vmem:[%s3 + $0x8] sm:$0xff]
      %v310 = vld [vmem:[%s3 + $0x10] sm:$0xff]
      %v311 = vld [vmem:[%s3 + $0x18] sm:$0xff]
      %v312 = vld [vmem:[%s3 + $0x20] sm:$0xff]
      %v313 = vld [vmem:[%s3 + $0x28] sm:$0xff]
      %v314 = vld [vmem:[%s3 + $0x30] sm:$0xff]
      %v315 = vld [vmem:[%s3 + $0x38] sm:$0xff]
      %v316 = vld [vmem:[%s4] sm:$0x1]
      %v318 = vperm.slane %v316, 0
      %vm320 = vcmask 523264
      %v322 = vsel %vm320, %v307, 0
      %324 = vmatpush.msra.mxu0 0.0
      %325 = vmatpush.msra.mxu0 0.0
      %326 = vmatpush.msra.mxu0 0.0
      %327 = vmatpush.msra.mxu0 0.0
      %328 = vmatpush.msra.mxu0 0.0
      %329 = vmatpush.msra.mxu0 0.0
      %330 = vmatpush.msra.mxu0 0.0
      %331 = vmatpush.msra.mxu0 0.0
      %332 = vmatpush.msra.mxu0 %v315
      %333 = vmatpush.msra.mxu0 %v314
      %334 = vmatpush.msra.mxu0 %v313
      %335 = vmatpush.msra.mxu0 %v312
      %336 = vmatpush.msra.mxu0 %v311
      %337 = vmatpush.msra.mxu0 %v310
      %338 = vmatpush.msra.mxu0 %v309
      %339 = vmatpush.msra.mxu0 %v308
      %340 = vmatmul.f32.gmra.mxu0 %v322
      %v341 = vpop.f32.mrf.mxu0
      %v342 = vadd.f32 %v318, %v341
      %343 = vdwg.mxu0
      %v344 = vadd.f32 %v274, %v342
      %v345 = vld [vmem:[%s5] sm:$0x1]
      %v346 = vld [vmem:[%s6] sm:$0x1]
      %v347 = vsel %vm283, %v344, 0.0
      %348 = vadd.xlane.f32.xlu0 %v347
      %v349 = vpop.xlane.xlu0 %348
      %v350 = vrcp.pop 32.0
      %v351 = vmul.f32 32.0, %v350
      %v352 = vsub.f32 1.0, %v351
      %v353 = vmul.f32 %v350, %v352
      %v354 = vadd.f32 %v350, %v353
      %vm355 = vweird.f32 %v350
      %v356 = vsel %vm355, %v350, %v354
      %v357 = vmul.f32 %v349, %v356
      %v358 = vsub.f32 %v344, %v357
      %v359 = vmul.f32 %v358, %v358
      %v360 = vsel %vm283, %v359, 0.0
      %361 = vadd.xlane.f32.xlu0 %v360
      %v362 = vpop.xlane.xlu0 %361
      %v363 = vmul.f32 %v362, %v356
      %v364 = vadd.f32 %v363, 1e-05
      %v365 = vrsqrt.pop %v364
      %v366 = vmul.f32 %v365, %v364
      %v367 = vmul.f32 %v366, %v365
      %v368 = vmul.f32 0.5, %v367
      %v369 = vsub.f32 1.5, %v368
      %v370 = vmul.f32 %v365, %v369
      %vm371 = vweird.f32 %v364
      %vm372 = vweird.f32 %v365
      %vm373 = vmor %vm371, %vm372
      %v374 = vsel %vm373, %v365, %v370
      %v375 = vmul.f32 %v358, %v374
      %v377 = vperm.slane %v345, 0
      %v379 = vmul.f32 %v375, %v377
      %v381 = vperm.slane %v346, 0
      %v383 = vadd.f32 %v379, %v381
      %384 = vst.msk [vmem:[%s273] sm:$0xff] %vm283, %v383
      %p385 = scmp.lt.s32.totalorder %s18, 1
      %s386 = scalar_select %p385, %s18, 1
      %s387 = smul.addr %s386, 8
      %s388 = scalar_lea.vmem %s7, %s387
      // Predicated region
      $region49: #{decoder_forward.9} parent=47 // pred_check
        %p389 = pneg %p188
      $region50: #{decoder_forward.9} parent=47 // pred_check_branch
        %391 = sbr.rel (%p389) target = $region52
      $region51: #{decoder_forward.9} parent=47 // pred_region
        _
      $region52: #{decoder_forward.9} parent=47 // pred_fallthru
        _
    $region48: #{decoder_forward.9} parent=5 // pred_fallthru
      _
    %p392 = scmp.le.s32.totalorder 2, %s13
    // Predicated region
    $region53: #{decoder_forward.9} parent=5 // pred_check
      %p393 = pneg %p392
    $region54: #{decoder_forward.9} parent=5 // pred_check_branch
      %395 = sbr.rel (%p393) target = $region56
    $region55: #{decoder_forward.9} parent=5 // pred_region
      %s396 = ssub.s32 %s13, 2
      // Predicated region
      $region57: #{decoder_forward.9} parent=55 // pred_check
        %p397 = pneg %p194
      $region58: #{decoder_forward.9} parent=55 // pred_check_branch
        %399 = sbr.rel (%p397) target = $region60
      $region59: #{decoder_forward.9} parent=55 // pred_region
        %p400 = scmp.lt.s32.totalorder %s19, 1
        %s401 = scalar_select %p400, %s19, 1
        %s402 = smul.addr %s401, 8
        %s403 = scalar_lea.vmem %s7, %s402
      $region60: #{decoder_forward.9} parent=55 // pred_fallthru
        _
    $region56: #{decoder_forward.9} parent=5 // pred_fallthru
      _
  $region6: #{decoder_forward.9} parent=0 // loop_footer
    %s17 = sadd.s32 1, %s13
  $region7: #{decoder_forward.9} parent=0 // loop_footer_branch
    %12 = sbr.rel target = $region3
  $region8: #{decoder_forward.9} parent=0 // loop_exit
    _

// kernel: decoder_forward.7
$region0: #{decoder_forward.7}
  #allocation0 [shape = 'u32[]', space=smem, size = 0x4, offset = 0x4, fixed_abs, tag = 'smem constant byte address 0x4 - core index']
  #allocation1 [shape = 'u32[72,128]{1,0:T(1,128)}', space=vmem, size = 0x9000, scoped, tag = 'internal scratch']
  #allocation2 [shape = 'f32[8,32]{1,0:T(8,128)}', space=vmem, size = 0x1000, scoped, tag = 'scratch operand']
  %s0 = inlined_call_operand.vmem [shape: f32[2,8,32], index: 0, kind: input, shape index: {}]
  %s1 = inlined_call_operand.vmem [shape: f32[2,1,8], index: 1, kind: input, shape index: {}]
  %s2 = inlined_call_operand.vmem [shape: f32[32,96], index: 2, kind: input, shape index: {}]
  %s3 = inlined_call_operand.vmem [shape: f32[1,96], index: 3, kind: input, shape index: {}]
  %s4 = inlined_call_operand.vmem [shape: f32[32,32], index: 4, kind: input, shape index: {}]
  %s5 = inlined_call_operand.vmem [shape: f32[1,32], index: 5, kind: input, shape index: {}]
  %s6 = inlined_call_operand.vmem [shape: f32[1,32], index: 6, kind: input, shape index: {}]
  %s7 = inlined_call_operand.vmem [shape: f32[1,32], index: 7, kind: input, shape index: {}]
  %s8 = inlined_call_operand.vmem [shape: f32[2,8,32], index: 8, kind: output, shape index: {}]
  %s9 = sld [smem:[#allocation0]]
  $region65: #{decoder_forward.7} parent=0
    _
  %s11 = ssub.s32 1, %s9
  %s12 = scalar_select 0, %s11, %s9
  loop: start=0, step=1, limit=4
  $region2: #{decoder_forward.7} parent=0 // loop_pre_header
    _
  $region3: #{decoder_forward.7} parent=0 // loop_header
    %s14 = sphi 0, %s18
    %p15 = scmp.ge.s32.totalorder %s14, 4
    %s24 = sphi 0, %s26
    %s27 = sphi 0, %s24
    %s28 = sphi 0, %s27
    %s44 = sphi 0, %s28
    %s50 = sphi 0, %s52
    %s53 = sphi 0, %s50
    %s54 = sphi 0, %s53
    %s70 = sphi 0, %s54
    %s74 = sphi 0, %s74
    %s76 = sphi 0, %s74
    %s77 = sphi 0, %s76
    %s91 = sphi 0, %s77
    %s95 = sphi 0, %s95
    %s97 = sphi 0, %s95
    %s98 = sphi 0, %s97
    %s112 = sphi 0, %s98
    %s116 = sphi 0, %s116
    %s118 = sphi 0, %s116
    %s119 = sphi 0, %s118
    %s133 = sphi 0, %s119
    %s137 = sphi 0, %s137
    %s139 = sphi 0, %s137
    %s140 = sphi 0, %s139
    %s154 = sphi 0, %s140
    %s158 = sphi 0, %s158
    %s160 = sphi 0, %s158
    %s161 = sphi 0, %s160
    %s175 = sphi 0, %s161
    %s179 = sphi 0, %s179
    %s181 = sphi 0, %s179
    %s182 = sphi 0, %s181
    %s196 = sphi 0, %s182
    %s202 = sphi 0, %s204
    %s205 = sphi 0, %s202
    %s206 = sphi 0, %s205
    %s222 = sphi 0, %s206
  $region4: #{decoder_forward.7} parent=0 // loop_header_branch
    %17 = sbr.rel (%p15) target = $region8
  $region5: #{decoder_forward.7} parent=0 // loop_body
    %s19 = ssub.s32 %s14, 1
    %s20 = ssub.s32 %s14, 2
    %s21 = sadd.s32 %s14, 1
    %s22 = ssub.s32 %s14, %s21
    %p23 = scmp.eq.s32.totalorder %s22, 0
    %s25 = sadd.s32 %s24, 1
    %s26 = scalar_select %p23, %s24, %s25
    %p29 = pneg %p23
    %p30 = scmp.eq.s32.totalorder %s14, 1
    %p31 = por %p29, %p30
    %p32 = scmp.ne.s32.totalorder %s24, %s27
    %p33 = scmp.eq.s32.totalorder %s14, 0
    %p34 = por %p32, %p33
    %p35 = scmp.ne.s32.totalorder %s24, %s27
    %p36 = scmp.eq.s32.totalorder %s19, 1
    %p37 = por %p35, %p36
    %p38 = scmp.ne.s32.totalorder %s27, %s28
    %p39 = scmp.eq.s32.totalorder %s19, 0
    %p40 = por %p38, %p39
    %p41 = scmp.ne.s32.totalorder %s27, %s28
    %p42 = scmp.eq.s32.totalorder %s20, 1
    %p43 = por %p41, %p42
    %p45 = scmp.ne.s32.totalorder %s28, %s44
    %p46 = scmp.eq.s32.totalorder %s20, 0
    %p47 = por %p45, %p46
    %s48 = ssub.s32 %s14, %s21
    %p49 = scmp.eq.s32.totalorder %s48, 0
    %s51 = sadd.s32 %s50, 1
    %s52 = scalar_select %p49, %s50, %s51
    %p55 = pneg %p49
    %p56 = scmp.eq.s32.totalorder %s14, 1
    %p57 = por %p55, %p56
    %p58 = scmp.ne.s32.totalorder %s50, %s53
    %p59 = scmp.eq.s32.totalorder %s14, 0
    %p60 = por %p58, %p59
    %p61 = scmp.ne.s32.totalorder %s50, %s53
    %p62 = scmp.eq.s32.totalorder %s19, 1
    %p63 = por %p61, %p62
    %p64 = scmp.ne.s32.totalorder %s53, %s54
    %p65 = scmp.eq.s32.totalorder %s19, 0
    %p66 = por %p64, %p65
    %p67 = scmp.ne.s32.totalorder %s53, %s54
    %p68 = scmp.eq.s32.totalorder %s20, 1
    %p69 = por %p67, %p68
    %p71 = scmp.ne.s32.totalorder %s54, %s70
    %p72 = scmp.eq.s32.totalorder %s20, 0
    %p73 = por %p71, %p72
    %s75 = sadd.s32 %s74, 1
    %p78 = scmp.eq.s32.totalorder %s14, 1
    %p79 = scmp.ne.s32.totalorder %s74, %s76
    %p80 = scmp.eq.s32.totalorder %s14, 0
    %p81 = por %p79, %p80
    %p82 = scmp.ne.s32.totalorder %s74, %s76
    %p83 = scmp.eq.s32.totalorder %s19, 1
    %p84 = por %p82, %p83
    %p85 = scmp.ne.s32.totalorder %s76, %s77
    %p86 = scmp.eq.s32.totalorder %s19, 0
    %p87 = por %p85, %p86
    %p88 = scmp.ne.s32.totalorder %s76, %s77
    %p89 = scmp.eq.s32.totalorder %s20, 1
    %p90 = por %p88, %p89
    %p92 = scmp.ne.s32.totalorder %s77, %s91
    %p93 = scmp.eq.s32.totalorder %s20, 0
    %p94 = por %p92, %p93
    %s96 = sadd.s32 %s95, 1
    %p99 = scmp.eq.s32.totalorder %s14, 1
    %p100 = scmp.ne.s32.totalorder %s95, %s97
    %p101 = scmp.eq.s32.totalorder %s14, 0
    %p102 = por %p100, %p101
    %p103 = scmp.ne.s32.totalorder %s95, %s97
    %p104 = scmp.eq.s32.totalorder %s19, 1
    %p105 = por %p103, %p104
    %p106 = scmp.ne.s32.totalorder %s97, %s98
    %p107 = scmp.eq.s32.totalorder %s19, 0
    %p108 = por %p106, %p107
    %p109 = scmp.ne.s32.totalorder %s97, %s98
    %p110 = scmp.eq.s32.totalorder %s20, 1
    %p111 = por %p109, %p110
    %p113 = scmp.ne.s32.totalorder %s98, %s112
    %p114 = scmp.eq.s32.totalorder %s20, 0
    %p115 = por %p113, %p114
    %s117 = sadd.s32 %s116, 1
    %p120 = scmp.eq.s32.totalorder %s14, 1
    %p121 = scmp.ne.s32.totalorder %s116, %s118
    %p122 = scmp.eq.s32.totalorder %s14, 0
    %p123 = por %p121, %p122
    %p124 = scmp.ne.s32.totalorder %s116, %s118
    %p125 = scmp.eq.s32.totalorder %s19, 1
    %p126 = por %p124, %p125
    %p127 = scmp.ne.s32.totalorder %s118, %s119
    %p128 = scmp.eq.s32.totalorder %s19, 0
    %p129 = por %p127, %p128
    %p130 = scmp.ne.s32.totalorder %s118, %s119
    %p131 = scmp.eq.s32.totalorder %s20, 1
    %p132 = por %p130, %p131
    %p134 = scmp.ne.s32.totalorder %s119, %s133
    %p135 = scmp.eq.s32.totalorder %s20, 0
    %p136 = por %p134, %p135
    %s138 = sadd.s32 %s137, 1
    %p141 = scmp.eq.s32.totalorder %s14, 1
    %p142 = scmp.ne.s32.totalorder %s137, %s139
    %p143 = scmp.eq.s32.totalorder %s14, 0
    %p144 = por %p142, %p143
    %p145 = scmp.ne.s32.totalorder %s137, %s139
    %p146 = scmp.eq.s32.totalorder %s19, 1
    %p147 = por %p145, %p146
    %p148 = scmp.ne.s32.totalorder %s139, %s140
    %p149 = scmp.eq.s32.totalorder %s19, 0
    %p150 = por %p148, %p149
    %p151 = scmp.ne.s32.totalorder %s139, %s140
    %p152 = scmp.eq.s32.totalorder %s20, 1
    %p153 = por %p151, %p152
    %p155 = scmp.ne.s32.totalorder %s140, %s154
    %p156 = scmp.eq.s32.totalorder %s20, 0
    %p157 = por %p155, %p156
    %s159 = sadd.s32 %s158, 1
    %p162 = scmp.eq.s32.totalorder %s14, 1
    %p163 = scmp.ne.s32.totalorder %s158, %s160
    %p164 = scmp.eq.s32.totalorder %s14, 0
    %p165 = por %p163, %p164
    %p166 = scmp.ne.s32.totalorder %s158, %s160
    %p167 = scmp.eq.s32.totalorder %s19, 1
    %p168 = por %p166, %p167
    %p169 = scmp.ne.s32.totalorder %s160, %s161
    %p170 = scmp.eq.s32.totalorder %s19, 0
    %p171 = por %p169, %p170
    %p172 = scmp.ne.s32.totalorder %s160, %s161
    %p173 = scmp.eq.s32.totalorder %s20, 1
    %p174 = por %p172, %p173
    %p176 = scmp.ne.s32.totalorder %s161, %s175
    %p177 = scmp.eq.s32.totalorder %s20, 0
    %p178 = por %p176, %p177
    %s180 = sadd.s32 %s179, 1
    %p183 = scmp.eq.s32.totalorder %s14, 1
    %p184 = scmp.ne.s32.totalorder %s179, %s181
    %p185 = scmp.eq.s32.totalorder %s14, 0
    %p186 = por %p184, %p185
    %p187 = scmp.ne.s32.totalorder %s179, %s181
    %p188 = scmp.eq.s32.totalorder %s19, 1
    %p189 = por %p187, %p188
    %p190 = scmp.ne.s32.totalorder %s181, %s182
    %p191 = scmp.eq.s32.totalorder %s19, 0
    %p192 = por %p190, %p191
    %p193 = scmp.ne.s32.totalorder %s181, %s182
    %p194 = scmp.eq.s32.totalorder %s20, 1
    %p195 = por %p193, %p194
    %p197 = scmp.ne.s32.totalorder %s182, %s196
    %p198 = scmp.eq.s32.totalorder %s20, 0
    %p199 = por %p197, %p198
    %s200 = ssub.s32 %s14, %s21
    %p201 = scmp.eq.s32.totalorder %s200, 0
    %s203 = sadd.s32 %s202, 1
    %s204 = scalar_select %p201, %s202, %s203
    %p207 = pneg %p201
    %p208 = scmp.eq.s32.totalorder %s14, 1
    %p209 = por %p207, %p208
    %p210 = scmp.ne.s32.totalorder %s202, %s205
    %p211 = scmp.eq.s32.totalorder %s14, 0
    %p212 = por %p210, %p211
    %p213 = scmp.ne.s32.totalorder %s202, %s205
    %p214 = scmp.eq.s32.totalorder %s19, 1
    %p215 = por %p213, %p214
    %p216 = scmp.ne.s32.totalorder %s205, %s206
    %p217 = scmp.eq.s32.totalorder %s19, 0
    %p218 = por %p216, %p217
    %p219 = scmp.ne.s32.totalorder %s205, %s206
    %p220 = scmp.eq.s32.totalorder %s20, 1
    %p221 = por %p219, %p220
    %p223 = scmp.ne.s32.totalorder %s206, %s222
    %p224 = scmp.eq.s32.totalorder %s20, 0
    %p225 = por %p223, %p224
    %p226 = scmp.le.s32.totalorder 1, %s14
    %p227 = scmp.lt.s32.totalorder %s14, 3
    %p228 = pnand %p226, %p227
    %p229 = pneg %p228
    // Predicated region
    $region9: #{decoder_forward.7} parent=5 // pred_check
      _
    $region10: #{decoder_forward.7} parent=5 // pred_check_branch
      %231 = sbr.rel (%p228) target = $region12
    $region11: #{decoder_forward.7} parent=5 // pred_region
      %s232 = ssub.s32 %s14, 1
      // Predicated region
      $region13: #{decoder_forward.7} parent=11 // pred_check
        %p233 = pneg %p87
      $region14: #{decoder_forward.7} parent=11 // pred_check_branch
        %235 = sbr.rel (%p233) target = $region16
      $region15: #{decoder_forward.7} parent=11 // pred_region
        _
      $region16: #{decoder_forward.7} parent=11 // pred_fallthru
        _
      // Predicated region
      $region17: #{decoder_forward.7} parent=11 // pred_check
        %p236 = pneg %p108
      $region18: #{decoder_forward.7} parent=11 // pred_check_branch
        %238 = sbr.rel (%p236) target = $region20
      $region19: #{decoder_forward.7} parent=11 // pred_region
        _
      $region20: #{decoder_forward.7} parent=11 // pred_fallthru
        _
      // Predicated region
      $region21: #{decoder_forward.7} parent=11 // pred_check
        %p239 = pneg %p129
      $region22: #{decoder_forward.7} parent=11 // pred_check_branch
        %241 = sbr.rel (%p239) target = $region24
      $region23: #{decoder_forward.7} parent=11 // pred_region
        _
      $region24: #{decoder_forward.7} parent=11 // pred_fallthru
        _
      // Predicated region
      $region25: #{decoder_forward.7} parent=11 // pred_check
        %p242 = pneg %p150
      $region26: #{decoder_forward.7} parent=11 // pred_check_branch
        %244 = sbr.rel (%p242) target = $region28
      $region27: #{decoder_forward.7} parent=11 // pred_region
        _
      $region28: #{decoder_forward.7} parent=11 // pred_fallthru
        _
      // Predicated region
      $region29: #{decoder_forward.7} parent=11 // pred_check
        %p245 = pneg %p171
      $region30: #{decoder_forward.7} parent=11 // pred_check_branch
        %247 = sbr.rel (%p245) target = $region32
      $region31: #{decoder_forward.7} parent=11 // pred_region
        _
      $region32: #{decoder_forward.7} parent=11 // pred_fallthru
        _
      // Predicated region
      $region33: #{decoder_forward.7} parent=11 // pred_check
        %p248 = pneg %p192
      $region34: #{decoder_forward.7} parent=11 // pred_check_branch
        %250 = sbr.rel (%p248) target = $region36
      $region35: #{decoder_forward.7} parent=11 // pred_region
        _
      $region36: #{decoder_forward.7} parent=11 // pred_fallthru
        _
    $region12: #{decoder_forward.7} parent=5 // pred_fallthru
      _
    %p251 = scmp.lt.s32.totalorder %s14, 2
    // Predicated region
    $region37: #{decoder_forward.7} parent=5 // pred_check
      %p252 = pneg %p251
    $region38: #{decoder_forward.7} parent=5 // pred_check_branch
      %254 = sbr.rel (%p252) target = $region40
    $region39: #{decoder_forward.7} parent=5 // pred_region
      // Predicated region
      $region41: #{decoder_forward.7} parent=39 // pred_check
        %p255 = pneg %p34
      $region42: #{decoder_forward.7} parent=39 // pred_check_branch
        %257 = sbr.rel (%p255) target = $region44
      $region43: #{decoder_forward.7} parent=39 // pred_region
        %p258 = scmp.lt.s32.totalorder %s14, 1
        %s259 = scalar_select %p258, %s14, 1
        %s260 = smul.addr %s259, 8
        %s261 = scalar_lea.vmem %s0, %s260
      $region44: #{decoder_forward.7} parent=39 // pred_fallthru
        _
      // Predicated region
      $region45: #{decoder_forward.7} parent=39 // pred_check
        %p262 = pneg %p60
      $region46: #{decoder_forward.7} parent=39 // pred_check_branch
        %264 = sbr.rel (%p262) target = $region48
      $region47: #{decoder_forward.7} parent=39 // pred_region
        %p265 = scmp.lt.s32.totalorder %s14, 1
        %s266 = scalar_select %p265, %s14, 1
        %s267 = scalar_lea.vmem %s1, %s266
      $region48: #{decoder_forward.7} parent=39 // pred_fallthru
        _
    $region40: #{decoder_forward.7} parent=5 // pred_fallthru
      _
    %p268 = scmp.le.s32.totalorder 1, %s14
    %p269 = scmp.lt.s32.totalorder %s14, 3
    %p270 = pnand %p268, %p269
    %p271 = pneg %p270
    // Predicated region
    $region49: #{decoder_forward.7} parent=5 // pred_check
      _
    $region50: #{decoder_forward.7} parent=5 // pred_check_branch
      %273 = sbr.rel (%p270) target = $region52
    $region51: #{decoder_forward.7} parent=5 // pred_region
      %s274 = ssub.s32 %s14, 1
      %p275 = scmp.lt.s32.totalorder %s19, 1
      %s276 = scalar_select %p275, %s19, 1
      %s277 = smul.addr %s276, 8
      %s278 = scalar_lea.vmem %s0, %s277
      %p279 = pneg %p40
      %p280 = pneg %p37
      %p281 = scmp.lt.s32.totalorder %s19, 1
      %s282 = scalar_select %p281, %s19, 1
      %s283 = scalar_lea.vmem %s1, %s282
      %p284 = pneg %p66
      %p285 = pneg %p63
      %p286 = pneg %p87
      %p287 = pneg %p84
      %p288 = pneg %p108
      %p289 = pneg %p105
      %p290 = pneg %p129
      %p291 = pneg %p126
      %p292 = pneg %p150
      %p293 = pneg %p147
      %p294 = pneg %p171
      %p295 = pneg %p168
      %p296 = pneg %p192
      %p297 = pneg %p189
      %p298 = pneg %p218
      %p299 = pneg %p215
      %p300 = scmp.lt.s32.totalorder %s19, 1
      %s301 = scalar_select %p300, %s19, 1
      %s302 = smul.addr %s301, 8
      %s303 = scalar_lea.vmem %s8, %s302
      %p304 = scmp.lt.s32.totalorder %s19, 1
      %s305 = scalar_select %p304, %s19, 1
      %s306 = smul.addr %s305, 8
      %s307 = scalar_lea.vmem %s0, %s306
      %p308 = scmp.lt.s32.totalorder %s19, 1
      %s309 = scalar_select %p308, %s19, 1
      %s310 = scalar_lea.vmem %s1, %s309
      %p311 = scmp.lt.s32.totalorder %s19, 1
      %s312 = scalar_select %p311, %s19, 1
      %s313 = smul.addr %s312, 8
      %s314 = scalar_lea.vmem %s8, %s313
      %v315 = vld [vmem:[%s307] sm:$0xff]
      %v316 = vld [vmem:[%s2] sm:$0xff]
      %v317 = vld [vmem:[%s2 + $0x8] sm:$0xff]
      %v318 = vld [vmem:[%s2 + $0x10] sm:$0xff]
      %v319 = vld [vmem:[%s2 + $0x18] sm:$0xff]
      %v320 = vld [vmem:[%s3] sm:$0x1]
      %v322 = vperm.slane %v320, 0
      %vm324 = vcmask 261120
      %v326 = vsel %vm324, %v315, 0
      %328 = vmatpush.msra.mxu0 0.0
      %329 = vmatpush.msra.mxu0 0.0
      %330 = vmatpush.msra.mxu0 0.0
      %331 = vmatpush.msra.mxu0 0.0
      %332 = vmatpush.msra.mxu0 0.0
      %333 = vmatpush.msra.mxu0 0.0
      %334 = vmatpush.msra.mxu0 0.0
      %335 = vmatpush.msra.mxu0 0.0
      %336 = vmatpush.msra.mxu0 0.0
      %337 = vmatpush.msra.mxu0 0.0
      %338 = vmatpush.msra.mxu0 0.0
      %339 = vmatpush.msra.mxu0 0.0
      %340 = vmatpush.msra.mxu0 %v319
      %341 = vmatpush.msra.mxu0 %v318
      %342 = vmatpush.msra.mxu0 %v317
      %343 = vmatpush.msra.mxu0 %v316
      %344 = vmatmul.f32.gmra.mxu0 %v326
      %v345 = vpop.f32.mrf.mxu0
      %v346 = vadd.f32 %v322, %v345
      %347 = vdwg.mxu0
      %v348 = vlaneseq
      %v349 = vshrl.u32 %v348, 7
      %v350 = vlaneseq
      %v351 = vand.u32 %v350, 127
      %vm352 = vcmp.gt.s32.totalorder %v351, %v349
      %v353 = vsel %vm352, -1e+30, 0.0
      %v354 = vld [vmem:[%s310] sm:$0x1]
      %v356 = vperm.slane %v354, 0
      %v358 = vadd.f32 %v353, %v356
      %v359 = vmul.f32 %v346, 0.35355338
      %361 = vrot.lane.b32.xlu0 %v346, 96
      %v362 = vpop.permute.xlu0 %361
      %vm363 = vcmask 64512
      %v365 = vsel %vm363, %v359, 0
      %v367 = vsel %vm363, %v362, 0
      %369 = vmatpush.xpose.msra.mxu0 0.0
      %370 = vmatpush.xpose.msra.mxu0 0.0
      %371 = vmatpush.xpose.msra.mxu0 0.0
      %372 = vmatpush.xpose.msra.mxu0 0.0
      %373 = vmatpush.xpose.msra.mxu0 0.0
      %374 = vmatpush.xpose.msra.mxu0 0.0
      %375 = vmatpush.xpose.msra.mxu0 0.0
      %376 = vmatpush.xpose.msra.mxu0 0.0
      %377 = vmatpush.xpose.msra.mxu0 0.0
      %378 = vmatpush.xpose.msra.mxu0 0.0
      %379 = vmatpush.xpose.msra.mxu0 0.0
      %380 = vmatpush.xpose.msra.mxu0 0.0
      %381 = vmatpush.xpose.msra.mxu0 0.0
      %382 = vmatpush.xpose.msra.mxu0 0.0
      %383 = vmatpush.xpose.msra.mxu0 0.0
      %384 = vmatpush.xpose.msra.mxu0 %v367
      %385 = vmatmul.f32.gmra.mxu0 %v365
      %v386 = vpop.f32.mrf.mxu0
      %v387 = vadd.f32 %v358, %v386
      %388 = vdwg.mxu0
      %v389 = vsel %vm363, %v387, -inf
      %390 = vmax.xlane.f32.xlu0 %v389
      %v391 = vpop.xlane.xlu0 %390
      %v392 = vsub.f32 %v387, %v391
      %v393 = vmul.f32 %v392, 1.442695
      %v394 = vpow.pop %v393
      %v395 = vsel %vm363, %v394, 0.0
      %396 = vadd.xlane.f32.xlu0 %v395
      %v397 = vpop.xlane.xlu0 %396
      %v398 = vrcp.pop %v397
      %v399 = vmul.f32 %v394, %v398
      %400 = vrot.lane.b32.xlu0 %v346, 64
      %v401 = vpop.permute.xlu0 %400
      %v404 = vsel %vm363, %v399, 0
      %406 = vmatpush.msra.mxu0 0.0
      %407 = vmatpush.msra.mxu0 0.0
      %408 = vmatpush.msra.mxu0 0.0
      %409 = vmatpush.msra.mxu0 0.0
      %410 = vmatpush.msra.mxu0 0.0
      %411 = vmatpush.msra.mxu0 0.0
      %412 = vmatpush.msra.mxu0 0.0
      %413 = vmatpush.msra.mxu0 0.0
      %414 = vmatpush.msra.mxu0 0.0
      %415 = vmatpush.msra.mxu0 0.0
      %416 = vmatpush.msra.mxu0 0.0
      %417 = vmatpush.msra.mxu0 0.0
      %418 = vmatpush.msra.mxu0 0.0
      %419 = vmatpush.msra.mxu0 0.0
      %420 = vmatpush.msra.mxu0 0.0
      %421 = vmatpush.msra.mxu0 %v401
      %422 = vmatmul.f32.gmra.mxu0 %v404
      %v423 = vpop.f32.mrf.mxu0
      %v424 = vadd.f32 0.0, %v423
      %425 = vdwg.mxu0
      %426 = vst.msk [vmem:[#allocation2] sm:$0xff] %vm363, %v424
      %427 = vrot.lane.b32.xlu0 %v359, 120
      %v428 = vpop.permute.xlu0 %427
      %429 = vrot.lane.b32.xlu0 %v346, 88
      %v430 = vpop.permute.xlu0 %429
      %v431 = vsel %vm363, %v428, 0
      %v433 = vsel %vm363, %v430, 0
      %435 = vmatpush.xpose.msra.mxu0 0.0
      %436 = vmatpush.xpose.msra.mxu0 0.0
      %437 = vmatpush.xpose.msra.mxu0 0.0
      %438 = vmatpush.xpose.msra.mxu0 0.0
      %439 = vmatpush.xpose.msra.mxu0 0.0
      %440 = vmatpush.xpose.msra.mxu0 0.0
      %441 = vmatpush.xpose.msra.mxu0 0.0
      %442 = vmatpush.xpose.msra.mxu0 0.0
      %443 = vmatpush.xpose.msra.mxu0 0.0
      %444 = vmatpush.xpose.msra.mxu0 0.0
      %445 = vmatpush.xpose.msra.mxu0 0.0
      %446 = vmatpush.xpose.msra.mxu0 0.0
      %447 = vmatpush.xpose.msra.mxu0 0.0
      %448 = vmatpush.xpose.msra.mxu0 0.0
      %449 = vmatpush.xpose.msra.mxu0 0.0
      %450 = vmatpush.xpose.msra.mxu0 %v433
      %451 = vmatmul.f32.gmra.mxu0 %v431
      %v452 = vpop.f32.mrf.mxu0
      %v453 = vadd.f32 %v358, %v452
      %454 = vdwg.mxu0
      %v455 = vsel %vm363, %v453, -inf
      %456 = vmax.xlane.f32.xlu0 %v455
      %v457 = vpop.xlane.xlu0 %456
      %v458 = vsub.f32 %v453, %v457
      %v459 = vmul.f32 %v458, 1.442695
      %v460 = vpow.pop %v459
      %v461 = vsel %vm363, %v460, 0.0
      %462 = vadd.xlane.f32.xlu0 %v461
      %v463 = vpop.xlane.xlu0 %462
      %v464 = vrcp.pop %v463
      %v465 = vmul.f32 %v460, %v464
      %466 = vrot.lane.b32.xlu0 %v346, 56
      %v467 = vpop.permute.xlu0 %466
      %v470 = vsel %vm363, %v465, 0
      %472 = vmatpush.msra.mxu0 0.0
      %473 = vmatpush.msra.mxu0 0.0
      %474 = vmatpush.msra.mxu0 0.0
      %475 = vmatpush.msra.mxu0 0.0
      %476 = vmatpush.msra.mxu0 0.0
      %477 = vmatpush.msra.mxu0 0.0
      %478 = vmatpush.msra.mxu0 0.0
      %479 = vmatpush.msra.mxu0 0.0
      %480 = vmatpush.msra.mxu0 0.0
      %481 = vmatpush.msra.mxu0 0.0
      %482 = vmatpush.msra.mxu0 0.0
      %483 = vmatpush.msra.mxu0 0.0
      %484 = vmatpush.msra.mxu0 0.0
      %485 = vmatpush.msra.mxu0 0.0
      %486 = vmatpush.msra.mxu0 0.0
      %487 = vmatpush.msra.mxu0 %v467
      %488 = vmatmul.f32.gmra.mxu0 %v470
      %v489 = vpop.f32.mrf.mxu0
      %v490 = vadd.f32 0.0, %v489
      %491 = vdwg.mxu0
      %493 = vrot.lane.b32.xlu0 %v490, 8
      %v494 = vpop.permute.xlu0 %493
      %vm496 = vcmask 130112
      %497 = vst.msk [vmem:[#allocation2] sm:$0xff] %vm496, %v494
      %498 = vrot.lane.b32.xlu0 %v359, 112
      %v499 = vpop.permute.xlu0 %498
      %500 = vrot.lane.b32.xlu0 %v346, 80
      %v501 = vpop.permute.xlu0 %500
      %v502 = vsel %vm363, %v499, 0
      %v504 = vsel %vm363, %v501, 0
      %506 = vmatpush.xpose.msra.mxu0 0.0
      %507 = vmatpush.xpose.msra.mxu0 0.0
      %508 = vmatpush.xpose.msra.mxu0 0.0
      %509 = vmatpush.xpose.msra.mxu0 0.0
      %510 = vmatpush.xpose.msra.mxu0 0.0
      %511 = vmatpush.xpose.msra.mxu0 0.0
      %512 = vmatpush.xpose.msra.mxu0 0.0
      %513 = vmatpush.xpose.msra.mxu0 0.0
      %514 = vmatpush.xpose.msra.mxu0 0.0
      %515 = vmatpush.xpose.msra.mxu0 0.0
      %516 = vmatpush.xpose.msra.mxu0 0.0
      %517 = vmatpush.xpose.msra.mxu0 0.0
      %518 = vmatpush.xpose.msra.mxu0 0.0
      %519 = vmatpush.xpose.msra.mxu0 0.0
      %520 = vmatpush.xpose.msra.mxu0 0.0
      %521 = vmatpush.xpose.msra.mxu0 %v504
      %522 = vmatmul.f32.gmra.mxu0 %v502
      %v523 = vpop.f32.mrf.mxu0
      %v524 = vadd.f32 %v358, %v523
      %525 = vdwg.mxu0
      %v526 = vsel %vm363, %v524, -inf
      %527 = vmax.xlane.f32.xlu0 %v526
      %v528 = vpop.xlane.xlu0 %527
      %v529 = vsub.f32 %v524, %v528
      %v530 = vmul.f32 %v529, 1.442695
      %v531 = vpow.pop %v530
      %v532 = vsel %vm363, %v531, 0.0
      %533 = vadd.xlane.f32.xlu0 %v532
      %v534 = vpop.xlane.xlu0 %533
      %v535 = vrcp.pop %v534
      %v536 = vmul.f32 %v531, %v535
      %537 = vrot.lane.b32.xlu0 %v346, 48
      %v538 = vpop.permute.xlu0 %537
      %v541 = vsel %vm363, %v536, 0
      %543 = vmatpush.msra.mxu0 0.0
      %544 = vmatpush.msra.mxu0 0.0
      %545 = vmatpush.msra.mxu0 0.0
      %546 = vmatpush.msra.mxu0 0.0
      %547 = vmatpush.msra.mxu0 0.0
      %548 = vmatpush.msra.mxu0 0.0
      %549 = vmatpush.msra.mxu0 0.0
      %550 = vmatpush.msra.mxu0 0.0
      %551 = vmatpush.msra.mxu0 0.0
      %552 = vmatpush.msra.mxu0 0.0
      %553 = vmatpush.msra.mxu0 0.0
      %554 = vmatpush.msra.mxu0 0.0
      %555 = vmatpush.msra.mxu0 0.0
      %556 = vmatpush.msra.mxu0 0.0
      %557 = vmatpush.msra.mxu0 0.0
      %558 = vmatpush.msra.mxu0 %v538
      %559 = vmatmul.f32.gmra.mxu0 %v541
      %v560 = vpop.f32.mrf.mxu0
      %v561 = vadd.f32 0.0, %v560
      %562 = vdwg.mxu0
      %564 = vrot.lane.b32.xlu0 %v561, 16
      %v565 = vpop.permute.xlu0 %564
      %vm567 = vcmask 195712
      %568 = vst.msk [vmem:[#allocation2] sm:$0xff] %vm567, %v565
      %569 = vrot.lane.b32.xlu0 %v359, 104
      %v570 = vpop.permute.xlu0 %569
      %571 = vrot.lane.b32.xlu0 %v346, 72
      %v572 = vpop.permute.xlu0 %571
      %v573 = vsel %vm363, %v570, 0
      %v575 = vsel %vm363, %v572, 0
      %577 = vmatpush.xpose.msra.mxu0 0.0
      %578 = vmatpush.xpose.msra.mxu0 0.0
      %579 = vmatpush.xpose.msra.mxu0 0.0
      %580 = vmatpush.xpose.msra.mxu0 0.0
      %581 = vmatpush.xpose.msra.mxu0 0.0
      %582 = vmatpush.xpose.msra.mxu0 0.0
      %583 = vmatpush.xpose.msra.mxu0 0.0
      %584 = vmatpush.xpose.msra.mxu0 0.0
      %585 = vmatpush.xpose.msra.mxu0 0.0
      %586 = vmatpush.xpose.msra.mxu0 0.0
      %587 = vmatpush.xpose.msra.mxu0 0.0
      %588 = vmatpush.xpose.msra.mxu0 0.0
      %589 = vmatpush.xpose.msra.mxu0 0.0
      %590 = vmatpush.xpose.msra.mxu0 0.0
      %591 = vmatpush.xpose.msra.mxu0 0.0
      %592 = vmatpush.xpose.msra.mxu0 %v575
      %593 = vmatmul.f32.gmra.mxu0 %v573
      %v594 = vpop.f32.mrf.mxu0
      %v595 = vadd.f32 %v358, %v594
      %596 = vdwg.mxu0
      %v597 = vsel %vm363, %v595, -inf
      %598 = vmax.xlane.f32.xlu0 %v597
      %v599 = vpop.xlane.xlu0 %598
      %v600 = vsub.f32 %v595, %v599
      %v601 = vmul.f32 %v600, 1.442695
      %v602 = vpow.pop %v601
      %v603 = vsel %vm363, %v602, 0.0
      %604 = vadd.xlane.f32.xlu0 %v603
      %v605 = vpop.xlane.xlu0 %604
      %v606 = vrcp.pop %v605
      %v607 = vmul.f32 %v602, %v606
      %608 = vrot.lane.b32.xlu0 %v346, 40
      %v609 = vpop.permute.xlu0 %608
      %v612 = vsel %vm363, %v607, 0
      %614 = vmatpush.msra.mxu0 0.0
      %615 = vmatpush.msra.mxu0 0.0
      %616 = vmatpush.msra.mxu0 0.0
      %617 = vmatpush.msra.mxu0 0.0
      %618 = vmatpush.msra.mxu0 0.0
      %619 = vmatpush.msra.mxu0 0.0
      %620 = vmatpush.msra.mxu0 0.0
      %621 = vmatpush.msra.mxu0 0.0
      %622 = vmatpush.msra.mxu0 0.0
      %623 = vmatpush.msra.mxu0 0.0
      %624 = vmatpush.msra.mxu0 0.0
      %625 = vmatpush.msra.mxu0 0.0
      %626 = vmatpush.msra.mxu0 0.0
      %627 = vmatpush.msra.mxu0 0.0
      %628 = vmatpush.msra.mxu0 0.0
      %629 = vmatpush.msra.mxu0 %v609
      %630 = vmatmul.f32.gmra.mxu0 %v612
      %v631 = vpop.f32.mrf.mxu0
      %v632 = vadd.f32 0.0, %v631
      %633 = vdwg.mxu0
      %635 = vrot.lane.b32.xlu0 %v632, 24
      %v636 = vpop.permute.xlu0 %635
      %vm638 = vcmask 261312
      %639 = vst.msk [vmem:[#allocation2] sm:$0xff] %vm638, %v636
      %v640 = vld [vmem:[#allocation2] sm:$0xff]
      %v641 = vld [vmem:[%s4] sm:$0xff]
      %v642 = vld [vmem:[%s4 + $0x8] sm:$0xff]
      %v643 = vld [vmem:[%s4 + $0x10] sm:$0xff]
      %v644 = vld [vmem:[%s4 + $0x18] sm:$0xff]
      %v645 = vld [vmem:[%s5] sm:$0x1]
      %v647 = vperm.slane %v645, 0
      %v650 = vsel %vm324, %v640, 0
      %652 = vmatpush.msra.mxu0 0.0
      %653 = vmatpush.msra.mxu0 0.0
      %654 = vmatpush.msra.mxu0 0.0
      %655 = vmatpush.msra.mxu0 0.0
      %656 = vmatpush.msra.mxu0 0.0
      %657 = vmatpush.msra.mxu0 0.0
      %658 = vmatpush.msra.mxu0 0.0
      %659 = vmatpush.msra.mxu0 0.0
      %660 = vmatpush.msra.mxu0 0.0
      %661 = vmatpush.msra.mxu0 0.0
      %662 = vmatpush.msra.mxu0 0.0
      %663 = vmatpush.msra.mxu0 0.0
      %664 = vmatpush.msra.mxu0 %v644
      %665 = vmatpush.msra.mxu0 %v643
      %666 = vmatpush.msra.mxu0 %v642
      %667 = vmatpush.msra.mxu0 %v641
      %668 = vmatmul.f32.gmra.mxu0 %v650
      %v669 = vpop.f32.mrf.mxu0
      %v670 = vadd.f32 %v647, %v669
      %671 = vdwg.mxu0
      %v672 = vadd.f32 %v315, %v670
      %v673 = vld [vmem:[%s6] sm:$0x1]
      %v674 = vld [vmem:[%s7] sm:$0x1]
      %v675 = vsel %vm324, %v672, 0.0
      %676 = vadd.xlane.f32.xlu0 %v675
      %v677 = vpop.xlane.xlu0 %676
      %v678 = vrcp.pop 32.0
      %v679 = vmul.f32 32.0, %v678
      %v680 = vsub.f32 1.0, %v679
      %v681 = vmul.f32 %v678, %v680
      %v682 = vadd.f32 %v678, %v681
      %vm683 = vweird.f32 %v678
      %v684 = vsel %vm683, %v678, %v682
      %v685 = vmul.f32 %v677, %v684
      %v686 = vsub.f32 %v672, %v685
      %v687 = vmul.f32 %v686, %v686
      %v688 = vsel %vm324, %v687, 0.0
      %689 = vadd.xlane.f32.xlu0 %v688
      %v690 = vpop.xlane.xlu0 %689
      %v691 = vmul.f32 %v690, %v684
      %v692 = vadd.f32 %v691, 1e-05
      %v693 = vrsqrt.pop %v692
      %v694 = vmul.f32 %v693, %v692
      %v695 = vmul.f32 %v694, %v693
      %v696 = vmul.f32 0.5, %v695
      %v697 = vsub.f32 1.5, %v696
      %v698 = vmul.f32 %v693, %v697
      %vm699 = vweird.f32 %v692
      %vm700 = vweird.f32 %v693
      %vm701 = vmor %vm699, %vm700
      %v702 = vsel %vm701, %v693, %v698
      %v703 = vmul.f32 %v686, %v702
      %v705 = vperm.slane %v673, 0
      %v707 = vmul.f32 %v703, %v705
      %v709 = vperm.slane %v674, 0
      %v711 = vadd.f32 %v707, %v709
      %712 = vst.msk [vmem:[%s314] sm:$0xff] %vm324, %v711
      %p713 = scmp.lt.s32.totalorder %s19, 1
      %s714 = scalar_select %p713, %s19, 1
      %s715 = smul.addr %s714, 8
      %s716 = scalar_lea.vmem %s8, %s715
      // Predicated region
      $region53: #{decoder_forward.7} parent=51 // pred_check
        %p717 = pneg %p215
      $region54: #{decoder_forward.7} parent=51 // pred_check_branch
        %719 = sbr.rel (%p717) target = $region56
      $region55: #{decoder_forward.7} parent=51 // pred_region
        _
      $region56: #{decoder_forward.7} parent=51 // pred_fallthru
        _
    $region52: #{decoder_forward.7} parent=5 // pred_fallthru
      _
    %p720 = scmp.le.s32.totalorder 2, %s14
    // Predicated region
    $region57: #{decoder_forward.7} parent=5 // pred_check
      %p721 = pneg %p720
    $region58: #{decoder_forward.7} parent=5 // pred_check_branch
      %723 = sbr.rel (%p721) target = $region60
    $region59: #{decoder_forward.7} parent=5 // pred_region
      %s724 = ssub.s32 %s14, 2
      // Predicated region
      $region61: #{decoder_forward.7} parent=59 // pred_check
        %p725 = pneg %p221
      $region62: #{decoder_forward.7} parent=59 // pred_check_branch
        %727 = sbr.rel (%p725) target = $region64
      $region63: #{decoder_forward.7} parent=59 // pred_region
        %p728 = scmp.lt.s32.totalorder %s20, 1
        %s729 = scalar_select %p728, %s20, 1
        %s730 = smul.addr %s729, 8
        %s731 = scalar_lea.vmem %s8, %s730
      $region64: #{decoder_forward.7} parent=59 // pred_fallthru
        _
    $region60: #{decoder_forward.7} parent=5 // pred_fallthru
      _
  $region6: #{decoder_forward.7} parent=0 // loop_footer
    %s18 = sadd.s32 1, %s14
  $region7: #{decoder_forward.7} parent=0 // loop_footer_branch
    %13 = sbr.rel target = $region3
  $region8: #{decoder_forward.7} parent=0 // loop_exit
    _

// kernel: decoder_forward.8
$region0: #{decoder_forward.8}
  #allocation0 [shape = 'u32[]', space=smem, size = 0x4, offset = 0x4, fixed_abs, tag = 'smem constant byte address 0x4 - core index']
  #allocation1 [shape = 'u32[72,128]{1,0:T(1,128)}', space=vmem, size = 0x9000, scoped, tag = 'internal scratch']
  #allocation2 [shape = 'f32[8,32]{1,0:T(8,128)}', space=vmem, size = 0x1000, scoped, tag = 'scratch operand']
  %s0 = inlined_call_operand.vmem [shape: f32[2,8,32], index: 0, kind: input, shape index: {}]
  %s1 = inlined_call_operand.vmem [shape: f32[2,8,32], index: 1, kind: input, shape index: {}]
  %s2 = inlined_call_operand.vmem [shape: f32[32,32], index: 2, kind: input, shape index: {}]
  %s3 = inlined_call_operand.vmem [shape: f32[1,32], index: 3, kind: input, shape index: {}]
  %s4 = inlined_call_operand.vmem [shape: f32[32,64], index: 4, kind: input, shape index: {}]
  %s5 = inlined_call_operand.vmem [shape: f32[1,64], index: 5, kind: input, shape index: {}]
  %s6 = inlined_call_operand.vmem [shape: f32[32,32], index: 6, kind: input, shape index: {}]
  %s7 = inlined_call_operand.vmem [shape: f32[1,32], index: 7, kind: input, shape index: {}]
  %s8 = inlined_call_operand.vmem [shape: f32[1,32], index: 8, kind: input, shape index: {}]
  %s9 = inlined_call_operand.vmem [shape: f32[1,32], index: 9, kind: input, shape index: {}]
  %s10 = inlined_call_operand.vmem [shape: f32[2,8,32], index: 10, kind: output, shape index: {}]
  %s11 = sld [smem:[#allocation0]]
  $region73: #{decoder_forward.8} parent=0
    _
  %s13 = ssub.s32 1, %s11
  %s14 = scalar_select 0, %s13, %s11
  loop: start=0, step=1, limit=4
  $region2: #{decoder_forward.8} parent=0 // loop_pre_header
    _
  $region3: #{decoder_forward.8} parent=0 // loop_header
    %s16 = sphi 0, %s20
    %p17 = scmp.ge.s32.totalorder %s16, 4
    %s26 = sphi 0, %s28
    %s29 = sphi 0, %s26
    %s30 = sphi 0, %s29
    %s46 = sphi 0, %s30
    %s52 = sphi 0, %s54
    %s55 = sphi 0, %s52
    %s56 = sphi 0, %s55
    %s72 = sphi 0, %s56
    %s76 = sphi 0, %s76
    %s78 = sphi 0, %s76
    %s79 = sphi 0, %s78
    %s93 = sphi 0, %s79
    %s97 = sphi 0, %s97
    %s99 = sphi 0, %s97
    %s100 = sphi 0, %s99
    %s114 = sphi 0, %s100
    %s118 = sphi 0, %s118
    %s120 = sphi 0, %s118
    %s121 = sphi 0, %s120
    %s135 = sphi 0, %s121
    %s139 = sphi 0, %s139
    %s141 = sphi 0, %s139
    %s142 = sphi 0, %s141
    %s156 = sphi 0, %s142
    %s160 = sphi 0, %s160
    %s162 = sphi 0, %s160
    %s163 = sphi 0, %s162
    %s177 = sphi 0, %s163
    %s181 = sphi 0, %s181
    %s183 = sphi 0, %s181
    %s184 = sphi 0, %s183
    %s198 = sphi 0, %s184
    %s202 = sphi 0, %s202
    %s204 = sphi 0, %s202
    %s205 = sphi 0, %s204
    %s219 = sphi 0, %s205
    %s223 = sphi 0, %s223
    %s225 = sphi 0, %s223
    %s226 = sphi 0, %s225
    %s240 = sphi 0, %s226
    %s246 = sphi 0, %s248
    %s249 = sphi 0, %s246
    %s250 = sphi 0, %s249
    %s266 = sphi 0, %s250
  $region4: #{decoder_forward.8} parent=0 // loop_header_branch
    %19 = sbr.rel (%p17) target = $region8
  $region5: #{decoder_forward.8} parent=0 // loop_body
    %s21 = ssub.s32 %s16, 1
    %s22 = ssub.s32 %s16, 2
    %s23 = sadd.s32 %s16, 1
    %s24 = ssub.s32 %s16, %s23
    %p25 = scmp.eq.s32.totalorder %s24, 0
    %s27 = sadd.s32 %s26, 1
    %s28 = scalar_select %p25, %s26, %s27
    %p31 = pneg %p25
    %p32 = scmp.eq.s32.totalorder %s16, 1
    %p33 = por %p31, %p32
    %p34 = scmp.ne.s32.totalorder %s26, %s29
    %p35 = scmp.eq.s32.totalorder %s16, 0
    %p36 = por %p34, %p35
    %p37 = scmp.ne.s32.totalorder %s26, %s29
    %p38 = scmp.eq.s32.totalorder %s21, 1
    %p39 = por %p37, %p38
    %p40 = scmp.ne.s32.totalorder %s29, %s30
    %p41 = scmp.eq.s32.totalorder %s21, 0
    %p42 = por %p40, %p41
    %p43 = scmp.ne.s32.totalorder %s29, %s30
    %p44 = scmp.eq.s32.totalorder %s22, 1
    %p45 = por %p43, %p44
    %p47 = scmp.ne.s32.totalorder %s30, %s46
    %p48 = scmp.eq.s32.totalorder %s22, 0
    %p49 = por %p47, %p48
    %s50 = ssub.s32 %s16, %s23
    %p51 = scmp.eq.s32.totalorder %s50, 0
    %s53 = sadd.s32 %s52, 1
    %s54 = scalar_select %p51, %s52, %s53
    %p57 = pneg %p51
    %p58 = scmp.eq.s32.totalorder %s16, 1
    %p59 = por %p57, %p58
    %p60 = scmp.ne.s32.totalorder %s52, %s55
    %p61 = scmp.eq.s32.totalorder %s16, 0
    %p62 = por %p60, %p61
    %p63 = scmp.ne.s32.totalorder %s52, %s55
    %p64 = scmp.eq.s32.totalorder %s21, 1
    %p65 = por %p63, %p64
    %p66 = scmp.ne.s32.totalorder %s55, %s56
    %p67 = scmp.eq.s32.totalorder %s21, 0
    %p68 = por %p66, %p67
    %p69 = scmp.ne.s32.totalorder %s55, %s56
    %p70 = scmp.eq.s32.totalorder %s22, 1
    %p71 = por %p69, %p70
    %p73 = scmp.ne.s32.totalorder %s56, %s72
    %p74 = scmp.eq.s32.totalorder %s22, 0
    %p75 = por %p73, %p74
    %s77 = sadd.s32 %s76, 1
    %p80 = scmp.eq.s32.totalorder %s16, 1
    %p81 = scmp.ne.s32.totalorder %s76, %s78
    %p82 = scmp.eq.s32.totalorder %s16, 0
    %p83 = por %p81, %p82
    %p84 = scmp.ne.s32.totalorder %s76, %s78
    %p85 = scmp.eq.s32.totalorder %s21, 1
    %p86 = por %p84, %p85
    %p87 = scmp.ne.s32.totalorder %s78, %s79
    %p88 = scmp.eq.s32.totalorder %s21, 0
    %p89 = por %p87, %p88
    %p90 = scmp.ne.s32.totalorder %s78, %s79
    %p91 = scmp.eq.s32.totalorder %s22, 1
    %p92 = por %p90, %p91
    %p94 = scmp.ne.s32.totalorder %s79, %s93
    %p95 = scmp.eq.s32.totalorder %s22, 0
    %p96 = por %p94, %p95
    %s98 = sadd.s32 %s97, 1
    %p101 = scmp.eq.s32.totalorder %s16, 1
    %p102 = scmp.ne.s32.totalorder %s97, %s99
    %p103 = scmp.eq.s32.totalorder %s16, 0
    %p104 = por %p102, %p103
    %p105 = scmp.ne.s32.totalorder %s97, %s99
    %p106 = scmp.eq.s32.totalorder %s21, 1
    %p107 = por %p105, %p106
    %p108 = scmp.ne.s32.totalorder %s99, %s100
    %p109 = scmp.eq.s32.totalorder %s21, 0
    %p110 = por %p108, %p109
    %p111 = scmp.ne.s32.totalorder %s99, %s100
    %p112 = scmp.eq.s32.totalorder %s22, 1
    %p113 = por %p111, %p112
    %p115 = scmp.ne.s32.totalorder %s100, %s114
    %p116 = scmp.eq.s32.totalorder %s22, 0
    %p117 = por %p115, %p116
    %s119 = sadd.s32 %s118, 1
    %p122 = scmp.eq.s32.totalorder %s16, 1
    %p123 = scmp.ne.s32.totalorder %s118, %s120
    %p124 = scmp.eq.s32.totalorder %s16, 0
    %p125 = por %p123, %p124
    %p126 = scmp.ne.s32.totalorder %s118, %s120
    %p127 = scmp.eq.s32.totalorder %s21, 1
    %p128 = por %p126, %p127
    %p129 = scmp.ne.s32.totalorder %s120, %s121
    %p130 = scmp.eq.s32.totalorder %s21, 0
    %p131 = por %p129, %p130
    %p132 = scmp.ne.s32.totalorder %s120, %s121
    %p133 = scmp.eq.s32.totalorder %s22, 1
    %p134 = por %p132, %p133
    %p136 = scmp.ne.s32.totalorder %s121, %s135
    %p137 = scmp.eq.s32.totalorder %s22, 0
    %p138 = por %p136, %p137
    %s140 = sadd.s32 %s139, 1
    %p143 = scmp.eq.s32.totalorder %s16, 1
    %p144 = scmp.ne.s32.totalorder %s139, %s141
    %p145 = scmp.eq.s32.totalorder %s16, 0
    %p146 = por %p144, %p145
    %p147 = scmp.ne.s32.totalorder %s139, %s141
    %p148 = scmp.eq.s32.totalorder %s21, 1
    %p149 = por %p147, %p148
    %p150 = scmp.ne.s32.totalorder %s141, %s142
    %p151 = scmp.eq.s32.totalorder %s21, 0
    %p152 = por %p150, %p151
    %p153 = scmp.ne.s32.totalorder %s141, %s142
    %p154 = scmp.eq.s32.totalorder %s22, 1
    %p155 = por %p153, %p154
    %p157 = scmp.ne.s32.totalorder %s142, %s156
    %p158 = scmp.eq.s32.totalorder %s22, 0
    %p159 = por %p157, %p158
    %s161 = sadd.s32 %s160, 1
    %p164 = scmp.eq.s32.totalorder %s16, 1
    %p165 = scmp.ne.s32.totalorder %s160, %s162
    %p166 = scmp.eq.s32.totalorder %s16, 0
    %p167 = por %p165, %p166
    %p168 = scmp.ne.s32.totalorder %s160, %s162
    %p169 = scmp.eq.s32.totalorder %s21, 1
    %p170 = por %p168, %p169
    %p171 = scmp.ne.s32.totalorder %s162, %s163
    %p172 = scmp.eq.s32.totalorder %s21, 0
    %p173 = por %p171, %p172
    %p174 = scmp.ne.s32.totalorder %s162, %s163
    %p175 = scmp.eq.s32.totalorder %s22, 1
    %p176 = por %p174, %p175
    %p178 = scmp.ne.s32.totalorder %s163, %s177
    %p179 = scmp.eq.s32.totalorder %s22, 0
    %p180 = por %p178, %p179
    %s182 = sadd.s32 %s181, 1
    %p185 = scmp.eq.s32.totalorder %s16, 1
    %p186 = scmp.ne.s32.totalorder %s181, %s183
    %p187 = scmp.eq.s32.totalorder %s16, 0
    %p188 = por %p186, %p187
    %p189 = scmp.ne.s32.totalorder %s181, %s183
    %p190 = scmp.eq.s32.totalorder %s21, 1
    %p191 = por %p189, %p190
    %p192 = scmp.ne.s32.totalorder %s183, %s184
    %p193 = scmp.eq.s32.totalorder %s21, 0
    %p194 = por %p192, %p193
    %p195 = scmp.ne.s32.totalorder %s183, %s184
    %p196 = scmp.eq.s32.totalorder %s22, 1
    %p197 = por %p195, %p196
    %p199 = scmp.ne.s32.totalorder %s184, %s198
    %p200 = scmp.eq.s32.totalorder %s22, 0
    %p201 = por %p199, %p200
    %s203 = sadd.s32 %s202, 1
    %p206 = scmp.eq.s32.totalorder %s16, 1
    %p207 = scmp.ne.s32.totalorder %s202, %s204
    %p208 = scmp.eq.s32.totalorder %s16, 0
    %p209 = por %p207, %p208
    %p210 = scmp.ne.s32.totalorder %s202, %s204
    %p211 = scmp.eq.s32.totalorder %s21, 1
    %p212 = por %p210, %p211
    %p213 = scmp.ne.s32.totalorder %s204, %s205
    %p214 = scmp.eq.s32.totalorder %s21, 0
    %p215 = por %p213, %p214
    %p216 = scmp.ne.s32.totalorder %s204, %s205
    %p217 = scmp.eq.s32.totalorder %s22, 1
    %p218 = por %p216, %p217
    %p220 = scmp.ne.s32.totalorder %s205, %s219
    %p221 = scmp.eq.s32.totalorder %s22, 0
    %p222 = por %p220, %p221
    %s224 = sadd.s32 %s223, 1
    %p227 = scmp.eq.s32.totalorder %s16, 1
    %p228 = scmp.ne.s32.totalorder %s223, %s225
    %p229 = scmp.eq.s32.totalorder %s16, 0
    %p230 = por %p228, %p229
    %p231 = scmp.ne.s32.totalorder %s223, %s225
    %p232 = scmp.eq.s32.totalorder %s21, 1
    %p233 = por %p231, %p232
    %p234 = scmp.ne.s32.totalorder %s225, %s226
    %p235 = scmp.eq.s32.totalorder %s21, 0
    %p236 = por %p234, %p235
    %p237 = scmp.ne.s32.totalorder %s225, %s226
    %p238 = scmp.eq.s32.totalorder %s22, 1
    %p239 = por %p237, %p238
    %p241 = scmp.ne.s32.totalorder %s226, %s240
    %p242 = scmp.eq.s32.totalorder %s22, 0
    %p243 = por %p241, %p242
    %s244 = ssub.s32 %s16, %s23
    %p245 = scmp.eq.s32.totalorder %s244, 0
    %s247 = sadd.s32 %s246, 1
    %s248 = scalar_select %p245, %s246, %s247
    %p251 = pneg %p245
    %p252 = scmp.eq.s32.totalorder %s16, 1
    %p253 = por %p251, %p252
    %p254 = scmp.ne.s32.totalorder %s246, %s249
    %p255 = scmp.eq.s32.totalorder %s16, 0
    %p256 = por %p254, %p255
    %p257 = scmp.ne.s32.totalorder %s246, %s249
    %p258 = scmp.eq.s32.totalorder %s21, 1
    %p259 = por %p257, %p258
    %p260 = scmp.ne.s32.totalorder %s249, %s250
    %p261 = scmp.eq.s32.totalorder %s21, 0
    %p262 = por %p260, %p261
    %p263 = scmp.ne.s32.totalorder %s249, %s250
    %p264 = scmp.eq.s32.totalorder %s22, 1
    %p265 = por %p263, %p264
    %p267 = scmp.ne.s32.totalorder %s250, %s266
    %p268 = scmp.eq.s32.totalorder %s22, 0
    %p269 = por %p267, %p268
    %p270 = scmp.le.s32.totalorder 1, %s16
    %p271 = scmp.lt.s32.totalorder %s16, 3
    %p272 = pnand %p270, %p271
    %p273 = pneg %p272
    // Predicated region
    $region9: #{decoder_forward.8} parent=5 // pred_check
      _
    $region10: #{decoder_forward.8} parent=5 // pred_check_branch
      %275 = sbr.rel (%p272) target = $region12
    $region11: #{decoder_forward.8} parent=5 // pred_region
      %s276 = ssub.s32 %s16, 1
      // Predicated region
      $region13: #{decoder_forward.8} parent=11 // pred_check
        %p277 = pneg %p89
      $region14: #{decoder_forward.8} parent=11 // pred_check_branch
        %279 = sbr.rel (%p277) target = $region16
      $region15: #{decoder_forward.8} parent=11 // pred_region
        _
      $region16: #{decoder_forward.8} parent=11 // pred_fallthru
        _
      // Predicated region
      $region17: #{decoder_forward.8} parent=11 // pred_check
        %p280 = pneg %p110
      $region18: #{decoder_forward.8} parent=11 // pred_check_branch
        %282 = sbr.rel (%p280) target = $region20
      $region19: #{decoder_forward.8} parent=11 // pred_region
        _
      $region20: #{decoder_forward.8} parent=11 // pred_fallthru
        _
      // Predicated region
      $region21: #{decoder_forward.8} parent=11 // pred_check
        %p283 = pneg %p131
      $region22: #{decoder_forward.8} parent=11 // pred_check_branch
        %285 = sbr.rel (%p283) target = $region24
      $region23: #{decoder_forward.8} parent=11 // pred_region
        _
      $region24: #{decoder_forward.8} parent=11 // pred_fallthru
        _
      // Predicated region
      $region25: #{decoder_forward.8} parent=11 // pred_check
        %p286 = pneg %p152
      $region26: #{decoder_forward.8} parent=11 // pred_check_branch
        %288 = sbr.rel (%p286) target = $region28
      $region27: #{decoder_forward.8} parent=11 // pred_region
        _
      $region28: #{decoder_forward.8} parent=11 // pred_fallthru
        _
      // Predicated region
      $region29: #{decoder_forward.8} parent=11 // pred_check
        %p289 = pneg %p173
      $region30: #{decoder_forward.8} parent=11 // pred_check_branch
        %291 = sbr.rel (%p289) target = $region32
      $region31: #{decoder_forward.8} parent=11 // pred_region
        _
      $region32: #{decoder_forward.8} parent=11 // pred_fallthru
        _
      // Predicated region
      $region33: #{decoder_forward.8} parent=11 // pred_check
        %p292 = pneg %p194
      $region34: #{decoder_forward.8} parent=11 // pred_check_branch
        %294 = sbr.rel (%p292) target = $region36
      $region35: #{decoder_forward.8} parent=11 // pred_region
        _
      $region36: #{decoder_forward.8} parent=11 // pred_fallthru
        _
      // Predicated region
      $region37: #{decoder_forward.8} parent=11 // pred_check
        %p295 = pneg %p215
      $region38: #{decoder_forward.8} parent=11 // pred_check_branch
        %297 = sbr.rel (%p295) target = $region40
      $region39: #{decoder_forward.8} parent=11 // pred_region
        _
      $region40: #{decoder_forward.8} parent=11 // pred_fallthru
        _
      // Predicated region
      $region41: #{decoder_forward.8} parent=11 // pred_check
        %p298 = pneg %p236
      $region42: #{decoder_forward.8} parent=11 // pred_check_branch
        %300 = sbr.rel (%p298) target = $region44
      $region43: #{decoder_forward.8} parent=11 // pred_region
        _
      $region44: #{decoder_forward.8} parent=11 // pred_fallthru
        _
    $region12: #{decoder_forward.8} parent=5 // pred_fallthru
      _
    %p301 = scmp.lt.s32.totalorder %s16, 2
    // Predicated region
    $region45: #{decoder_forward.8} parent=5 // pred_check
      %p302 = pneg %p301
    $region46: #{decoder_forward.8} parent=5 // pred_check_branch
      %304 = sbr.rel (%p302) target = $region48
    $region47: #{decoder_forward.8} parent=5 // pred_region
      // Predicated region
      $region49: #{decoder_forward.8} parent=47 // pred_check
        %p305 = pneg %p36
      $region50: #{decoder_forward.8} parent=47 // pred_check_branch
        %307 = sbr.rel (%p305) target = $region52
      $region51: #{decoder_forward.8} parent=47 // pred_region
        %p308 = scmp.lt.s32.totalorder %s16, 1
        %s309 = scalar_select %p308, %s16, 1
        %s310 = smul.addr %s309, 8
        %s311 = scalar_lea.vmem %s0, %s310
      $region52: #{decoder_forward.8} parent=47 // pred_fallthru
        _
      // Predicated region
      $region53: #{decoder_forward.8} parent=47 // pred_check
        %p312 = pneg %p62
      $region54: #{decoder_forward.8} parent=47 // pred_check_branch
        %314 = sbr.rel (%p312) target = $region56
      $region55: #{decoder_forward.8} parent=47 // pred_region
        %p315 = scmp.lt.s32.totalorder %s16, 1
        %s316 = scalar_select %p315, %s16, 1
        %s317 = smul.addr %s316, 8
        %s318 = scalar_lea.vmem %s1, %s317
      $region56: #{decoder_forward.8} parent=47 // pred_fallthru
        _
    $region48: #{decoder_forward.8} parent=5 // pred_fallthru
      _
    %p319 = scmp.le.s32.totalorder 1, %s16
    %p320 = scmp.lt.s32.totalorder %s16, 3
    %p321 = pnand %p319, %p320
    %p322 = pneg %p321
    // Predicated region
    $region57: #{decoder_forward.8} parent=5 // pred_check
      _
    $region58: #{decoder_forward.8} parent=5 // pred_check_branch
      %324 = sbr.rel (%p321) target = $region60
    $region59: #{decoder_forward.8} parent=5 // pred_region
      %s325 = ssub.s32 %s16, 1
      %p326 = scmp.lt.s32.totalorder %s21, 1
      %s327 = scalar_select %p326, %s21, 1
      %s328 = smul.addr %s327, 8
      %s329 = scalar_lea.vmem %s0, %s328
      %p330 = pneg %p42
      %p331 = pneg %p39
      %p332 = scmp.lt.s32.totalorder %s21, 1
      %s333 = scalar_select %p332, %s21, 1
      %s334 = smul.addr %s333, 8
      %s335 = scalar_lea.vmem %s1, %s334
      %p336 = pneg %p68
      %p337 = pneg %p65
      %p338 = pneg %p89
      %p339 = pneg %p86
      %p340 = pneg %p110
      %p341 = pneg %p107
      %p342 = pneg %p131
      %p343 = pneg %p128
      %p344 = pneg %p152
      %p345 = pneg %p149
      %p346 = pneg %p173
      %p347 = pneg %p170
      %p348 = pneg %p194
      %p349 = pneg %p191
      %p350 = pneg %p215
      %p351 = pneg %p212
      %p352 = pneg %p236
      %p353 = pneg %p233
      %p354 = pneg %p262
      %p355 = pneg %p259
      %p356 = scmp.lt.s32.totalorder %s21, 1
      %s357 = scalar_select %p356, %s21, 1
      %s358 = smul.addr %s357, 8
      %s359 = scalar_lea.vmem %s10, %s358
      %p360 = scmp.lt.s32.totalorder %s21, 1
      %s361 = scalar_select %p360, %s21, 1
      %s362 = smul.addr %s361, 8
      %s363 = scalar_lea.vmem %s0, %s362
      %p364 = scmp.lt.s32.totalorder %s21, 1
      %s365 = scalar_select %p364, %s21, 1
      %s366 = smul.addr %s365, 8
      %s367 = scalar_lea.vmem %s1, %s366
      %p368 = scmp.lt.s32.totalorder %s21, 1
      %s369 = scalar_select %p368, %s21, 1
      %s370 = smul.addr %s369, 8
      %s371 = scalar_lea.vmem %s10, %s370
      %v372 = vld [vmem:[%s363] sm:$0xff]
      %v373 = vld [vmem:[%s367] sm:$0xff]
      %v374 = vld [vmem:[%s2] sm:$0xff]
      %v375 = vld [vmem:[%s2 + $0x8] sm:$0xff]
      %v376 = vld [vmem:[%s2 + $0x10] sm:$0xff]
      %v377 = vld [vmem:[%s2 + $0x18] sm:$0xff]
      %v378 = vld [vmem:[%s3] sm:$0x1]
      %v380 = vperm.slane %v378, 0
      %vm382 = vcmask 261120
      %v384 = vsel %vm382, %v372, 0
      %386 = vmatpush.msra.mxu0 0.0
      %387 = vmatpush.msra.mxu0 0.0
      %388 = vmatpush.msra.mxu0 0.0
      %389 = vmatpush.msra.mxu0 0.0
      %390 = vmatpush.msra.mxu0 0.0
      %391 = vmatpush.msra.mxu0 0.0
      %392 = vmatpush.msra.mxu0 0.0
      %393 = vmatpush.msra.mxu0 0.0
      %394 = vmatpush.msra.mxu0 0.0
      %395 = vmatpush.msra.mxu0 0.0
      %396 = vmatpush.msra.mxu0 0.0
      %397 = vmatpush.msra.mxu0 0.0
      %398 = vmatpush.msra.mxu0 %v377
      %399 = vmatpush.msra.mxu0 %v376
      %400 = vmatpush.msra.mxu0 %v375
      %401 = vmatpush.msra.mxu0 %v374
      %402 = vmatmul.f32.gmra.mxu0 %v384
      %v403 = vpop.f32.mrf.mxu0
      %v404 = vadd.f32 %v380, %v403
      %405 = vdwg.mxu0
      %v406 = vld [vmem:[%s4] sm:$0xff]
      %v407 = vld [vmem:[%s4 + $0x8] sm:$0xff]
      %v408 = vld [vmem:[%s4 + $0x10] sm:$0xff]
      %v409 = vld [vmem:[%s4 + $0x18] sm:$0xff]
      %v410 = vld [vmem:[%s5] sm:$0x1]
      %v412 = vperm.slane %v410, 0
      %v415 = vsel %vm382, %v373, 0
      %417 = vmatpush.msra.mxu0 0.0
      %418 = vmatpush.msra.mxu0 0.0
      %419 = vmatpush.msra.mxu0 0.0
      %420 = vmatpush.msra.mxu0 0.0
      %421 = vmatpush.msra.mxu0 0.0
      %422 = vmatpush.msra.mxu0 0.0
      %423 = vmatpush.msra.mxu0 0.0
      %424 = vmatpush.msra.mxu0 0.0
      %425 = vmatpush.msra.mxu0 0.0
      %426 = vmatpush.msra.mxu0 0.0
      %427 = vmatpush.msra.mxu0 0.0
      %428 = vmatpush.msra.mxu0 0.0
      %429 = vmatpush.msra.mxu0 %v409
      %430 = vmatpush.msra.mxu0 %v408
      %431 = vmatpush.msra.mxu0 %v407
      %432 = vmatpush.msra.mxu0 %v406
      %433 = vmatmul.f32.gmra.mxu0 %v415
      %v434 = vpop.f32.mrf.mxu0
      %v435 = vadd.f32 %v412, %v434
      %436 = vdwg.mxu0
      %v437 = vmul.f32 %v404, 0.35355338
      %vm438 = vcmask 64512
      %v440 = vsel %vm438, %v437, 0
      %v443 = vsel %vm438, %v435, 0
      %445 = vmatpush.xpose.msra.mxu0 0.0
      %446 = vmatpush.xpose.msra.mxu0 0.0
      %447 = vmatpush.xpose.msra.mxu0 0.0
      %448 = vmatpush.xpose.msra.mxu0 0.0
      %449 = vmatpush.xpose.msra.mxu0 0.0
      %450 = vmatpush.xpose.msra.mxu0 0.0
      %451 = vmatpush.xpose.msra.mxu0 0.0
      %452 = vmatpush.xpose.msra.mxu0 0.0
      %453 = vmatpush.xpose.msra.mxu0 0.0
      %454 = vmatpush.xpose.msra.mxu0 0.0
      %455 = vmatpush.xpose.msra.mxu0 0.0
      %456 = vmatpush.xpose.msra.mxu0 0.0
      %457 = vmatpush.xpose.msra.mxu0 0.0
      %458 = vmatpush.xpose.msra.mxu0 0.0
      %459 = vmatpush.xpose.msra.mxu0 0.0
      %460 = vmatpush.xpose.msra.mxu0 %v443
      %461 = vmatmul.f32.gmra.mxu0 %v440
      %v462 = vpop.f32.mrf.mxu0
      %v463 = vadd.f32 0.0, %v462
      %464 = vdwg.mxu0
      %v465 = vsel %vm438, %v463, -inf
      %466 = vmax.xlane.f32.xlu0 %v465
      %v467 = vpop.xlane.xlu0 %466
      %v468 = vsub.f32 %v463, %v467
      %v469 = vmul.f32 %v468, 1.442695
      %v470 = vpow.pop %v469
      %v471 = vsel %vm438, %v470, 0.0
      %472 = vadd.xlane.f32.xlu0 %v471
      %v473 = vpop.xlane.xlu0 %472
      %v474 = vrcp.pop %v473
      %v475 = vmul.f32 %v470, %v474
      %476 = vrot.lane.b32.xlu0 %v435, 96
      %v477 = vpop.permute.xlu0 %476
      %v480 = vsel %vm438, %v475, 0
      %482 = vmatpush.msra.mxu0 0.0
      %483 = vmatpush.msra.mxu0 0.0
      %484 = vmatpush.msra.mxu0 0.0
      %485 = vmatpush.msra.mxu0 0.0
      %486 = vmatpush.msra.mxu0 0.0
      %487 = vmatpush.msra.mxu0 0.0
      %488 = vmatpush.msra.mxu0 0.0
      %489 = vmatpush.msra.mxu0 0.0
      %490 = vmatpush.msra.mxu0 0.0
      %491 = vmatpush.msra.mxu0 0.0
      %492 = vmatpush.msra.mxu0 0.0
      %493 = vmatpush.msra.mxu0 0.0
      %494 = vmatpush.msra.mxu0 0.0
      %495 = vmatpush.msra.mxu0 0.0
      %496 = vmatpush.msra.mxu0 0.0
      %497 = vmatpush.msra.mxu0 %v477
      %498 = vmatmul.f32.gmra.mxu0 %v480
      %v499 = vpop.f32.mrf.mxu0
      %v500 = vadd.f32 0.0, %v499
      %501 = vdwg.mxu0
      %502 = vst.msk [vmem:[#allocation2] sm:$0xff] %vm438, %v500
      %503 = vrot.lane.b32.xlu0 %v437, 120
      %v504 = vpop.permute.xlu0 %503
      %505 = vrot.lane.b32.xlu0 %v435, 120
      %v506 = vpop.permute.xlu0 %505
      %v507 = vsel %vm438, %v504, 0
      %v509 = vsel %vm438, %v506, 0
      %511 = vmatpush.xpose.msra.mxu0 0.0
      %512 = vmatpush.xpose.msra.mxu0 0.0
      %513 = vmatpush.xpose.msra.mxu0 0.0
      %514 = vmatpush.xpose.msra.mxu0 0.0
      %515 = vmatpush.xpose.msra.mxu0 0.0
      %516 = vmatpush.xpose.msra.mxu0 0.0
      %517 = vmatpush.xpose.msra.mxu0 0.0
      %518 = vmatpush.xpose.msra.mxu0 0.0
      %519 = vmatpush.xpose.msra.mxu0 0.0
      %520 = vmatpush.xpose.msra.mxu0 0.0
      %521 = vmatpush.xpose.msra.mxu0 0.0
      %522 = vmatpush.xpose.msra.mxu0 0.0
      %523 = vmatpush.xpose.msra.mxu0 0.0
      %524 = vmatpush.xpose.msra.mxu0 0.0
      %525 = vmatpush.xpose.msra.mxu0 0.0
      %526 = vmatpush.xpose.msra.mxu0 %v509
      %527 = vmatmul.f32.gmra.mxu0 %v507
      %v528 = vpop.f32.mrf.mxu0
      %v529 = vadd.f32 0.0, %v528
      %530 = vdwg.mxu0
      %v531 = vsel %vm438, %v529, -inf
      %532 = vmax.xlane.f32.xlu0 %v531
      %v533 = vpop.xlane.xlu0 %532
      %v534 = vsub.f32 %v529, %v533
      %v535 = vmul.f32 %v534, 1.442695
      %v536 = vpow.pop %v535
      %v537 = vsel %vm438, %v536, 0.0
      %538 = vadd.xlane.f32.xlu0 %v537
      %v539 = vpop.xlane.xlu0 %538
      %v540 = vrcp.pop %v539
      %v541 = vmul.f32 %v536, %v540
      %542 = vrot.lane.b32.xlu0 %v435, 88
      %v543 = vpop.permute.xlu0 %542
      %v546 = vsel %vm438, %v541, 0
      %548 = vmatpush.msra.mxu0 0.0
      %549 = vmatpush.msra.mxu0 0.0
      %550 = vmatpush.msra.mxu0 0.0
      %551 = vmatpush.msra.mxu0 0.0
      %552 = vmatpush.msra.mxu0 0.0
      %553 = vmatpush.msra.mxu0 0.0
      %554 = vmatpush.msra.mxu0 0.0
      %555 = vmatpush.msra.mxu0 0.0
      %556 = vmatpush.msra.mxu0 0.0
      %557 = vmatpush.msra.mxu0 0.0
      %558 = vmatpush.msra.mxu0 0.0
      %559 = vmatpush.msra.mxu0 0.0
      %560 = vmatpush.msra.mxu0 0.0
      %561 = vmatpush.msra.mxu0 0.0
      %562 = vmatpush.msra.mxu0 0.0
      %563 = vmatpush.msra.mxu0 %v543
      %564 = vmatmul.f32.gmra.mxu0 %v546
      %v565 = vpop.f32.mrf.mxu0
      %v566 = vadd.f32 0.0, %v565
      %567 = vdwg.mxu0
      %569 = vrot.lane.b32.xlu0 %v566, 8
      %v570 = vpop.permute.xlu0 %569
      %vm572 = vcmask 130112
      %573 = vst.msk [vmem:[#allocation2] sm:$0xff] %vm572, %v570
      %574 = vrot.lane.b32.xlu0 %v437, 112
      %v575 = vpop.permute.xlu0 %574
      %576 = vrot.lane.b32.xlu0 %v435, 112
      %v577 = vpop.permute.xlu0 %576
      %v578 = vsel %vm438, %v575, 0
      %v580 = vsel %vm438, %v577, 0
      %582 = vmatpush.xpose.msra.mxu0 0.0
      %583 = vmatpush.xpose.msra.mxu0 0.0
      %584 = vmatpush.xpose.msra.mxu0 0.0
      %585 = vmatpush.xpose.msra.mxu0 0.0
      %586 = vmatpush.xpose.msra.mxu0 0.0
      %587 = vmatpush.xpose.msra.mxu0 0.0
      %588 = vmatpush.xpose.msra.mxu0 0.0
      %589 = vmatpush.xpose.msra.mxu0 0.0
      %590 = vmatpush.xpose.msra.mxu0 0.0
      %591 = vmatpush.xpose.msra.mxu0 0.0
      %592 = vmatpush.xpose.msra.mxu0 0.0
      %593 = vmatpush.xpose.msra.mxu0 0.0
      %594 = vmatpush.xpose.msra.mxu0 0.0
      %595 = vmatpush.xpose.msra.mxu0 0.0
      %596 = vmatpush.xpose.msra.mxu0 0.0
      %597 = vmatpush.xpose.msra.mxu0 %v580
      %598 = vmatmul.f32.gmra.mxu0 %v578
      %v599 = vpop.f32.mrf.mxu0
      %v600 = vadd.f32 0.0, %v599
      %601 = vdwg.mxu0
      %v602 = vsel %vm438, %v600, -inf
      %603 = vmax.xlane.f32.xlu0 %v602
      %v604 = vpop.xlane.xlu0 %603
      %v605 = vsub.f32 %v600, %v604
      %v606 = vmul.f32 %v605, 1.442695
      %v607 = vpow.pop %v606
      %v608 = vsel %vm438, %v607, 0.0
      %609 = vadd.xlane.f32.xlu0 %v608
      %v610 = vpop.xlane.xlu0 %609
      %v611 = vrcp.pop %v610
      %v612 = vmul.f32 %v607, %v611
      %613 = vrot.lane.b32.xlu0 %v435, 80
      %v614 = vpop.permute.xlu0 %613
      %v617 = vsel %vm438, %v612, 0
      %619 = vmatpush.msra.mxu0 0.0
      %620 = vmatpush.msra.mxu0 0.0
      %621 = vmatpush.msra.mxu0 0.0
      %622 = vmatpush.msra.mxu0 0.0
      %623 = vmatpush.msra.mxu0 0.0
      %624 = vmatpush.msra.mxu0 0.0
      %625 = vmatpush.msra.mxu0 0.0
      %626 = vmatpush.msra.mxu0 0.0
      %627 = vmatpush.msra.mxu0 0.0
      %628 = vmatpush.msra.mxu0 0.0
      %629 = vmatpush.msra.mxu0 0.0
      %630 = vmatpush.msra.mxu0 0.0
      %631 = vmatpush.msra.mxu0 0.0
      %632 = vmatpush.msra.mxu0 0.0
      %633 = vmatpush.msra.mxu0 0.0
      %634 = vmatpush.msra.mxu0 %v614
      %635 = vmatmul.f32.gmra.mxu0 %v617
      %v636 = vpop.f32.mrf.mxu0
      %v637 = vadd.f32 0.0, %v636
      %638 = vdwg.mxu0
      %640 = vrot.lane.b32.xlu0 %v637, 16
      %v641 = vpop.permute.xlu0 %640
      %vm643 = vcmask 195712
      %644 = vst.msk [vmem:[#allocation2] sm:$0xff] %vm643, %v641
      %645 = vrot.lane.b32.xlu0 %v437, 104
      %v646 = vpop.permute.xlu0 %645
      %647 = vrot.lane.b32.xlu0 %v435, 104
      %v648 = vpop.permute.xlu0 %647
      %v649 = vsel %vm438, %v646, 0
      %v651 = vsel %vm438, %v648, 0
      %653 = vmatpush.xpose.msra.mxu0 0.0
      %654 = vmatpush.xpose.msra.mxu0 0.0
      %655 = vmatpush.xpose.msra.mxu0 0.0
      %656 = vmatpush.xpose.msra.mxu0 0.0
      %657 = vmatpush.xpose.msra.mxu0 0.0
      %658 = vmatpush.xpose.msra.mxu0 0.0
      %659 = vmatpush.xpose.msra.mxu0 0.0
      %660 = vmatpush.xpose.msra.mxu0 0.0
      %661 = vmatpush.xpose.msra.mxu0 0.0
      %662 = vmatpush.xpose.msra.mxu0 0.0
      %663 = vmatpush.xpose.msra.mxu0 0.0
      %664 = vmatpush.xpose.msra.mxu0 0.0
      %665 = vmatpush.xpose.msra.mxu0 0.0
      %666 = vmatpush.xpose.msra.mxu0 0.0
      %667 = vmatpush.xpose.msra.mxu0 0.0
      %668 = vmatpush.xpose.msra.mxu0 %v651
      %669 = vmatmul.f32.gmra.mxu0 %v649
      %v670 = vpop.f32.mrf.mxu0
      %v671 = vadd.f32 0.0, %v670
      %672 = vdwg.mxu0
      %v673 = vsel %vm438, %v671, -inf
      %674 = vmax.xlane.f32.xlu0 %v673
      %v675 = vpop.xlane.xlu0 %674
      %v676 = vsub.f32 %v671, %v675
      %v677 = vmul.f32 %v676, 1.442695
      %v678 = vpow.pop %v677
      %v679 = vsel %vm438, %v678, 0.0
      %680 = vadd.xlane.f32.xlu0 %v679
      %v681 = vpop.xlane.xlu0 %680
      %v682 = vrcp.pop %v681
      %v683 = vmul.f32 %v678, %v682
      %684 = vrot.lane.b32.xlu0 %v435, 72
      %v685 = vpop.permute.xlu0 %684
      %v688 = vsel %vm438, %v683, 0
      %690 = vmatpush.msra.mxu0 0.0
      %691 = vmatpush.msra.mxu0 0.0
      %692 = vmatpush.msra.mxu0 0.0
      %693 = vmatpush.msra.mxu0 0.0
      %694 = vmatpush.msra.mxu0 0.0
      %695 = vmatpush.msra.mxu0 0.0
      %696 = vmatpush.msra.mxu0 0.0
      %697 = vmatpush.msra.mxu0 0.0
      %698 = vmatpush.msra.mxu0 0.0
      %699 = vmatpush.msra.mxu0 0.0
      %700 = vmatpush.msra.mxu0 0.0
      %701 = vmatpush.msra.mxu0 0.0
      %702 = vmatpush.msra.mxu0 0.0
      %703 = vmatpush.msra.mxu0 0.0
      %704 = vmatpush.msra.mxu0 0.0
      %705 = vmatpush.msra.mxu0 %v685
      %706 = vmatmul.f32.gmra.mxu0 %v688
      %v707 = vpop.f32.mrf.mxu0
      %v708 = vadd.f32 0.0, %v707
      %709 = vdwg.mxu0
      %711 = vrot.lane.b32.xlu0 %v708, 24
      %v712 = vpop.permute.xlu0 %711
      %vm714 = vcmask 261312
      %715 = vst.msk [vmem:[#allocation2] sm:$0xff] %vm714, %v712
      %v716 = vld [vmem:[#allocation2] sm:$0xff]
      %v717 = vld [vmem:[%s6] sm:$0xff]
      %v718 = vld [vmem:[%s6 + $0x8] sm:$0xff]
      %v719 = vld [vmem:[%s6 + $0x10] sm:$0xff]
      %v720 = vld [vmem:[%s6 + $0x18] sm:$0xff]
      %v721 = vld [vmem:[%s7] sm:$0x1]
      %v723 = vperm.slane %v721, 0
      %v726 = vsel %vm382, %v716, 0
      %728 = vmatpush.msra.mxu0 0.0
      %729 = vmatpush.msra.mxu0 0.0
      %730 = vmatpush.msra.mxu0 0.0
      %731 = vmatpush.msra.mxu0 0.0
      %732 = vmatpush.msra.mxu0 0.0
      %733 = vmatpush.msra.mxu0 0.0
      %734 = vmatpush.msra.mxu0 0.0
      %735 = vmatpush.msra.mxu0 0.0
      %736 = vmatpush.msra.mxu0 0.0
      %737 = vmatpush.msra.mxu0 0.0
      %738 = vmatpush.msra.mxu0 0.0
      %739 = vmatpush.msra.mxu0 0.0
      %740 = vmatpush.msra.mxu0 %v720
      %741 = vmatpush.msra.mxu0 %v719
      %742 = vmatpush.msra.mxu0 %v718
      %743 = vmatpush.msra.mxu0 %v717
      %744 = vmatmul.f32.gmra.mxu0 %v726
      %v745 = vpop.f32.mrf.mxu0
      %v746 = vadd.f32 %v723, %v745
      %747 = vdwg.mxu0
      %v748 = vadd.f32 %v372, %v746
      %v749 = vld [vmem:[%s8] sm:$0x1]
      %v750 = vld [vmem:[%s9] sm:$0x1]
      %v751 = vsel %vm382, %v748, 0.0
      %752 = vadd.xlane.f32.xlu0 %v751
      %v753 = vpop.xlane.xlu0 %752
      %v754 = vrcp.pop 32.0
      %v755 = vmul.f32 32.0, %v754
      %v756 = vsub.f32 1.0, %v755
      %v757 = vmul.f32 %v754, %v756
      %v758 = vadd.f32 %v754, %v757
      %vm759 = vweird.f32 %v754
      %v760 = vsel %vm759, %v754, %v758
      %v761 = vmul.f32 %v753, %v760
      %v762 = vsub.f32 %v748, %v761
      %v763 = vmul.f32 %v762, %v762
      %v764 = vsel %vm382, %v763, 0.0
      %765 = vadd.xlane.f32.xlu0 %v764
      %v766 = vpop.xlane.xlu0 %765
      %v767 = vmul.f32 %v766, %v760
      %v768 = vadd.f32 %v767, 1e-05
      %v769 = vrsqrt.pop %v768
      %v770 = vmul.f32 %v769, %v768
      %v771 = vmul.f32 %v770, %v769
      %v772 = vmul.f32 0.5, %v771
      %v773 = vsub.f32 1.5, %v772
      %v774 = vmul.f32 %v769, %v773
      %vm775 = vweird.f32 %v768
      %vm776 = vweird.f32 %v769
      %vm777 = vmor %vm775, %vm776
      %v778 = vsel %vm777, %v769, %v774
      %v779 = vmul.f32 %v762, %v778
      %v781 = vperm.slane %v749, 0
      %v783 = vmul.f32 %v779, %v781
      %v785 = vperm.slane %v750, 0
      %v787 = vadd.f32 %v783, %v785
      %788 = vst.msk [vmem:[%s371] sm:$0xff] %vm382, %v787
      %p789 = scmp.lt.s32.totalorder %s21, 1
      %s790 = scalar_select %p789, %s21, 1
      %s791 = smul.addr %s790, 8
      %s792 = scalar_lea.vmem %s10, %s791
      // Predicated region
      $region61: #{decoder_forward.8} parent=59 // pred_check
        %p793 = pneg %p259
      $region62: #{decoder_forward.8} parent=59 // pred_check_branch
        %795 = sbr.rel (%p793) target = $region64
      $region63: #{decoder_forward.8} parent=59 // pred_region
        _
      $region64: #{decoder_forward.8} parent=59 // pred_fallthru
        _
    $region60: #{decoder_forward.8} parent=5 // pred_fallthru
      _
    %p796 = scmp.le.s32.totalorder 2, %s16
    // Predicated region
    $region65: #{decoder_forward.8} parent=5 // pred_check
      %p797 = pneg %p796
    $region66: #{decoder_forward.8} parent=5 // pred_check_branch
      %799 = sbr.rel (%p797) target = $region68
    $region67: #{decoder_forward.8} parent=5 // pred_region
      %s800 = ssub.s32 %s16, 2
      // Predicated region
      $region69: #{decoder_forward.8} parent=67 // pred_check
        %p801 = pneg %p265
      $region70: #{decoder_forward.8} parent=67 // pred_check_branch
        %803 = sbr.rel (%p801) target = $region72
      $region71: #{decoder_forward.8} parent=67 // pred_region
        %p804 = scmp.lt.s32.totalorder %s22, 1
        %s805 = scalar_select %p804, %s22, 1
        %s806 = smul.addr %s805, 8
        %s807 = scalar_lea.vmem %s10, %s806
      $region72: #{decoder_forward.8} parent=67 // pred_fallthru
        _
    $region68: #{decoder_forward.8} parent=5 // pred_fallthru
      _
  $region6: #{decoder_forward.8} parent=0 // loop_footer
    %s20 = sadd.s32 1, %s16
  $region7: #{decoder_forward.8} parent=0 // loop_footer_branch
    %15 = sbr.rel target = $region3
  $region8: #{decoder_forward.8} parent=0 // loop_exit
    _

// kernel: decoder_forward.11
$region0: #{decoder_forward.11}
  #allocation0 [shape = 'u32[]', space=smem, size = 0x4, offset = 0x4, fixed_abs, tag = 'smem constant byte address 0x4 - core index']
  #allocation1 [shape = 'u32[72,128]{1,0:T(1,128)}', space=vmem, size = 0x9000, scoped, tag = 'internal scratch']
  #allocation2 [shape = 'f32[8,32]{1,0:T(8,128)}', space=vmem, size = 0x1000, scoped, tag = 'scratch operand']
  %s0 = inlined_call_operand.vmem [shape: f32[2,8,32], index: 0, kind: input, shape index: {}]
  %s1 = inlined_call_operand.vmem [shape: f32[2,8,32], index: 1, kind: input, shape index: {}]
  %s2 = inlined_call_operand.vmem [shape: f32[32,32], index: 2, kind: input, shape index: {}]
  %s3 = inlined_call_operand.vmem [shape: f32[1,32], index: 3, kind: input, shape index: {}]
  %s4 = inlined_call_operand.vmem [shape: f32[32,64], index: 4, kind: input, shape index: {}]
  %s5 = inlined_call_operand.vmem [shape: f32[1,64], index: 5, kind: input, shape index: {}]
  %s6 = inlined_call_operand.hbm [shape: f32[32,32], index: 6, kind: input, shape index: {}]
  %s7 = inlined_call_operand.vmem [shape: f32[1,32], index: 7, kind: input, shape index: {}]
  %s8 = inlined_call_operand.vmem [shape: f32[1,32], index: 8, kind: input, shape index: {}]
  %s9 = inlined_call_operand.vmem [shape: f32[1,32], index: 9, kind: input, shape index: {}]
  %s10 = inlined_call_operand.vmem [shape: f32[2,8,32], index: 10, kind: output, shape index: {}]
  %s11 = sld [smem:[#allocation0]]
  $region77: #{decoder_forward.11} parent=0
    _
  %s13 = ssub.s32 1, %s11
  %s14 = scalar_select 0, %s13, %s11
  $region1: #{decoder_forward.11} parent=0
    #allocation3 [shape = 'u8[16384]{0}', space=vmem, size = 0x4000, scoped, tag = 'input window, operand 6, single buffered']
    #allocation4 [shape = 's32[2]{0}', space=sflag, size = 0x8, scoped, tag = 'scoped memory for decoder_forward.11']
    %15 = vsyncpa [#allocation4], 0
    loop: start=0, step=1, limit=4
    $region2: #{decoder_forward.11} parent=1 // loop_pre_header
      _
    $region3: #{decoder_forward.11} parent=1 // loop_header
      %s17 = sphi 0, %s21
      %p18 = scmp.ge.s32.totalorder %s17, 4
      %s27 = sphi 0, %s29
      %s30 = sphi 0, %s27
      %s31 = sphi 0, %s30
      %s47 = sphi 0, %s31
      %s53 = sphi 0, %s55
      %s56 = sphi 0, %s53
      %s57 = sphi 0, %s56
      %s73 = sphi 0, %s57
      %s77 = sphi 0, %s77
      %s79 = sphi 0, %s77
      %s80 = sphi 0, %s79
      %s94 = sphi 0, %s80
      %s98 = sphi 0, %s98
      %s100 = sphi 0, %s98
      %s101 = sphi 0, %s100
      %s115 = sphi 0, %s101
      %s119 = sphi 0, %s119
      %s121 = sphi 0, %s119
      %s122 = sphi 0, %s121
      %s136 = sphi 0, %s122
      %s140 = sphi 0, %s140
      %s142 = sphi 0, %s140
      %s143 = sphi 0, %s142
      %s157 = sphi 0, %s143
      %s161 = sphi 0, %s161
      %s163 = sphi 0, %s161
      %s164 = sphi 0, %s163
      %s178 = sphi 0, %s164
      %s182 = sphi 0, %s182
      %s184 = sphi 0, %s182
      %s185 = sphi 0, %s184
      %s199 = sphi 0, %s185
      %s203 = sphi 0, %s203
      %s205 = sphi 0, %s203
      %s206 = sphi 0, %s205
      %s220 = sphi 0, %s206
      %s224 = sphi 0, %s224
      %s226 = sphi 0, %s224
      %s227 = sphi 0, %s226
      %s241 = sphi 0, %s227
      %s247 = sphi 0, %s249
      %s250 = sphi 0, %s247
      %s251 = sphi 0, %s250
      %s267 = sphi 0, %s251
    $region4: #{decoder_forward.11} parent=1 // loop_header_branch
      %20 = sbr.rel (%p18) target = $region8
    $region5: #{decoder_forward.11} parent=1 // loop_body
      %s22 = ssub.s32 %s17, 1
      %s23 = ssub.s32 %s17, 2
      %s24 = sadd.s32 %s17, 1
      %s25 = ssub.s32 %s17, %s24
      %p26 = scmp.eq.s32.totalorder %s25, 0
      %s28 = sadd.s32 %s27, 1
      %s29 = scalar_select %p26, %s27, %s28
      %p32 = pneg %p26
      %p33 = scmp.eq.s32.totalorder %s17, 1
      %p34 = por %p32, %p33
      %p35 = scmp.ne.s32.totalorder %s27, %s30
      %p36 = scmp.eq.s32.totalorder %s17, 0
      %p37 = por %p35, %p36
      %p38 = scmp.ne.s32.totalorder %s27, %s30
      %p39 = scmp.eq.s32.totalorder %s22, 1
      %p40 = por %p38, %p39
      %p41 = scmp.ne.s32.totalorder %s30, %s31
      %p42 = scmp.eq.s32.totalorder %s22, 0
      %p43 = por %p41, %p42
      %p44 = scmp.ne.s32.totalorder %s30, %s31
      %p45 = scmp.eq.s32.totalorder %s23, 1
      %p46 = por %p44, %p45
      %p48 = scmp.ne.s32.totalorder %s31, %s47
      %p49 = scmp.eq.s32.totalorder %s23, 0
      %p50 = por %p48, %p49
      %s51 = ssub.s32 %s17, %s24
      %p52 = scmp.eq.s32.totalorder %s51, 0
      %s54 = sadd.s32 %s53, 1
      %s55 = scalar_select %p52, %s53, %s54
      %p58 = pneg %p52
      %p59 = scmp.eq.s32.totalorder %s17, 1
      %p60 = por %p58, %p59
      %p61 = scmp.ne.s32.totalorder %s53, %s56
      %p62 = scmp.eq.s32.totalorder %s17, 0
      %p63 = por %p61, %p62
      %p64 = scmp.ne.s32.totalorder %s53, %s56
      %p65 = scmp.eq.s32.totalorder %s22, 1
      %p66 = por %p64, %p65
      %p67 = scmp.ne.s32.totalorder %s56, %s57
      %p68 = scmp.eq.s32.totalorder %s22, 0
      %p69 = por %p67, %p68
      %p70 = scmp.ne.s32.totalorder %s56, %s57
      %p71 = scmp.eq.s32.totalorder %s23, 1
      %p72 = por %p70, %p71
      %p74 = scmp.ne.s32.totalorder %s57, %s73
      %p75 = scmp.eq.s32.totalorder %s23, 0
      %p76 = por %p74, %p75
      %s78 = sadd.s32 %s77, 1
      %p81 = scmp.eq.s32.totalorder %s17, 1
      %p82 = scmp.ne.s32.totalorder %s77, %s79
      %p83 = scmp.eq.s32.totalorder %s17, 0
      %p84 = por %p82, %p83
      %p85 = scmp.ne.s32.totalorder %s77, %s79
      %p86 = scmp.eq.s32.totalorder %s22, 1
      %p87 = por %p85, %p86
      %p88 = scmp.ne.s32.totalorder %s79, %s80
      %p89 = scmp.eq.s32.totalorder %s22, 0
      %p90 = por %p88, %p89
      %p91 = scmp.ne.s32.totalorder %s79, %s80
      %p92 = scmp.eq.s32.totalorder %s23, 1
      %p93 = por %p91, %p92
      %p95 = scmp.ne.s32.totalorder %s80, %s94
      %p96 = scmp.eq.s32.totalorder %s23, 0
      %p97 = por %p95, %p96
      %s99 = sadd.s32 %s98, 1
      %p102 = scmp.eq.s32.totalorder %s17, 1
      %p103 = scmp.ne.s32.totalorder %s98, %s100
      %p104 = scmp.eq.s32.totalorder %s17, 0
      %p105 = por %p103, %p104
      %p106 = scmp.ne.s32.totalorder %s98, %s100
      %p107 = scmp.eq.s32.totalorder %s22, 1
      %p108 = por %p106, %p107
      %p109 = scmp.ne.s32.totalorder %s100, %s101
      %p110 = scmp.eq.s32.totalorder %s22, 0
      %p111 = por %p109, %p110
      %p112 = scmp.ne.s32.totalorder %s100, %s101
      %p113 = scmp.eq.s32.totalorder %s23, 1
      %p114 = por %p112, %p113
      %p116 = scmp.ne.s32.totalorder %s101, %s115
      %p117 = scmp.eq.s32.totalorder %s23, 0
      %p118 = por %p116, %p117
      %s120 = sadd.s32 %s119, 1
      %p123 = scmp.eq.s32.totalorder %s17, 1
      %p124 = scmp.ne.s32.totalorder %s119, %s121
      %p125 = scmp.eq.s32.totalorder %s17, 0
      %p126 = por %p124, %p125
      %p127 = scmp.ne.s32.totalorder %s119, %s121
      %p128 = scmp.eq.s32.totalorder %s22, 1
      %p129 = por %p127, %p128
      %p130 = scmp.ne.s32.totalorder %s121, %s122
      %p131 = scmp.eq.s32.totalorder %s22, 0
      %p132 = por %p130, %p131
      %p133 = scmp.ne.s32.totalorder %s121, %s122
      %p134 = scmp.eq.s32.totalorder %s23, 1
      %p135 = por %p133, %p134
      %p137 = scmp.ne.s32.totalorder %s122, %s136
      %p138 = scmp.eq.s32.totalorder %s23, 0
      %p139 = por %p137, %p138
      %s141 = sadd.s32 %s140, 1
      %p144 = scmp.eq.s32.totalorder %s17, 1
      %p145 = scmp.ne.s32.totalorder %s140, %s142
      %p146 = scmp.eq.s32.totalorder %s17, 0
      %p147 = por %p145, %p146
      %p148 = scmp.ne.s32.totalorder %s140, %s142
      %p149 = scmp.eq.s32.totalorder %s22, 1
      %p150 = por %p148, %p149
      %p151 = scmp.ne.s32.totalorder %s142, %s143
      %p152 = scmp.eq.s32.totalorder %s22, 0
      %p153 = por %p151, %p152
      %p154 = scmp.ne.s32.totalorder %s142, %s143
      %p155 = scmp.eq.s32.totalorder %s23, 1
      %p156 = por %p154, %p155
      %p158 = scmp.ne.s32.totalorder %s143, %s157
      %p159 = scmp.eq.s32.totalorder %s23, 0
      %p160 = por %p158, %p159
      %s162 = sadd.s32 %s161, 1
      %p165 = scmp.eq.s32.totalorder %s17, 1
      %p166 = scmp.ne.s32.totalorder %s161, %s163
      %p167 = scmp.eq.s32.totalorder %s17, 0
      %p168 = por %p166, %p167
      %p169 = scmp.ne.s32.totalorder %s161, %s163
      %p170 = scmp.eq.s32.totalorder %s22, 1
      %p171 = por %p169, %p170
      %p172 = scmp.ne.s32.totalorder %s163, %s164
      %p173 = scmp.eq.s32.totalorder %s22, 0
      %p174 = por %p172, %p173
      %p175 = scmp.ne.s32.totalorder %s163, %s164
      %p176 = scmp.eq.s32.totalorder %s23, 1
      %p177 = por %p175, %p176
      %p179 = scmp.ne.s32.totalorder %s164, %s178
      %p180 = scmp.eq.s32.totalorder %s23, 0
      %p181 = por %p179, %p180
      %s183 = sadd.s32 %s182, 1
      %p186 = scmp.eq.s32.totalorder %s17, 1
      %p187 = scmp.ne.s32.totalorder %s182, %s184
      %p188 = scmp.eq.s32.totalorder %s17, 0
      %p189 = por %p187, %p188
      %p190 = scmp.ne.s32.totalorder %s182, %s184
      %p191 = scmp.eq.s32.totalorder %s22, 1
      %p192 = por %p190, %p191
      %p193 = scmp.ne.s32.totalorder %s184, %s185
      %p194 = scmp.eq.s32.totalorder %s22, 0
      %p195 = por %p193, %p194
      %p196 = scmp.ne.s32.totalorder %s184, %s185
      %p197 = scmp.eq.s32.totalorder %s23, 1
      %p198 = por %p196, %p197
      %p200 = scmp.ne.s32.totalorder %s185, %s199
      %p201 = scmp.eq.s32.totalorder %s23, 0
      %p202 = por %p200, %p201
      %s204 = sadd.s32 %s203, 1
      %p207 = scmp.eq.s32.totalorder %s17, 1
      %p208 = scmp.ne.s32.totalorder %s203, %s205
      %p209 = scmp.eq.s32.totalorder %s17, 0
      %p210 = por %p208, %p209
      %p211 = scmp.ne.s32.totalorder %s203, %s205
      %p212 = scmp.eq.s32.totalorder %s22, 1
      %p213 = por %p211, %p212
      %p214 = scmp.ne.s32.totalorder %s205, %s206
      %p215 = scmp.eq.s32.totalorder %s22, 0
      %p216 = por %p214, %p215
      %p217 = scmp.ne.s32.totalorder %s205, %s206
      %p218 = scmp.eq.s32.totalorder %s23, 1
      %p219 = por %p217, %p218
      %p221 = scmp.ne.s32.totalorder %s206, %s220
      %p222 = scmp.eq.s32.totalorder %s23, 0
      %p223 = por %p221, %p222
      %s225 = sadd.s32 %s224, 1
      %p228 = scmp.eq.s32.totalorder %s17, 1
      %p229 = scmp.ne.s32.totalorder %s224, %s226
      %p230 = scmp.eq.s32.totalorder %s17, 0
      %p231 = por %p229, %p230
      %p232 = scmp.ne.s32.totalorder %s224, %s226
      %p233 = scmp.eq.s32.totalorder %s22, 1
      %p234 = por %p232, %p233
      %p235 = scmp.ne.s32.totalorder %s226, %s227
      %p236 = scmp.eq.s32.totalorder %s22, 0
      %p237 = por %p235, %p236
      %p238 = scmp.ne.s32.totalorder %s226, %s227
      %p239 = scmp.eq.s32.totalorder %s23, 1
      %p240 = por %p238, %p239
      %p242 = scmp.ne.s32.totalorder %s227, %s241
      %p243 = scmp.eq.s32.totalorder %s23, 0
      %p244 = por %p242, %p243
      %s245 = ssub.s32 %s17, %s24
      %p246 = scmp.eq.s32.totalorder %s245, 0
      %s248 = sadd.s32 %s247, 1
      %s249 = scalar_select %p246, %s247, %s248
      %p252 = pneg %p246
      %p253 = scmp.eq.s32.totalorder %s17, 1
      %p254 = por %p252, %p253
      %p255 = scmp.ne.s32.totalorder %s247, %s250
      %p256 = scmp.eq.s32.totalorder %s17, 0
      %p257 = por %p255, %p256
      %p258 = scmp.ne.s32.totalorder %s247, %s250
      %p259 = scmp.eq.s32.totalorder %s22, 1
      %p260 = por %p258, %p259
      %p261 = scmp.ne.s32.totalorder %s250, %s251
      %p262 = scmp.eq.s32.totalorder %s22, 0
      %p263 = por %p261, %p262
      %p264 = scmp.ne.s32.totalorder %s250, %s251
      %p265 = scmp.eq.s32.totalorder %s23, 1
      %p266 = por %p264, %p265
      %p268 = scmp.ne.s32.totalorder %s251, %s267
      %p269 = scmp.eq.s32.totalorder %s23, 0
      %p270 = por %p268, %p269
      %p271 = scmp.le.s32.totalorder 1, %s17
      %p272 = scmp.lt.s32.totalorder %s17, 3
      %p273 = pnand %p271, %p272
      %p274 = pneg %p273
      // Predicated region
      $region9: #{decoder_forward.11} parent=5 // pred_check
        _
      $region10: #{decoder_forward.11} parent=5 // pred_check_branch
        %276 = sbr.rel (%p273) target = $region12
      $region11: #{decoder_forward.11} parent=5 // pred_region
        %s277 = ssub.s32 %s17, 1
        // Predicated region
        $region13: #{decoder_forward.11} parent=11 // pred_check
          %p278 = pneg %p90
        $region14: #{decoder_forward.11} parent=11 // pred_check_branch
          %280 = sbr.rel (%p278) target = $region16
        $region15: #{decoder_forward.11} parent=11 // pred_region
          _
        $region16: #{decoder_forward.11} parent=11 // pred_fallthru
          _
        // Predicated region
        $region17: #{decoder_forward.11} parent=11 // pred_check
          %p281 = pneg %p111
        $region18: #{decoder_forward.11} parent=11 // pred_check_branch
          %283 = sbr.rel (%p281) target = $region20
        $region19: #{decoder_forward.11} parent=11 // pred_region
          _
        $region20: #{decoder_forward.11} parent=11 // pred_fallthru
          _
        // Predicated region
        $region21: #{decoder_forward.11} parent=11 // pred_check
          %p284 = pneg %p132
        $region22: #{decoder_forward.11} parent=11 // pred_check_branch
          %286 = sbr.rel (%p284) target = $region24
        $region23: #{decoder_forward.11} parent=11 // pred_region
          _
        $region24: #{decoder_forward.11} parent=11 // pred_fallthru
          _
        // Predicated region
        $region25: #{decoder_forward.11} parent=11 // pred_check
          %p287 = pneg %p153
        $region26: #{decoder_forward.11} parent=11 // pred_check_branch
          %289 = sbr.rel (%p287) target = $region28
        $region27: #{decoder_forward.11} parent=11 // pred_region
          _
        $region28: #{decoder_forward.11} parent=11 // pred_fallthru
          _
        // Predicated region
        $region29: #{decoder_forward.11} parent=11 // pred_check
          %p290 = pneg %p174
        $region30: #{decoder_forward.11} parent=11 // pred_check_branch
          %292 = sbr.rel (%p290) target = $region32
        $region31: #{decoder_forward.11} parent=11 // pred_region
          %294 = vsyncadd [#allocation4], 0
          %s295 = sshll.u32 %s6, 4
          %s296 = int_to_ptr.hbm [resolvable:$true] %s295
          %s297 = sshll.u32 [#allocation3], 4
          %s298 = int_to_ptr.vmem [resolvable:$true] %s297
          %303 = dma.hbm_to_vmem [thread:$0]  %s296, 512, %s298, [#allocation4], 128, 128, 8
        $region32: #{decoder_forward.11} parent=11 // pred_fallthru
          _
        // Predicated region
        $region33: #{decoder_forward.11} parent=11 // pred_check
          %p304 = pneg %p195
        $region34: #{decoder_forward.11} parent=11 // pred_check_branch
          %306 = sbr.rel (%p304) target = $region36
        $region35: #{decoder_forward.11} parent=11 // pred_region
          _
        $region36: #{decoder_forward.11} parent=11 // pred_fallthru
          _
        // Predicated region
        $region37: #{decoder_forward.11} parent=11 // pred_check
          %p307 = pneg %p216
        $region38: #{decoder_forward.11} parent=11 // pred_check_branch
          %309 = sbr.rel (%p307) target = $region40
        $region39: #{decoder_forward.11} parent=11 // pred_region
          _
        $region40: #{decoder_forward.11} parent=11 // pred_fallthru
          _
        // Predicated region
        $region41: #{decoder_forward.11} parent=11 // pred_check
          %p310 = pneg %p237
        $region42: #{decoder_forward.11} parent=11 // pred_check_branch
          %312 = sbr.rel (%p310) target = $region44
        $region43: #{decoder_forward.11} parent=11 // pred_region
          _
        $region44: #{decoder_forward.11} parent=11 // pred_fallthru
          _
      $region12: #{decoder_forward.11} parent=5 // pred_fallthru
        _
      %p313 = scmp.lt.s32.totalorder %s17, 2
      // Predicated region
      $region45: #{decoder_forward.11} parent=5 // pred_check
        %p314 = pneg %p313
      $region46: #{decoder_forward.11} parent=5 // pred_check_branch
        %316 = sbr.rel (%p314) target = $region48
      $region47: #{decoder_forward.11} parent=5 // pred_region
        // Predicated region
        $region49: #{decoder_forward.11} parent=47 // pred_check
          %p317 = pneg %p37
        $region50: #{decoder_forward.11} parent=47 // pred_check_branch
          %319 = sbr.rel (%p317) target = $region52
        $region51: #{decoder_forward.11} parent=47 // pred_region
          %p320 = scmp.lt.s32.totalorder %s17, 1
          %s321 = scalar_select %p320, %s17, 1
          %s322 = smul.addr %s321, 8
          %s323 = scalar_lea.vmem %s0, %s322
        $region52: #{decoder_forward.11} parent=47 // pred_fallthru
          _
        // Predicated region
        $region53: #{decoder_forward.11} parent=47 // pred_check
          %p324 = pneg %p63
        $region54: #{decoder_forward.11} parent=47 // pred_check_branch
          %326 = sbr.rel (%p324) target = $region56
        $region55: #{decoder_forward.11} parent=47 // pred_region
          %p327 = scmp.lt.s32.totalorder %s17, 1
          %s328 = scalar_select %p327, %s17, 1
          %s329 = smul.addr %s328, 8
          %s330 = scalar_lea.vmem %s1, %s329
        $region56: #{decoder_forward.11} parent=47 // pred_fallthru
          _
      $region48: #{decoder_forward.11} parent=5 // pred_fallthru
        _
      %p331 = scmp.le.s32.totalorder 1, %s17
      %p332 = scmp.lt.s32.totalorder %s17, 3
      %p333 = pnand %p331, %p332
      %p334 = pneg %p333
      // Predicated region
      $region57: #{decoder_forward.11} parent=5 // pred_check
        _
      $region58: #{decoder_forward.11} parent=5 // pred_check_branch
        %336 = sbr.rel (%p333) target = $region60
      $region59: #{decoder_forward.11} parent=5 // pred_region
        %s337 = ssub.s32 %s17, 1
        // Predicated region
        $region61: #{decoder_forward.11} parent=59 // pred_check
          %p338 = pneg %p174
        $region62: #{decoder_forward.11} parent=59 // pred_check_branch
          %340 = sbr.rel (%p338) target = $region64
        $region63: #{decoder_forward.11} parent=59 // pred_region
          %342 = dma.done [#allocation4], 512
        $region64: #{decoder_forward.11} parent=59 // pred_fallthru
          _
        %p343 = scmp.lt.s32.totalorder %s22, 1
        %s344 = scalar_select %p343, %s22, 1
        %s345 = smul.addr %s344, 8
        %s346 = scalar_lea.vmem %s0, %s345
        %p347 = pneg %p43
        %p348 = pneg %p40
        %p349 = scmp.lt.s32.totalorder %s22, 1
        %s350 = scalar_select %p349, %s22, 1
        %s351 = smul.addr %s350, 8
        %s352 = scalar_lea.vmem %s1, %s351
        %p353 = pneg %p69
        %p354 = pneg %p66
        %p355 = pneg %p90
        %p356 = pneg %p87
        %p357 = pneg %p111
        %p358 = pneg %p108
        %p359 = pneg %p132
        %p360 = pneg %p129
        %p361 = pneg %p153
        %p362 = pneg %p150
        %p363 = pneg %p174
        %p364 = pneg %p171
        %p365 = pneg %p195
        %p366 = pneg %p192
        %p367 = pneg %p216
        %p368 = pneg %p213
        %p369 = pneg %p237
        %p370 = pneg %p234
        %p371 = pneg %p263
        %p372 = pneg %p260
        %p373 = scmp.lt.s32.totalorder %s22, 1
        %s374 = scalar_select %p373, %s22, 1
        %s375 = smul.addr %s374, 8
        %s376 = scalar_lea.vmem %s10, %s375
        %p377 = scmp.lt.s32.totalorder %s22, 1
        %s378 = scalar_select %p377, %s22, 1
        %s379 = smul.addr %s378, 8
        %s380 = scalar_lea.vmem %s0, %s379
        %p381 = scmp.lt.s32.totalorder %s22, 1
        %s382 = scalar_select %p381, %s22, 1
        %s383 = smul.addr %s382, 8
        %s384 = scalar_lea.vmem %s1, %s383
        %p385 = scmp.lt.s32.totalorder %s22, 1
        %s386 = scalar_select %p385, %s22, 1
        %s387 = smul.addr %s386, 8
        %s388 = scalar_lea.vmem %s10, %s387
        %v389 = vld [vmem:[%s380] sm:$0xff]
        %v390 = vld [vmem:[%s384] sm:$0xff]
        %v391 = vld [vmem:[%s2] sm:$0xff]
        %v392 = vld [vmem:[%s2 + $0x8] sm:$0xff]
        %v393 = vld [vmem:[%s2 + $0x10] sm:$0xff]
        %v394 = vld [vmem:[%s2 + $0x18] sm:$0xff]
        %v395 = vld [vmem:[%s3] sm:$0x1]
        %v397 = vperm.slane %v395, 0
        %vm399 = vcmask 261120
        %v401 = vsel %vm399, %v389, 0
        %403 = vmatpush.msra.mxu0 0.0
        %404 = vmatpush.msra.mxu0 0.0
        %405 = vmatpush.msra.mxu0 0.0
        %406 = vmatpush.msra.mxu0 0.0
        %407 = vmatpush.msra.mxu0 0.0
        %408 = vmatpush.msra.mxu0 0.0
        %409 = vmatpush.msra.mxu0 0.0
        %410 = vmatpush.msra.mxu0 0.0
        %411 = vmatpush.msra.mxu0 0.0
        %412 = vmatpush.msra.mxu0 0.0
        %413 = vmatpush.msra.mxu0 0.0
        %414 = vmatpush.msra.mxu0 0.0
        %415 = vmatpush.msra.mxu0 %v394
        %416 = vmatpush.msra.mxu0 %v393
        %417 = vmatpush.msra.mxu0 %v392
        %418 = vmatpush.msra.mxu0 %v391
        %419 = vmatmul.f32.gmra.mxu0 %v401
        %v420 = vpop.f32.mrf.mxu0
        %v421 = vadd.f32 %v397, %v420
        %422 = vdwg.mxu0
        %v423 = vld [vmem:[%s4] sm:$0xff]
        %v424 = vld [vmem:[%s4 + $0x8] sm:$0xff]
        %v425 = vld [vmem:[%s4 + $0x10] sm:$0xff]
        %v426 = vld [vmem:[%s4 + $0x18] sm:$0xff]
        %v427 = vld [vmem:[%s5] sm:$0x1]
        %v429 = vperm.slane %v427, 0
        %v432 = vsel %vm399, %v390, 0
        %434 = vmatpush.msra.mxu0 0.0
        %435 = vmatpush.msra.mxu0 0.0
        %436 = vmatpush.msra.mxu0 0.0
        %437 = vmatpush.msra.mxu0 0.0
        %438 = vmatpush.msra.mxu0 0.0
        %439 = vmatpush.msra.mxu0 0.0
        %440 = vmatpush.msra.mxu0 0.0
        %441 = vmatpush.msra.mxu0 0.0
        %442 = vmatpush.msra.mxu0 0.0
        %443 = vmatpush.msra.mxu0 0.0
        %444 = vmatpush.msra.mxu0 0.0
        %445 = vmatpush.msra.mxu0 0.0
        %446 = vmatpush.msra.mxu0 %v426
        %447 = vmatpush.msra.mxu0 %v425
        %448 = vmatpush.msra.mxu0 %v424
        %449 = vmatpush.msra.mxu0 %v423
        %450 = vmatmul.f32.gmra.mxu0 %v432
        %v451 = vpop.f32.mrf.mxu0
        %v452 = vadd.f32 %v429, %v451
        %453 = vdwg.mxu0
        %v454 = vmul.f32 %v421, 0.35355338
        %vm455 = vcmask 64512
        %v457 = vsel %vm455, %v454, 0
        %v460 = vsel %vm455, %v452, 0
        %462 = vmatpush.xpose.msra.mxu0 0.0
        %463 = vmatpush.xpose.msra.mxu0 0.0
        %464 = vmatpush.xpose.msra.mxu0 0.0
        %465 = vmatpush.xpose.msra.mxu0 0.0
        %466 = vmatpush.xpose.msra.mxu0 0.0
        %467 = vmatpush.xpose.msra.mxu0 0.0
        %468 = vmatpush.xpose.msra.mxu0 0.0
        %469 = vmatpush.xpose.msra.mxu0 0.0
        %470 = vmatpush.xpose.msra.mxu0 0.0
        %471 = vmatpush.xpose.msra.mxu0 0.0
        %472 = vmatpush.xpose.msra.mxu0 0.0
        %473 = vmatpush.xpose.msra.mxu0 0.0
        %474 = vmatpush.xpose.msra.mxu0 0.0
        %475 = vmatpush.xpose.msra.mxu0 0.0
        %476 = vmatpush.xpose.msra.mxu0 0.0
        %477 = vmatpush.xpose.msra.mxu0 %v460
        %478 = vmatmul.f32.gmra.mxu0 %v457
        %v479 = vpop.f32.mrf.mxu0
        %v480 = vadd.f32 0.0, %v479
        %481 = vdwg.mxu0
        %v482 = vsel %vm455, %v480, -inf
        %483 = vmax.xlane.f32.xlu0 %v482
        %v484 = vpop.xlane.xlu0 %483
        %v485 = vsub.f32 %v480, %v484
        %v486 = vmul.f32 %v485, 1.442695
        %v487 = vpow.pop %v486
        %v488 = vsel %vm455, %v487, 0.0
        %489 = vadd.xlane.f32.xlu0 %v488
        %v490 = vpop.xlane.xlu0 %489
        %v491 = vrcp.pop %v490
        %v492 = vmul.f32 %v487, %v491
        %493 = vrot.lane.b32.xlu0 %v452, 96
        %v494 = vpop.permute.xlu0 %493
        %v497 = vsel %vm455, %v492, 0
        %499 = vmatpush.msra.mxu0 0.0
        %500 = vmatpush.msra.mxu0 0.0
        %501 = vmatpush.msra.mxu0 0.0
        %502 = vmatpush.msra.mxu0 0.0
        %503 = vmatpush.msra.mxu0 0.0
        %504 = vmatpush.msra.mxu0 0.0
        %505 = vmatpush.msra.mxu0 0.0
        %506 = vmatpush.msra.mxu0 0.0
        %507 = vmatpush.msra.mxu0 0.0
        %508 = vmatpush.msra.mxu0 0.0
        %509 = vmatpush.msra.mxu0 0.0
        %510 = vmatpush.msra.mxu0 0.0
        %511 = vmatpush.msra.mxu0 0.0
        %512 = vmatpush.msra.mxu0 0.0
        %513 = vmatpush.msra.mxu0 0.0
        %514 = vmatpush.msra.mxu0 %v494
        %515 = vmatmul.f32.gmra.mxu0 %v497
        %v516 = vpop.f32.mrf.mxu0
        %v517 = vadd.f32 0.0, %v516
        %518 = vdwg.mxu0
        %519 = vst.msk [vmem:[#allocation2] sm:$0xff] %vm455, %v517
        %520 = vrot.lane.b32.xlu0 %v454, 120
        %v521 = vpop.permute.xlu0 %520
        %522 = vrot.lane.b32.xlu0 %v452, 120
        %v523 = vpop.permute.xlu0 %522
        %v524 = vsel %vm455, %v521, 0
        %v526 = vsel %vm455, %v523, 0
        %528 = vmatpush.xpose.msra.mxu0 0.0
        %529 = vmatpush.xpose.msra.mxu0 0.0
        %530 = vmatpush.xpose.msra.mxu0 0.0
        %531 = vmatpush.xpose.msra.mxu0 0.0
        %532 = vmatpush.xpose.msra.mxu0 0.0
        %533 = vmatpush.xpose.msra.mxu0 0.0
        %534 = vmatpush.xpose.msra.mxu0 0.0
        %535 = vmatpush.xpose.msra.mxu0 0.0
        %536 = vmatpush.xpose.msra.mxu0 0.0
        %537 = vmatpush.xpose.msra.mxu0 0.0
        %538 = vmatpush.xpose.msra.mxu0 0.0
        %539 = vmatpush.xpose.msra.mxu0 0.0
        %540 = vmatpush.xpose.msra.mxu0 0.0
        %541 = vmatpush.xpose.msra.mxu0 0.0
        %542 = vmatpush.xpose.msra.mxu0 0.0
        %543 = vmatpush.xpose.msra.mxu0 %v526
        %544 = vmatmul.f32.gmra.mxu0 %v524
        %v545 = vpop.f32.mrf.mxu0
        %v546 = vadd.f32 0.0, %v545
        %547 = vdwg.mxu0
        %v548 = vsel %vm455, %v546, -inf
        %549 = vmax.xlane.f32.xlu0 %v548
        %v550 = vpop.xlane.xlu0 %549
        %v551 = vsub.f32 %v546, %v550
        %v552 = vmul.f32 %v551, 1.442695
        %v553 = vpow.pop %v552
        %v554 = vsel %vm455, %v553, 0.0
        %555 = vadd.xlane.f32.xlu0 %v554
        %v556 = vpop.xlane.xlu0 %555
        %v557 = vrcp.pop %v556
        %v558 = vmul.f32 %v553, %v557
        %559 = vrot.lane.b32.xlu0 %v452, 88
        %v560 = vpop.permute.xlu0 %559
        %v563 = vsel %vm455, %v558, 0
        %565 = vmatpush.msra.mxu0 0.0
        %566 = vmatpush.msra.mxu0 0.0
        %567 = vmatpush.msra.mxu0 0.0
        %568 = vmatpush.msra.mxu0 0.0
        %569 = vmatpush.msra.mxu0 0.0
        %570 = vmatpush.msra.mxu0 0.0
        %571 = vmatpush.msra.mxu0 0.0
        %572 = vmatpush.msra.mxu0 0.0
        %573 = vmatpush.msra.mxu0 0.0
        %574 = vmatpush.msra.mxu0 0.0
        %575 = vmatpush.msra.mxu0 0.0
        %576 = vmatpush.msra.mxu0 0.0
        %577 = vmatpush.msra.mxu0 0.0
        %578 = vmatpush.msra.mxu0 0.0
        %579 = vmatpush.msra.mxu0 0.0
        %580 = vmatpush.msra.mxu0 %v560
        %581 = vmatmul.f32.gmra.mxu0 %v563
        %v582 = vpop.f32.mrf.mxu0
        %v583 = vadd.f32 0.0, %v582
        %584 = vdwg.mxu0
        %586 = vrot.lane.b32.xlu0 %v583, 8
        %v587 = vpop.permute.xlu0 %586
        %vm589 = vcmask 130112
        %590 = vst.msk [vmem:[#allocation2] sm:$0xff] %vm589, %v587
        %591 = vrot.lane.b32.xlu0 %v454, 112
        %v592 = vpop.permute.xlu0 %591
        %593 = vrot.lane.b32.xlu0 %v452, 112
        %v594 = vpop.permute.xlu0 %593
        %v595 = vsel %vm455, %v592, 0
        %v597 = vsel %vm455, %v594, 0
        %599 = vmatpush.xpose.msra.mxu0 0.0
        %600 = vmatpush.xpose.msra.mxu0 0.0
        %601 = vmatpush.xpose.msra.mxu0 0.0
        %602 = vmatpush.xpose.msra.mxu0 0.0
        %603 = vmatpush.xpose.msra.mxu0 0.0
        %604 = vmatpush.xpose.msra.mxu0 0.0
        %605 = vmatpush.xpose.msra.mxu0 0.0
        %606 = vmatpush.xpose.msra.mxu0 0.0
        %607 = vmatpush.xpose.msra.mxu0 0.0
        %608 = vmatpush.xpose.msra.mxu0 0.0
        %609 = vmatpush.xpose.msra.mxu0 0.0
        %610 = vmatpush.xpose.msra.mxu0 0.0
        %611 = vmatpush.xpose.msra.mxu0 0.0
        %612 = vmatpush.xpose.msra.mxu0 0.0
        %613 = vmatpush.xpose.msra.mxu0 0.0
        %614 = vmatpush.xpose.msra.mxu0 %v597
        %615 = vmatmul.f32.gmra.mxu0 %v595
        %v616 = vpop.f32.mrf.mxu0
        %v617 = vadd.f32 0.0, %v616
        %618 = vdwg.mxu0
        %v619 = vsel %vm455, %v617, -inf
        %620 = vmax.xlane.f32.xlu0 %v619
        %v621 = vpop.xlane.xlu0 %620
        %v622 = vsub.f32 %v617, %v621
        %v623 = vmul.f32 %v622, 1.442695
        %v624 = vpow.pop %v623
        %v625 = vsel %vm455, %v624, 0.0
        %626 = vadd.xlane.f32.xlu0 %v625
        %v627 = vpop.xlane.xlu0 %626
        %v628 = vrcp.pop %v627
        %v629 = vmul.f32 %v624, %v628
        %630 = vrot.lane.b32.xlu0 %v452, 80
        %v631 = vpop.permute.xlu0 %630
        %v634 = vsel %vm455, %v629, 0
        %636 = vmatpush.msra.mxu0 0.0
        %637 = vmatpush.msra.mxu0 0.0
        %638 = vmatpush.msra.mxu0 0.0
        %639 = vmatpush.msra.mxu0 0.0
        %640 = vmatpush.msra.mxu0 0.0
        %641 = vmatpush.msra.mxu0 0.0
        %642 = vmatpush.msra.mxu0 0.0
        %643 = vmatpush.msra.mxu0 0.0
        %644 = vmatpush.msra.mxu0 0.0
        %645 = vmatpush.msra.mxu0 0.0
        %646 = vmatpush.msra.mxu0 0.0
        %647 = vmatpush.msra.mxu0 0.0
        %648 = vmatpush.msra.mxu0 0.0
        %649 = vmatpush.msra.mxu0 0.0
        %650 = vmatpush.msra.mxu0 0.0
        %651 = vmatpush.msra.mxu0 %v631
        %652 = vmatmul.f32.gmra.mxu0 %v634
        %v653 = vpop.f32.mrf.mxu0
        %v654 = vadd.f32 0.0, %v653
        %655 = vdwg.mxu0
        %657 = vrot.lane.b32.xlu0 %v654, 16
        %v658 = vpop.permute.xlu0 %657
        %vm660 = vcmask 195712
        %661 = vst.msk [vmem:[#allocation2] sm:$0xff] %vm660, %v658
        %662 = vrot.lane.b32.xlu0 %v454, 104
        %v663 = vpop.permute.xlu0 %662
        %664 = vrot.lane.b32.xlu0 %v452, 104
        %v665 = vpop.permute.xlu0 %664
        %v666 = vsel %vm455, %v663, 0
        %v668 = vsel %vm455, %v665, 0
        %670 = vmatpush.xpose.msra.mxu0 0.0
        %671 = vmatpush.xpose.msra.mxu0 0.0
        %672 = vmatpush.xpose.msra.mxu0 0.0
        %673 = vmatpush.xpose.msra.mxu0 0.0
        %674 = vmatpush.xpose.msra.mxu0 0.0
        %675 = vmatpush.xpose.msra.mxu0 0.0
        %676 = vmatpush.xpose.msra.mxu0 0.0
        %677 = vmatpush.xpose.msra.mxu0 0.0
        %678 = vmatpush.xpose.msra.mxu0 0.0
        %679 = vmatpush.xpose.msra.mxu0 0.0
        %680 = vmatpush.xpose.msra.mxu0 0.0
        %681 = vmatpush.xpose.msra.mxu0 0.0
        %682 = vmatpush.xpose.msra.mxu0 0.0
        %683 = vmatpush.xpose.msra.mxu0 0.0
        %684 = vmatpush.xpose.msra.mxu0 0.0
        %685 = vmatpush.xpose.msra.mxu0 %v668
        %686 = vmatmul.f32.gmra.mxu0 %v666
        %v687 = vpop.f32.mrf.mxu0
        %v688 = vadd.f32 0.0, %v687
        %689 = vdwg.mxu0
        %v690 = vsel %vm455, %v688, -inf
        %691 = vmax.xlane.f32.xlu0 %v690
        %v692 = vpop.xlane.xlu0 %691
        %v693 = vsub.f32 %v688, %v692
        %v694 = vmul.f32 %v693, 1.442695
        %v695 = vpow.pop %v694
        %v696 = vsel %vm455, %v695, 0.0
        %697 = vadd.xlane.f32.xlu0 %v696
        %v698 = vpop.xlane.xlu0 %697
        %v699 = vrcp.pop %v698
        %v700 = vmul.f32 %v695, %v699
        %701 = vrot.lane.b32.xlu0 %v452, 72
        %v702 = vpop.permute.xlu0 %701
        %v705 = vsel %vm455, %v700, 0
        %707 = vmatpush.msra.mxu0 0.0
        %708 = vmatpush.msra.mxu0 0.0
        %709 = vmatpush.msra.mxu0 0.0
        %710 = vmatpush.msra.mxu0 0.0
        %711 = vmatpush.msra.mxu0 0.0
        %712 = vmatpush.msra.mxu0 0.0
        %713 = vmatpush.msra.mxu0 0.0
        %714 = vmatpush.msra.mxu0 0.0
        %715 = vmatpush.msra.mxu0 0.0
        %716 = vmatpush.msra.mxu0 0.0
        %717 = vmatpush.msra.mxu0 0.0
        %718 = vmatpush.msra.mxu0 0.0
        %719 = vmatpush.msra.mxu0 0.0
        %720 = vmatpush.msra.mxu0 0.0
        %721 = vmatpush.msra.mxu0 0.0
        %722 = vmatpush.msra.mxu0 %v702
        %723 = vmatmul.f32.gmra.mxu0 %v705
        %v724 = vpop.f32.mrf.mxu0
        %v725 = vadd.f32 0.0, %v724
        %726 = vdwg.mxu0
        %728 = vrot.lane.b32.xlu0 %v725, 24
        %v729 = vpop.permute.xlu0 %728
        %vm731 = vcmask 261312
        %732 = vst.msk [vmem:[#allocation2] sm:$0xff] %vm731, %v729
        %v733 = vld [vmem:[#allocation2] sm:$0xff]
        %v734 = vld [vmem:[#allocation3] sm:$0xff]
        %v735 = vld [vmem:[#allocation3 + $0x8] sm:$0xff]
        %v736 = vld [vmem:[#allocation3 + $0x10] sm:$0xff]
        %v737 = vld [vmem:[#allocation3 + $0x18] sm:$0xff]
        %v738 = vld [vmem:[%s7] sm:$0x1]
        %v740 = vperm.slane %v738, 0
        %v743 = vsel %vm399, %v733, 0
        %745 = vmatpush.msra.mxu0 0.0
        %746 = vmatpush.msra.mxu0 0.0
        %747 = vmatpush.msra.mxu0 0.0
        %748 = vmatpush.msra.mxu0 0.0
        %749 = vmatpush.msra.mxu0 0.0
        %750 = vmatpush.msra.mxu0 0.0
        %751 = vmatpush.msra.mxu0 0.0
        %752 = vmatpush.msra.mxu0 0.0
        %753 = vmatpush.msra.mxu0 0.0
        %754 = vmatpush.msra.mxu0 0.0
        %755 = vmatpush.msra.mxu0 0.0
        %756 = vmatpush.msra.mxu0 0.0
        %757 = vmatpush.msra.mxu0 %v737
        %758 = vmatpush.msra.mxu0 %v736
        %759 = vmatpush.msra.mxu0 %v735
        %760 = vmatpush.msra.mxu0 %v734
        %761 = vmatmul.f32.gmra.mxu0 %v743
        %v762 = vpop.f32.mrf.mxu0
        %v763 = vadd.f32 %v740, %v762
        %764 = vdwg.mxu0
        %v765 = vadd.f32 %v389, %v763
        %v766 = vld [vmem:[%s8] sm:$0x1]
        %v767 = vld [vmem:[%s9] sm:$0x1]
        %v768 = vsel %vm399, %v765, 0.0
        %769 = vadd.xlane.f32.xlu0 %v768
        %v770 = vpop.xlane.xlu0 %769
        %v771 = vrcp.pop 32.0
        %v772 = vmul.f32 32.0, %v771
        %v773 = vsub.f32 1.0, %v772
        %v774 = vmul.f32 %v771, %v773
        %v775 = vadd.f32 %v771, %v774
        %vm776 = vweird.f32 %v771
        %v777 = vsel %vm776, %v771, %v775
        %v778 = vmul.f32 %v770, %v777
        %v779 = vsub.f32 %v765, %v778
        %v780 = vmul.f32 %v779, %v779
        %v781 = vsel %vm399, %v780, 0.0
        %782 = vadd.xlane.f32.xlu0 %v781
        %v783 = vpop.xlane.xlu0 %782
        %v784 = vmul.f32 %v783, %v777
        %v785 = vadd.f32 %v784, 1e-05
        %v786 = vrsqrt.pop %v785
        %v787 = vmul.f32 %v786, %v785
        %v788 = vmul.f32 %v787, %v786
        %v789 = vmul.f32 0.5, %v788
        %v790 = vsub.f32 1.5, %v789
        %v791 = vmul.f32 %v786, %v790
        %vm792 = vweird.f32 %v785
        %vm793 = vweird.f32 %v786
        %vm794 = vmor %vm792, %vm793
        %v795 = vsel %vm794, %v786, %v791
        %v796 = vmul.f32 %v779, %v795
        %v798 = vperm.slane %v766, 0
        %v800 = vmul.f32 %v796, %v798
        %v802 = vperm.slane %v767, 0
        %v804 = vadd.f32 %v800, %v802
        %805 = vst.msk [vmem:[%s388] sm:$0xff] %vm399, %v804
        %p806 = scmp.lt.s32.totalorder %s22, 1
        %s807 = scalar_select %p806, %s22, 1
        %s808 = smul.addr %s807, 8
        %s809 = scalar_lea.vmem %s10, %s808
        // Predicated region
        $region65: #{decoder_forward.11} parent=59 // pred_check
          %p810 = pneg %p260
        $region66: #{decoder_forward.11} parent=59 // pred_check_branch
          %812 = sbr.rel (%p810) target = $region68
        $region67: #{decoder_forward.11} parent=59 // pred_region
          _
        $region68: #{decoder_forward.11} parent=59 // pred_fallthru
          _
      $region60: #{decoder_forward.11} parent=5 // pred_fallthru
        _
      %p813 = scmp.le.s32.totalorder 2, %s17
      // Predicated region
      $region69: #{decoder_forward.11} parent=5 // pred_check
        %p814 = pneg %p813
      $region70: #{decoder_forward.11} parent=5 // pred_check_branch
        %816 = sbr.rel (%p814) target = $region72
      $region71: #{decoder_forward.11} parent=5 // pred_region
        %s817 = ssub.s32 %s17, 2
        // Predicated region
        $region73: #{decoder_forward.11} parent=71 // pred_check
          %p818 = pneg %p266
        $region74: #{decoder_forward.11} parent=71 // pred_check_branch
          %820 = sbr.rel (%p818) target = $region76
        $region75: #{decoder_forward.11} parent=71 // pred_region
          %p821 = scmp.lt.s32.totalorder %s23, 1
          %s822 = scalar_select %p821, %s23, 1
          %s823 = smul.addr %s822, 8
          %s824 = scalar_lea.vmem %s10, %s823
        $region76: #{decoder_forward.11} parent=71 // pred_fallthru
          _
      $region72: #{decoder_forward.11} parent=5 // pred_fallthru
        _
    $region6: #{decoder_forward.11} parent=1 // loop_footer
      %s21 = sadd.s32 1, %s17
    $region7: #{decoder_forward.11} parent=1 // loop_footer_branch
      %16 = sbr.rel target = $region3
    $region8: #{decoder_forward.11} parent=1 // loop_exit
      _
    %825 = vsyncpa [#allocation4], 1
    %s826 = scalar_lea.sflag [#allocation4], 1
    %827 = vsyncpa %s826, 1

// kernel: decoder_forward.13
$region0: #{decoder_forward.13}
  #allocation0 [shape = 'u32[]', space=smem, size = 0x4, offset = 0x4, fixed_abs, tag = 'smem constant byte address 0x4 - core index']
  #allocation1 [shape = 'u32[72,128]{1,0:T(1,128)}', space=vmem, size = 0x9000, scoped, tag = 'internal scratch']
  #allocation2 [shape = 'f32[8,64]{1,0:T(8,128)}', space=vmem, size = 0x1000, scoped, tag = 'scratch operand']
  %s0 = inlined_call_operand.vmem [shape: f32[16,32], index: 0, kind: input, shape index: {}]
  %s1 = inlined_call_operand.vmem [shape: f32[32,64], index: 1, kind: input, shape index: {}]
  %s2 = inlined_call_operand.vmem [shape: f32[1,64], index: 2, kind: input, shape index: {}]
  %s3 = inlined_call_operand.hbm [shape: f32[16,64], index: 3, kind: output, shape index: {}]
  %s4 = sld [smem:[#allocation0]]
  $region53: #{decoder_forward.13} parent=0
    _
  %s6 = ssub.s32 1, %s4
  %s7 = scalar_select 0, %s6, %s4
  $region1: #{decoder_forward.13} parent=0
    #allocation3 [shape = 'u8[8192]{0}', space=vmem, size = 0x2000, scoped, tag = 'output window, operand 0']
    #allocation4 [shape = 's32[2]{0}', space=sflag, size = 0x8, scoped, tag = 'scoped memory for decoder_forward.13']
    %8 = vsyncpa [#allocation4], 0
    %s9 = scalar_lea.sflag [#allocation4], 1
    %10 = vsyncpa %s9, 0
    loop: start=0, step=1, limit=4
    $region2: #{decoder_forward.13} parent=1 // loop_pre_header
      _
    $region3: #{decoder_forward.13} parent=1 // loop_header
      %s12 = sphi 0, %s16
      %p13 = scmp.ge.s32.totalorder %s12, 4
      %s19 = sphi 0, %s38
      %s20 = sphi 0, %s34
      %s21 = sphi 0, %s30
      %s22 = sphi 0, %s19
      %s23 = sphi 0, %s20
      %s24 = sphi 0, %s21
      %s25 = sphi 0, %s22
      %s26 = sphi 0, %s23
      %s27 = sphi 0, %s24
      %s43 = sphi 0, %s45
      %s46 = sphi 0, %s43
      %s47 = sphi 0, %s46
      %s63 = sphi 0, %s47
      %s71 = sphi 0, %s73
      %s74 = sphi 0, %s71
      %s75 = sphi 0, %s74
      %s91 = sphi 0, %s75
      %s97 = sphi 0, %s99
      %s100 = sphi 0, %s97
      %s101 = sphi 0, %s100
      %s117 = sphi 0, %s101
      %s125 = sphi 0, %s127
      %s128 = sphi 0, %s125
      %s129 = sphi 0, %s128
      %s145 = sphi 0, %s129
    $region4: #{decoder_forward.13} parent=1 // loop_header_branch
      %15 = sbr.rel (%p13) target = $region8
    $region5: #{decoder_forward.13} parent=1 // loop_body
      %s17 = ssub.s32 %s12, 1
      %s18 = ssub.s32 %s12, 2
      %s28 = sadd.s32 1, %s21
      %p29 = scmp.ge.s32.totalorder %s28, 1
      %s30 = scalar_select %p29, 0, %s28
      %s31 = sadd.s32 1, %s20
      %s32 = scalar_select %p29, %s31, %s20
      %p33 = scmp.ge.s32.totalorder %s32, 1
      %s34 = scalar_select %p33, 0, %s32
      %s35 = sadd.s32 1, %s19
      %s36 = scalar_select %p33, %s35, %s19
      %p37 = scmp.ge.s32.totalorder %s36, 2
      %s38 = scalar_select %p37, 0, %s36
      %s39 = ssub.s32 %s19, %s38
      %s40 = ssub.s32 %s21, %s30
      %s41 = sor.u32 %s39, %s40
      %p42 = scmp.eq.s32.totalorder %s41, 0
      %s44 = sadd.s32 %s43, 1
      %s45 = scalar_select %p42, %s43, %s44
      %p48 = pneg %p42
      %p49 = scmp.eq.s32.totalorder %s12, 1
      %p50 = por %p48, %p49
      %p51 = scmp.ne.s32.totalorder %s43, %s46
      %p52 = scmp.eq.s32.totalorder %s12, 0
      %p53 = por %p51, %p52
      %p54 = scmp.ne.s32.totalorder %s43, %s46
      %p55 = scmp.eq.s32.totalorder %s17, 1
      %p56 = por %p54, %p55
      %p57 = scmp.ne.s32.totalorder %s46, %s47
      %p58 = scmp.eq.s32.totalorder %s17, 0
      %p59 = por %p57, %p58
      %p60 = scmp.ne.s32.totalorder %s46, %s47
      %p61 = scmp.eq.s32.totalorder %s18, 1
      %p62 = por %p60, %p61
      %p64 = scmp.ne.s32.totalorder %s47, %s63
      %p65 = scmp.eq.s32.totalorder %s18, 0
      %p66 = por %p64, %p65
      %s67 = ssub.s32 %s21, %s30
      %s68 = ssub.s32 %s20, %s34
      %s69 = sor.u32 %s67, %s68
      %p70 = scmp.eq.s32.totalorder %s69, 0
      %s72 = sadd.s32 %s71, 1
      %s73 = scalar_select %p70, %s71, %s72
      %p76 = pneg %p70
      %p77 = scmp.eq.s32.totalorder %s12, 1
      %p78 = por %p76, %p77
      %p79 = scmp.ne.s32.totalorder %s71, %s74
      %p80 = scmp.eq.s32.totalorder %s12, 0
      %p81 = por %p79, %p80
      %p82 = scmp.ne.s32.totalorder %s71, %s74
      %p83 = scmp.eq.s32.totalorder %s17, 1
      %p84 = por %p82, %p83
      %p85 = scmp.ne.s32.totalorder %s74, %s75
      %p86 = scmp.eq.s32.totalorder %s17, 0
      %p87 = por %p85, %p86
      %p88 = scmp.ne.s32.totalorder %s74, %s75
      %p89 = scmp.eq.s32.totalorder %s18, 1
      %p90 = por %p88, %p89
      %p92 = scmp.ne.s32.totalorder %s75, %s91
      %p93 = scmp.eq.s32.totalorder %s18, 0
      %p94 = por %p92, %p93
      %s95 = ssub.s32 %s20, %s34
      %p96 = scmp.eq.s32.totalorder %s95, 0
      %s98 = sadd.s32 %s97, 1
      %s99 = scalar_select %p96, %s97, %s98
      %p102 = pneg %p96
      %p103 = scmp.eq.s32.totalorder %s12, 1
      %p104 = por %p102, %p103
      %p105 = scmp.ne.s32.totalorder %s97, %s100
      %p106 = scmp.eq.s32.totalorder %s12, 0
      %p107 = por %p105, %p106
      %p108 = scmp.ne.s32.totalorder %s97, %s100
      %p109 = scmp.eq.s32.totalorder %s17, 1
      %p110 = por %p108, %p109
      %p111 = scmp.ne.s32.totalorder %s100, %s101
      %p112 = scmp.eq.s32.totalorder %s17, 0
      %p113 = por %p111, %p112
      %p114 = scmp.ne.s32.totalorder %s100, %s101
      %p115 = scmp.eq.s32.totalorder %s18, 1
      %p116 = por %p114, %p115
      %p118 = scmp.ne.s32.totalorder %s101, %s117
      %p119 = scmp.eq.s32.totalorder %s18, 0
      %p120 = por %p118, %p119
      %s121 = ssub.s32 %s19, %s38
      %s122 = ssub.s32 %s20, %s34
      %s123 = sor.u32 %s121, %s122
      %p124 = scmp.eq.s32.totalorder %s123, 0
      %s126 = sadd.s32 %s125, 1
      %s127 = scalar_select %p124, %s125, %s126
      %p130 = pneg %p124
      %p131 = scmp.eq.s32.totalorder %s12, 1
      %p132 = por %p130, %p131
      %p133 = scmp.ne.s32.totalorder %s125, %s128
      %p134 = scmp.eq.s32.totalorder %s12, 0
      %p135 = por %p133, %p134
      %p136 = scmp.ne.s32.totalorder %s125, %s128
      %p137 = scmp.eq.s32.totalorder %s17, 1
      %p138 = por %p136, %p137
      %p139 = scmp.ne.s32.totalorder %s128, %s129
      %p140 = scmp.eq.s32.totalorder %s17, 0
      %p141 = por %p139, %p140
      %p142 = scmp.ne.s32.totalorder %s128, %s129
      %p143 = scmp.eq.s32.totalorder %s18, 1
      %p144 = por %p142, %p143
      %p146 = scmp.ne.s32.totalorder %s129, %s145
      %p147 = scmp.eq.s32.totalorder %s18, 0
      %p148 = por %p146, %p147
      %p149 = scmp.le.s32.totalorder 1, %s12
      %p150 = scmp.lt.s32.totalorder %s12, 3
      %p151 = pnand %p149, %p150
      %p152 = pneg %p151
      // Predicated region
      $region9: #{decoder_forward.13} parent=5 // pred_check
        _
      $region10: #{decoder_forward.13} parent=5 // pred_check_branch
        %154 = sbr.rel (%p151) target = $region12
      $region11: #{decoder_forward.13} parent=5 // pred_region
        %s155 = ssub.s32 %s12, 1
        // Predicated region
        $region13: #{decoder_forward.13} parent=11 // pred_check
          %p156 = pneg %p87
        $region14: #{decoder_forward.13} parent=11 // pred_check_branch
          %158 = sbr.rel (%p156) target = $region16
        $region15: #{decoder_forward.13} parent=11 // pred_region
          %s159 = smul.u32 4, %s24
          %p160 = scmp.lt.s32.totalorder %s159, 3
          %s161 = scalar_select %p160, %s159, 3
          %p162 = scmp.lt.s32.totalorder %s23, 0
          %s163 = scalar_select %p162, %s23, 0
          %s164 = sadd.s32 %s163, %s161
          %s165 = smul.addr %s164, 8
          %s166 = scalar_lea.vmem %s1, %s165
          %s167 = smul.u32 4, %s24
        $region16: #{decoder_forward.13} parent=11 // pred_fallthru
          _
        // Predicated region
        $region17: #{decoder_forward.13} parent=11 // pred_check
          %p168 = pneg %p113
        $region18: #{decoder_forward.13} parent=11 // pred_check_branch
          %170 = sbr.rel (%p168) target = $region20
        $region19: #{decoder_forward.13} parent=11 // pred_region
          %p171 = scmp.lt.s32.totalorder %s23, 0
          %s172 = scalar_select %p171, %s23, 0
          %s173 = scalar_lea.vmem %s2, %s172
        $region20: #{decoder_forward.13} parent=11 // pred_fallthru
          _
      $region12: #{decoder_forward.13} parent=5 // pred_fallthru
        _
      %p174 = scmp.lt.s32.totalorder %s12, 2
      // Predicated region
      $region21: #{decoder_forward.13} parent=5 // pred_check
        %p175 = pneg %p174
      $region22: #{decoder_forward.13} parent=5 // pred_check_branch
        %177 = sbr.rel (%p175) target = $region24
      $region23: #{decoder_forward.13} parent=5 // pred_region
        // Predicated region
        $region25: #{decoder_forward.13} parent=23 // pred_check
          %p178 = pneg %p53
        $region26: #{decoder_forward.13} parent=23 // pred_check_branch
          %180 = sbr.rel (%p178) target = $region28
        $region27: #{decoder_forward.13} parent=23 // pred_region
          %p181 = scmp.lt.s32.totalorder %s19, 1
          %s182 = scalar_select %p181, %s19, 1
          %p183 = scmp.lt.s32.totalorder %s21, 0
          %s184 = scalar_select %p183, %s21, 0
          %s185 = sadd.s32 %s184, %s182
          %s186 = smul.addr %s185, 8
          %s187 = scalar_lea.vmem %s0, %s186
        $region28: #{decoder_forward.13} parent=23 // pred_fallthru
          _
      $region24: #{decoder_forward.13} parent=5 // pred_fallthru
        _
      %p188 = scmp.le.s32.totalorder 1, %s12
      %p189 = scmp.lt.s32.totalorder %s12, 3
      %p190 = pnand %p188, %p189
      %p191 = pneg %p190
      // Predicated region
      $region29: #{decoder_forward.13} parent=5 // pred_check
        _
      $region30: #{decoder_forward.13} parent=5 // pred_check_branch
        %193 = sbr.rel (%p190) target = $region32
      $region31: #{decoder_forward.13} parent=5 // pred_region
        %s194 = ssub.s32 %s12, 1
        %p195 = scmp.lt.s32.totalorder %s22, 1
        %s196 = scalar_select %p195, %s22, 1
        %p197 = scmp.lt.s32.totalorder %s24, 0
        %s198 = scalar_select %p197, %s24, 0
        %s199 = sadd.s32 %s198, %s196
        %s200 = smul.addr %s199, 8
        %s201 = scalar_lea.vmem %s0, %s200
        %p202 = pneg %p59
        %p203 = pneg %p56
        %s204 = smul.u32 4, %s24
        %p205 = scmp.lt.s32.totalorder %s204, 3
        %s206 = scalar_select %p205, %s204, 3
        %p207 = scmp.lt.s32.totalorder %s23, 0
        %s208 = scalar_select %p207, %s23, 0
        %s209 = sadd.s32 %s208, %s206
        %s210 = smul.addr %s209, 8
        %s211 = scalar_lea.vmem %s1, %s210
        %p212 = pneg %p87
        %p213 = pneg %p84
        %p214 = scmp.lt.s32.totalorder %s23, 0
        %s215 = scalar_select %p214, %s23, 0
        %s216 = scalar_lea.vmem %s2, %s215
        %p217 = pneg %p113
        %p218 = pneg %p110
        %p219 = pneg %p141
        %p220 = pneg %p138
        %s221 = sand.u32 %s128, 1
        %s222 = scalar_lea.sflag [#allocation4], %s221
        %s223 = sand.u32 %s128, 1
        %s224 = smul.addr %s223, 8
        %s225 = scalar_lea.vmem [#allocation3], %s224
        %p226 = scmp.lt.s32.totalorder %s22, 1
        %s227 = scalar_select %p226, %s22, 1
        %p228 = scmp.lt.s32.totalorder %s24, 0
        %s229 = scalar_select %p228, %s24, 0
        %s230 = sadd.s32 %s229, %s227
        %s231 = smul.addr %s230, 8
        %s232 = scalar_lea.vmem %s0, %s231
        %s233 = smul.u32 4, %s24
        %p234 = scmp.lt.s32.totalorder %s233, 3
        %s235 = scalar_select %p234, %s233, 3
        %p236 = scmp.lt.s32.totalorder %s23, 0
        %s237 = scalar_select %p236, %s23, 0
        %s238 = sadd.s32 %s237, %s235
        %s239 = smul.addr %s238, 8
        %s240 = scalar_lea.vmem %s1, %s239
        %s241 = smul.u32 4, %s24
        %p242 = scmp.lt.s32.totalorder %s23, 0
        %s243 = scalar_select %p242, %s23, 0
        %s244 = scalar_lea.vmem %s2, %s243
        %p245 = scmp.eq.s32.totalorder %s24, 0
        // Predicated region
        $region33: #{decoder_forward.13} parent=31 // pred_check
          %p246 = pneg %p245
        $region34: #{decoder_forward.13} parent=31 // pred_check_branch
          %248 = sbr.rel (%p246) target = $region36
        $region35: #{decoder_forward.13} parent=31 // pred_region
          %vm249 = vcmask 523264
          %250 = vst.msk [vmem:[#allocation2] sm:$0xff] %vm249, 0.0
        $region36: #{decoder_forward.13} parent=31 // pred_fallthru
          _
        %v251 = vld [vmem:[#allocation2] sm:$0xff]
        %v252 = vld [vmem:[%s232] sm:$0xff]
        %v253 = vld [vmem:[%s240] sm:$0xff]
        %v254 = vld [vmem:[%s240 + $0x8] sm:$0xff]
        %v255 = vld [vmem:[%s240 + $0x10] sm:$0xff]
        %v256 = vld [vmem:[%s240 + $0x18] sm:$0xff]
        %vm257 = vcmask 261120
        %v259 = vsel %vm257, %v252, 0
        %261 = vmatpush.msra.mxu0 0.0
        %262 = vmatpush.msra.mxu0 0.0
        %263 = vmatpush.msra.mxu0 0.0
        %264 = vmatpush.msra.mxu0 0.0
        %265 = vmatpush.msra.mxu0 0.0
        %266 = vmatpush.msra.mxu0 0.0
        %267 = vmatpush.msra.mxu0 0.0
        %268 = vmatpush.msra.mxu0 0.0
        %269 = vmatpush.msra.mxu0 0.0
        %270 = vmatpush.msra.mxu0 0.0
        %271 = vmatpush.msra.mxu0 0.0
        %272 = vmatpush.msra.mxu0 0.0
        %273 = vmatpush.msra.mxu0 %v256
        %274 = vmatpush.msra.mxu0 %v255
        %275 = vmatpush.msra.mxu0 %v254
        %276 = vmatpush.msra.mxu0 %v253
        %277 = vmatmul.f32.gmra.mxu0 %v259
        %v278 = vpop.f32.mrf.mxu0
        %v279 = vadd.f32 0.0, %v278
        %280 = vdwg.mxu0
        %v281 = vadd.f32 %v251, %v279
        %vm282 = vcmask 523264
        %283 = vst.msk [vmem:[#allocation2] sm:$0xff] %vm282, %v281
        // Predicated region
        $region37: #{decoder_forward.13} parent=31 // pred_check
          %p284 = pneg %p245
        $region38: #{decoder_forward.13} parent=31 // pred_check_branch
          %286 = sbr.rel (%p284) target = $region40
        $region39: #{decoder_forward.13} parent=31 // pred_region
          %v287 = vld [vmem:[#allocation2] sm:$0xff]
          %v288 = vld [vmem:[%s244] sm:$0x1]
          %v290 = vperm.slane %v288, 0
          %v292 = vadd.f32 %v287, %v290
          %293 = vst.msk [vmem:[%s225] sm:$0xff] %vm282, %v292
        $region40: #{decoder_forward.13} parent=31 // pred_fallthru
          _
        %s294 = sand.u32 %s128, 1
        %s295 = scalar_lea.sflag [#allocation4], %s294
        %s296 = sand.u32 %s128, 1
        %s297 = smul.addr %s296, 8
        %s298 = scalar_lea.vmem [#allocation3], %s297
        // Predicated region
        $region41: #{decoder_forward.13} parent=31 // pred_check
          %p299 = pneg %p138
        $region42: #{decoder_forward.13} parent=31 // pred_check_branch
          %301 = sbr.rel (%p299) target = $region44
        $region43: #{decoder_forward.13} parent=31 // pred_region
          %303 = vsyncadd %s295, 0
          %s304 = sadd.s32 %s23, %s22
          %s305 = smul.addr %s304, 8
          %s306 = scalar_lea.hbm %s3, %s305
          %s308 = sshll.u32 %s298, 4
          %s309 = int_to_ptr.vmem [resolvable:$true] %s308
          %s310 = sshll.u32 %s306, 4
          %s311 = int_to_ptr.hbm [resolvable:$true] %s310
          %313 = dma.vmem_to_hbm [thread:$0]  %s309, 128, %s311, %s295
        $region44: #{decoder_forward.13} parent=31 // pred_fallthru
          _
      $region32: #{decoder_forward.13} parent=5 // pred_fallthru
        _
      %p314 = scmp.le.s32.totalorder 2, %s12
      // Predicated region
      $region45: #{decoder_forward.13} parent=5 // pred_check
        %p315 = pneg %p314
      $region46: #{decoder_forward.13} parent=5 // pred_check_branch
        %317 = sbr.rel (%p315) target = $region48
      $region47: #{decoder_forward.13} parent=5 // pred_region
        %s318 = ssub.s32 %s12, 2
        // Predicated region
        $region49: #{decoder_forward.13} parent=47 // pred_check
          %p319 = pneg %p144
        $region50: #{decoder_forward.13} parent=47 // pred_check_branch
          %321 = sbr.rel (%p319) target = $region52
        $region51: #{decoder_forward.13} parent=47 // pred_region
          %s322 = sand.u32 %s129, 1
          %s323 = scalar_lea.sflag [#allocation4], %s322
          %s324 = sand.u32 %s129, 1
          %s325 = smul.addr %s324, 8
          %s326 = scalar_lea.vmem [#allocation3], %s325
          %328 = dma.done %s323, 128
        $region52: #{decoder_forward.13} parent=47 // pred_fallthru
          _
      $region48: #{decoder_forward.13} parent=5 // pred_fallthru
        _
    $region6: #{decoder_forward.13} parent=1 // loop_footer
      %s16 = sadd.s32 1, %s12
    $region7: #{decoder_forward.13} parent=1 // loop_footer_branch
      %11 = sbr.rel target = $region3
    $region8: #{decoder_forward.13} parent=1 // loop_exit
      _
    %329 = vsyncpa [#allocation4], 1
    %s330 = scalar_lea.sflag [#allocation4], 1
    %331 = vsyncpa %s330, 1

</llo_original>
